<compile_context>
chip_gen: v5e
topology: v5e:2x2
jax: 0.10.0
libtpu: 0.0.40
codegen_flags: <defaults>
</compile_context>

<pallas_src>
import functools
import math

import jax
import jax.numpy as jnp
from jax.experimental import pallas as pl
from jax.experimental.pallas import tpu as pltpu

COMPUTE_DTYPE = jnp.bfloat16   # MXU-native operand dtype on v5e/v6e/v7x


# ----------------------------------------------------------------------------- helpers
def _tpu_compiler_params(dimension_semantics, vmem_limit_bytes=None):
    """CompilerParams with a graceful fallback for older pltpu versions."""
    cls = getattr(pltpu, "CompilerParams", None)
    if cls is None:
        return None
    kwargs = {"dimension_semantics": tuple(dimension_semantics)}
    if vmem_limit_bytes is not None:
        kwargs["vmem_limit_bytes"] = int(vmem_limit_bytes)
    try:
        return cls(**kwargs)
    except TypeError:
        return cls(dimension_semantics=tuple(dimension_semantics))


def _choose_block(n, preferred):
    """Largest tile <= `preferred` that divides n (full extent if n is small)."""
    if n <= preferred:
        return n
    for b in (preferred, preferred // 2, preferred // 4, 8):
        if b > 0 and n % b == 0:
            return b
    return n


def _choose_head_block(h, d_head, max_width=512):
    """Heads per flash step: keep Hb*Dh lane-dense (multiple of 128) when possible."""
    cands = [hb for hb in range(1, h + 1)
             if h % hb == 0 and hb * d_head <= max_width
             and (hb == h or (hb * d_head) % 128 == 0)]
    return max(cands) if cands else h


# --------------------------------------------------------------- flash attention kernel
def _flash_mha_kernel(q_ref, k_ref, v_ref, o_ref, m_sc, l_sc, acc_sc, *, causal):
    qi = pl.program_id(1)
    ki = pl.program_id(2)
    hb, tq, dh = q_ref.shape
    tk = k_ref.shape[1]

    @pl.when(ki == 0)
    def _init():
        m_sc[...] = jnp.full(m_sc.shape, -jnp.inf, dtype=jnp.float32)
        l_sc[...] = jnp.zeros(l_sc.shape, dtype=jnp.float32)
        acc_sc[...] = jnp.zeros(acc_sc.shape, dtype=jnp.float32)

    def _update():
        # bf16 operands go straight to the MXU; scores accumulate in f32.
        s = jnp.einsum("bqd,bkd->bqk", q_ref[...], k_ref[...],
                       preferred_element_type=jnp.float32)      # (hb, tq, tk) f32
        if causal:
            row = qi * tq + jax.lax.broadcasted_iota(jnp.int32, (tq, tk), 0)
            col = ki * tk + jax.lax.broadcasted_iota(jnp.int32, (tq, tk), 1)
            # ki == 0 is always computed and has >=1 unmasked column per row, so the
            # fully-masked-row / m == -inf corruption case cannot occur here.
            s = jnp.where((col <= row)[None, :, :], s, jnp.float32(-1e30))

        m_prev = m_sc[...]
        m_new = jnp.maximum(m_prev, jnp.max(s, axis=-1, keepdims=True))
        alpha = jnp.exp(m_prev - m_new)
        p = jnp.exp(s - m_new)
        l_sc[...] = alpha * l_sc[...] + jnp.sum(p, axis=-1, keepdims=True)
        acc_sc[...] = alpha * acc_sc[...] + jnp.einsum(
            "bqk,bkd->bqd", p.astype(v_ref.dtype), v_ref[...],
            preferred_element_type=jnp.float32)
        m_sc[...] = m_new

    if causal:
        # Skip kv blocks entirely above the diagonal (~half the work for self-attn).
        pl.when(ki * tk <= qi * tq + (tq - 1))(_update)
    else:
        _update()

    @pl.when(ki == pl.num_programs(2) - 1)
    def _finalize():
        inv_l = pl.reciprocal(l_sc[...], approx=True)   # EUP slot -> effectively free
        out = acc_sc[...] * inv_l                        # (hb, tq, dh) f32
        # Lane-dense (tq, hb*dh) store: heads laid out head-major along the lane axis.
        out = jnp.concatenate([out[b] for b in range(hb)], axis=-1)
        o_ref[...] = out.astype(o_ref.dtype)


def flash_mha(q, k, v, *, causal=False, softmax_scale=1.0, block_q=256, block_k=256):
    """softmax((q @ k^T) * softmax_scale [+ causal]) @ v.

    q: [H, S_q, Dh], k/v: [H, S_k, Dh] -> [S_q, H*Dh] (head h in columns [h*Dh,(h+1)*Dh)).
    block_k=256 fills the 256-wide MXU on v6e/v7x; v5e is still correct (two MXU passes).
    """
    h, s_q, d = q.shape
    hk, s_k, dk = k.shape
    assert (h, d) == (hk, dk) and v.shape == (h, s_k, d), "q/k/v shape mismatch"

    if softmax_scale != 1.0:
        q = q * jnp.asarray(softmax_scale, q.dtype)

    hb = _choose_head_block(h, d)
    tq = _choose_block(s_q, block_q)
    tk = _choose_block(s_k, block_k)
    assert h % hb == 0 and s_q % tq == 0 and s_k % tk == 0

    grid = (h // hb, s_q // tq, s_k // tk)
    kernel = functools.partial(_flash_mha_kernel, causal=causal)

    return pl.pallas_call(
        kernel,
        out_shape=jax.ShapeDtypeStruct((s_q, h * d), q.dtype),
        grid=grid,
        in_specs=[
            pl.BlockSpec((hb, tq, d), lambda hi, qi, ki: (hi, qi, 0)),
            pl.BlockSpec((hb, tk, d), lambda hi, qi, ki: (hi, ki, 0)),
            pl.BlockSpec((hb, tk, d), lambda hi, qi, ki: (hi, ki, 0)),
        ],
        out_specs=pl.BlockSpec((tq, hb * d), lambda hi, qi, ki: (qi, hi)),
        scratch_shapes=[
            pltpu.VMEM((hb, tq, 1), jnp.float32),   # running max  m
            pltpu.VMEM((hb, tq, 1), jnp.float32),   # running sum  l
            pltpu.VMEM((hb, tq, d), jnp.float32),   # f32 output accumulator
        ],
        compiler_params=_tpu_compiler_params(
            ("parallel", "parallel", "arbitrary"),
            vmem_limit_bytes=32 * 1024 * 1024),
    )(q, k, v)


# --------------------------------------- fused FFN (TransformerNN) + residual + LayerNorm
def _ffn_residual_ln_kernel(x_ref, w1_ref, b1_ref, w2_ref, b2_ref, g_ref, b_ref,
                            o_ref, acc_ref, *, eps):
    fi = pl.program_id(1)

    @pl.when(fi == 0)
    def _init():
        acc_ref[...] = jnp.zeros_like(acc_ref)

    x = x_ref[...]                                               # (tn, d) bf16
    h = jnp.dot(x, w1_ref[...], preferred_element_type=jnp.float32)
    h = jnp.maximum(h + b1_ref[...], 0.0)                        # f32 relu
    acc_ref[...] += jnp.dot(h.astype(w2_ref.dtype), w2_ref[...],
                            preferred_element_type=jnp.float32)

    @pl.when(fi == pl.num_programs(1) - 1)
    def _finalize():
        y = acc_ref[...] + b2_ref[...] + x_ref[...].astype(jnp.float32)  # + residual
        mean = jnp.mean(y, axis=-1, keepdims=True)
        c = y - mean
        var = jnp.mean(c * c, axis=-1, keepdims=True)
        out = c * jax.lax.rsqrt(var + eps) * g_ref[...] + b_ref[...]
        o_ref[...] = out.astype(o_ref.dtype)


def ffn_residual_ln(x, w1, b1, w2, b2, gamma, beta, *, eps=1e-5,
                    block_rows=256, block_ff=512):
    """LayerNorm(x + linear2(relu(linear1(x)))) with d_ff tiled weights."""
    n, d = x.shape
    d_ff = w1.shape[1]
    tn = _choose_block(n, block_rows)
    tf = _choose_block(d_ff, block_ff)
    grid = (n // tn, d_ff // tf)
    return pl.pallas_call(
        functools.partial(_ffn_residual_ln_kernel, eps=eps),
        out_shape=jax.ShapeDtypeStruct((n, d), x.dtype),
        grid=grid,
        in_specs=[
            pl.BlockSpec((tn, d), lambda i, f: (i, 0)),     # x rows resident over f
            pl.BlockSpec((d, tf), lambda i, f: (0, f)),     # w1 chunk
            pl.BlockSpec((1, tf), lambda i, f: (0, f)),     # b1 chunk
            pl.BlockSpec((tf, d), lambda i, f: (f, 0)),     # w2 chunk
            pl.BlockSpec((1, d), lambda i, f: (0, 0)),      # b2
            pl.BlockSpec((1, d), lambda i, f: (0, 0)),      # ln gamma
            pl.BlockSpec((1, d), lambda i, f: (0, 0)),      # ln beta
        ],
        out_specs=pl.BlockSpec((tn, d), lambda i, f: (i, 0)),
        scratch_shapes=[pltpu.VMEM((tn, d), jnp.float32)],
        compiler_params=_tpu_compiler_params(
            ("parallel", "arbitrary"), vmem_limit_bytes=32 * 1024 * 1024),
    )(x, w1, b1, w2, b2, gamma, beta)


# --------------------------------------------------------------- residual add + LayerNorm
def _residual_ln_kernel(x_ref, y_ref, g_ref, b_ref, o_ref, *, eps):
    s = x_ref[...].astype(jnp.float32) + y_ref[...].astype(jnp.float32)
    mean = jnp.mean(s, axis=-1, keepdims=True)
    c = s - mean
    var = jnp.mean(c * c, axis=-1, keepdims=True)
    out = c * jax.lax.rsqrt(var + eps) * g_ref[...] + b_ref[...]
    o_ref[...] = out.astype(o_ref.dtype)


def residual_layer_norm(x, y, gamma, beta, *, eps=1e-5, block_rows=256):
    """LayerNorm(x + y), rows streamed."""
    n, d = x.shape
    tn = _choose_block(n, block_rows)
    return pl.pallas_call(
        functools.partial(_residual_ln_kernel, eps=eps),
        out_shape=jax.ShapeDtypeStruct((n, d), x.dtype),
        grid=(n // tn,),
        in_specs=[
            pl.BlockSpec((tn, d), lambda i: (i, 0)),
            pl.BlockSpec((tn, d), lambda i: (i, 0)),
            pl.BlockSpec((1, d), lambda i: (0, 0)),
            pl.BlockSpec((1, d), lambda i: (0, 0)),
        ],
        out_specs=pl.BlockSpec((tn, d), lambda i: (i, 0)),
        compiler_params=_tpu_compiler_params(("parallel",)),
    )(x, y, gamma, beta)


# --------------------------------------------------------------- model glue (jnp, bf16)
def fourier_positional_encoding(seq_length, d_model):
    i = jnp.arange(d_model)
    exp = 2.0 * ((i // 2).astype(jnp.float32) / d_model)
    denom = jnp.power(jnp.float32(10000.0), exp)
    pe = jnp.arange(seq_length, dtype=jnp.float32)[:, None] / denom[None, :]
    pe = pe.at[:, 0::2].set(jnp.sin(pe[:, 0::2]))
    pe = pe.at[:, 1::2].set(jnp.cos(pe[:, 1::2]))
    return pe


def _mha_block_pallas(x_q, x_kv, hp, causal):
    # Fused QKV projections: one (S, d) x (d, H*Dh) bf16 matmul each (1/sqrt(Dh) is
    # already folded into wq at init).
    d_model, heads, d_head = hp["wq"].shape
    wq = hp["wq"].reshape(d_model, heads * d_head)
    wk = hp["wk"].reshape(d_model, heads * d_head)
    wv = hp["wv"].reshape(d_model, heads * d_head)
    q = jnp.dot(x_q, wq)
    k = jnp.dot(x_kv, wk)
    v = jnp.dot(x_kv, wv)

    def split(t):   # (S, H*Dh) -> (H, S, Dh)
        return t.reshape(t.shape[0], heads, d_head).transpose(1, 0, 2)

    o = flash_mha(split(q), split(k), split(v), causal=causal, softmax_scale=1.0)
    return jnp.dot(o, hp["w0"])          # lane-dense (S, H*Dh) @ (H*Dh, d) — the concat


# --------------------------------------------------------------- pure-JAX reference
def _attention_ref(q, k, v, causal, scale=1.0):
    s = jnp.einsum("hqd,hkd->hqk", q, k, preferred_element_type=jnp.float32) * scale
    if causal:
        s_q, s_k = s.shape[-2:]
        keep = jnp.arange(s_k)[None, :] <= jnp.arange(s_q)[:, None]
        s = jnp.where(keep[None], s, jnp.float32(-1e30))
    p = jax.nn.softmax(s, axis=-1)
    return jnp.einsum("hqk,hkd->hqd", p.astype(v.dtype), v,
                      preferred_element_type=jnp.float32)


def _mha_block_ref(x_q, x_kv, hp, causal):
    d_model, heads, d_head = hp["wq"].shape
    q = jnp.dot(x_q, hp["wq"].reshape(d_model, heads * d_head))
    k = jnp.dot(x_kv, hp["wk"].reshape(d_model, heads * d_head))
    v = jnp.dot(x_kv, hp["wv"].reshape(d_model, heads * d_head))

    def split(t):
        return t.reshape(t.shape[0], heads, d_head).transpose(1, 0, 2)

    o = _attention_ref(split(q), split(k), split(v), causal, scale=1.0)
    o = o.transpose(1, 0, 2).reshape(x_q.shape[0], heads * d_head).astype(x_q.dtype)
    return jnp.dot(o, hp["w0"])


def _residual_ln_ref(x, y, gamma, beta, eps=1e-5):
    s = x.astype(jnp.float32) + y.astype(jnp.float32)
    mean = jnp.mean(s, axis=-1, keepdims=True)
    c = s - mean
    var = jnp.mean(c * c, axis=-1, keepdims=True)
    return (c * jax.lax.rsqrt(var + eps) * gamma + beta).astype(x.dtype)


def _ffn_residual_ln_ref(x, w1, b1, w2, b2, gamma, beta, eps=1e-5):
    h = jnp.dot(x, w1, preferred_element_type=jnp.float32)
    h = jnp.maximum(h + b1, 0.0)
    y = jnp.dot(h.astype(w2.dtype), w2, preferred_element_type=jnp.float32) + b2
    y = y + x.astype(jnp.float32)
    mean = jnp.mean(y, axis=-1, keepdims=True)
    c = y - mean
    var = jnp.mean(c * c, axis=-1, keepdims=True)
    return (c * jax.lax.rsqrt(var + eps) * gamma + beta).astype(x.dtype)


# --------------------------------------------------------------- shared block structure
def _apply_pe(x, pe):
    return (x.astype(jnp.float32) + pe * x.astype(jnp.float32)).astype(x.dtype)


def _encoder_block(x, p, mha, res_ln, ffn_ln):
    if p["pe"] is not None:
        x = _apply_pe(x, p["pe"])                    # FourierEncoder2d (dropout = id)
    attn = mha(x, x, p["sa"], False)                 # self-attention (no mask)
    x = res_ln(x, attn, p["ln1"]["g"], p["ln1"]["b"])
    x = ffn_ln(x, p["ffn"]["w1"], p["ffn"]["b1"], p["ffn"]["w2"], p["ffn"]["b2"],
               p["ln2"]["g"], p["ln2"]["b"])
    return x


def _decoder_block(x, hidden, p, mha, res_ln, ffn_ln):
    if p["pe"] is not None:
        x = _apply_pe(x, p["pe"])
    attn = mha(x, x, p["sa"], True)                  # masked (causal) self-attention
    x = res_ln(x, attn, p["ln1"]["g"], p["ln1"]["b"])
    eda = mha(x, hidden, p["eda"], False)            # encoder-decoder attention
    x = res_ln(x, eda, p["ln2"]["g"], p["ln2"]["b"])
    x = ffn_ln(x, p["ffn"]["w1"], p["ffn"]["b1"], p["ffn"]["w2"], p["ffn"]["b2"],
               p["ln3"]["g"], p["ln3"]["b"])
    return x


def _forward(x, y, params, mha, res_ln, ffn_ln):
    z = x
    for p in params["encoder"]:
        z = _encoder_block(z, p, mha, res_ln, ffn_ln)
    o = y
    for p in params["decoder"]:
        o = _decoder_block(o, z, p, mha, res_ln, ffn_ln)
    return o


def transformer_forward(x, y, params):
    dt = params["encoder"][0]["sa"]["wq"].dtype
    return _forward(x.astype(dt), y.astype(dt), params,
                    _mha_block_pallas, residual_layer_norm, ffn_residual_ln)


def transformer_reference(x, y, params):
    dt = params["encoder"][0]["sa"]["wq"].dtype
    return _forward(x.astype(dt), y.astype(dt), params,
                    _mha_block_ref, _residual_ln_ref, _ffn_residual_ln_ref)


# --------------------------------------------------------------- parameter init
def _kaiming(key, shape, fan_in):
    return jax.random.normal(key, shape, dtype=jnp.float32) * math.sqrt(2.0 / fan_in)


def _mha_params(key, d_model, d_head, heads, dtype):
    k1, k2, k3, k4 = jax.random.split(key, 4)
    scale = 1.0 / math.sqrt(d_head)
    return dict(
        # wq stored as (d_model, H, Dh) with 1/sqrt(Dh) folded in (scale-free kernel).
        wq=(_kaiming(k1, (d_model, heads, d_head), d_model) * scale).astype(dtype),
        wk=_kaiming(k2, (d_model, heads, d_head), d_model).astype(dtype),
        wv=_kaiming(k3, (d_model, heads, d_head), d_model).astype(dtype),
        w0=_kaiming(k4, (heads * d_head, d_model), heads * d_head).astype(dtype),
    )


def _ffn_params(key, d_model, dtype):
    k1, k2 = jax.random.split(key)
    d_ff = 4 * d_model
    return dict(
        w1=_kaiming(k1, (d_model, d_ff), d_model).astype(dtype),
        b1=jnp.zeros((1, d_ff), jnp.float32),
        w2=_kaiming(k2, (d_ff, d_model), d_ff).astype(dtype),
        b2=jnp.zeros((1, d_model), jnp.float32),
    )


def _ln_params(d_model):
    return dict(g=jnp.ones((1, d_model), jnp.float32),
                b=jnp.zeros((1, d_model), jnp.float32))


def init_transformer_params(key, *, enc_count, dec_count, enc_seq, dec_seq,
                            d_model, d_head, heads, compute_dtype=COMPUTE_DTYPE):
    keys = iter(jax.random.split(key, max(2 * enc_count + 3 * dec_count, 2)))
    encoder = []
    for i in range(enc_count):
        encoder.append(dict(
            pe=fourier_positional_encoding(enc_seq, d_model) if i == 0 else None,
            sa=_mha_params(next(keys), d_model, d_head, heads, compute_dtype),
            ln1=_ln_params(d_model),
            ffn=_ffn_params(next(keys), d_model, compute_dtype),
            ln2=_ln_params(d_model),
        ))
    decoder = []
    for i in range(dec_count):
        decoder.append(dict(
            pe=fourier_positional_encoding(dec_seq, d_model) if i == 0 else None,
            sa=_mha_params(next(keys), d_model, d_head, heads, compute_dtype),
            ln1=_ln_params(d_model),
            eda=_mha_params(next(keys), d_model, d_head, heads, compute_dtype),
            ln2=_ln_params(d_model),
            ffn=_ffn_params(next(keys), d_model, compute_dtype),
            ln3=_ln_params(d_model),
        ))
    return dict(encoder=encoder, decoder=decoder)


# --------------------------------------------------------------- demo / self-test
if __name__ == "__main__":
    D_MODEL, D_HEAD, HEADS = 128, 32, 4
    ENC_LAYERS, DEC_LAYERS = 2, 2
    ENC_SEQ, DEC_SEQ = 16, 8

    root = jax.random.PRNGKey(0)
    kp, kx, ky, kq, kk, kv = jax.random.split(root, 6)

    params = init_transformer_params(
        kp, enc_count=ENC_LAYERS, dec_count=DEC_LAYERS,
        enc_seq=ENC_SEQ, dec_seq=DEC_SEQ,
        d_model=D_MODEL, d_head=D_HEAD, heads=HEADS,
        compute_dtype=COMPUTE_DTYPE)

    x = jax.random.normal(kx, (ENC_SEQ, D_MODEL), dtype=jnp.float32)   # encoder input
    y = jax.random.normal(ky, (DEC_SEQ, D_MODEL), dtype=jnp.float32)   # decoder input

    # Full transformer forward through the Pallas kernels (bf16 fast path).
    out = jax.jit(transformer_forward)(x, y, params)
    out = jax.block_until_ready(out)
    assert out.shape == (DEC_SEQ, D_MODEL)
    out_f32 = out.astype(jnp.float32)
    assert not bool(jnp.any(jnp.isnan(out_f32)))

    # Pure-JAX reference with matching bf16 numerics.
    ref = transformer_reference(x, y, params).astype(jnp.float32)
    max_diff = float(jnp.max(jnp.abs(out_f32 - ref)))
    assert max_diff < 5e-2, f"transformer mismatch vs reference, max abs diff {max_diff}"

    # Extra check of the tiled flash path: multiple q/kv blocks, causal block skipping,
    # per-(head-block, q-block) accumulator reinit, lane-dense (S, H*Dh) output layout.
    qa = jax.random.normal(kq, (2, 256, 64), dtype=jnp.float32).astype(COMPUTE_DTYPE)
    ka = jax.random.normal(kk, (2, 256, 64), dtype=jnp.float32).astype(COMPUTE_DTYPE)
    va = jax.random.normal(kv, (2, 256, 64), dtype=jnp.float32).astype(COMPUTE_DTYPE)
    scale = 1.0 / math.sqrt(64)
    fa = jax.block_until_ready(
        flash_mha(qa, ka, va, causal=True, softmax_scale=scale,
                  block_q=128, block_k=128))
    fa3 = fa.reshape(256, 2, 64).transpose(1, 0, 2).astype(jnp.float32)
    fr = _attention_ref(qa, ka, va, True, scale)
    fdiff = float(jnp.max(jnp.abs(fa3 - fr)))
    assert fdiff < 3e-2, f"flash attention mismatch vs reference, max abs diff {fdiff}"

    print("KERNEL_OK")
</pallas_src>

<mosaic_0001>
module attributes {stable_mosaic.version = 11 : i64} {
  func.func @_flash_mha_kernel(%arg0: i32, %arg1: i32, %arg2: i32, %arg3: memref<4x16x32xbf16, #tpu.memory_space<vmem>>, %arg4: memref<4x16x32xbf16, #tpu.memory_space<vmem>>, %arg5: memref<4x16x32xbf16, #tpu.memory_space<vmem>>, %arg6: memref<16x128xbf16, #tpu.memory_space<vmem>>, %arg7: memref<4x16x1xf32, #tpu.memory_space<vmem>>, %arg8: memref<4x16x1xf32, #tpu.memory_space<vmem>>, %arg9: memref<4x16x32xf32, #tpu.memory_space<vmem>>) attributes {dimension_semantics = [#tpu.dimension_semantics<parallel>, #tpu.dimension_semantics<parallel>, #tpu.dimension_semantics<arbitrary>], iteration_bounds = array<i64: 1, 1, 1>, scalar_prefetch = 0 : i64, scratch_operands = 3 : i64, tpu.core_type = #tpu.core_type<tc>, window_params = [{transform_indices = @transform_0, window_bounds = array<i64: 4, 16, 32>}, {transform_indices = @transform_1, window_bounds = array<i64: 4, 16, 32>}, {transform_indices = @transform_2, window_bounds = array<i64: 4, 16, 32>}, {transform_indices = @transform_3, window_bounds = array<i64: 16, 128>}]} {
    %c0_i32 = arith.constant 0 : i32
    %0 = arith.cmpi eq, %arg2, %c0_i32 : i32
    %1 = arith.extui %0 : i1 to i32
    %c0_i32_0 = arith.constant 0 : i32
    %2 = arith.cmpi ne, %1, %c0_i32_0 : i32
    scf.if %2 {
      %cst_32 = arith.constant 0xFF800000 : f32
      %33 = vector.broadcast %cst_32 : f32 to vector<4x16x1xf32>
      %c0_33 = arith.constant 0 : index
      %c0_34 = arith.constant 0 : index
      %c0_35 = arith.constant 0 : index
      %34 = vector.load %arg7[%c0_33, %c0_34, %c0_35] : memref<4x16x1xf32, #tpu.memory_space<vmem>>, vector<4x16x1xf32>
      tpu.vector_store %arg7[%c0_33, %c0_34, %c0_35], %33 {strides = array<i32>} : memref<4x16x1xf32, #tpu.memory_space<vmem>>, vector<4x16x1xf32>,
      %cst_36 = arith.constant 0.000000e+00 : f32
      %35 = vector.broadcast %cst_36 : f32 to vector<4x16x1xf32>
      %c0_37 = arith.constant 0 : index
      %c0_38 = arith.constant 0 : index
      %c0_39 = arith.constant 0 : index
      %36 = vector.load %arg8[%c0_37, %c0_38, %c0_39] : memref<4x16x1xf32, #tpu.memory_space<vmem>>, vector<4x16x1xf32>
      tpu.vector_store %arg8[%c0_37, %c0_38, %c0_39], %35 {strides = array<i32>} : memref<4x16x1xf32, #tpu.memory_space<vmem>>, vector<4x16x1xf32>,
      %cst_40 = arith.constant 0.000000e+00 : f32
      %37 = vector.broadcast %cst_40 : f32 to vector<4x16x32xf32>
      %c0_41 = arith.constant 0 : index
      %c0_42 = arith.constant 0 : index
      %c0_43 = arith.constant 0 : index
      %38 = vector.load %arg9[%c0_41, %c0_42, %c0_43] : memref<4x16x32xf32, #tpu.memory_space<vmem>>, vector<4x16x32xf32>
      tpu.vector_store %arg9[%c0_41, %c0_42, %c0_43], %37 {strides = array<i32>} : memref<4x16x32xf32, #tpu.memory_space<vmem>>, vector<4x16x32xf32>,
    } else {
    }
    %c0 = arith.constant 0 : index
    %c0_1 = arith.constant 0 : index
    %c0_2 = arith.constant 0 : index
    %3 = vector.load %arg3[%c0, %c0_1, %c0_2] : memref<4x16x32xbf16, #tpu.memory_space<vmem>>, vector<4x16x32xbf16>
    %c0_3 = arith.constant 0 : index
    %c0_4 = arith.constant 0 : index
    %c0_5 = arith.constant 0 : index
    %4 = vector.load %arg4[%c0_3, %c0_4, %c0_5] : memref<4x16x32xbf16, #tpu.memory_space<vmem>>, vector<4x16x32xbf16>
    "tpu.trace_start"() <{level = 10 : i32, message = "bqd,bkd->bqk"}> : () -> ()
    %cst = arith.constant dense<0.000000e+00> : vector<4x16x16xf32>
    %5 = tpu.matmul %3, %4, %cst {dimension_numbers = #tpu.dot_dimension_numbers<[2], [2], [1], [1], [0, 0, 0, 1, 1, 1], [0], [0]>} : vector<4x16x32xbf16>, vector<4x16x32xbf16>, vector<4x16x16xf32> -> vector<4x16x16xf32>
    "tpu.trace_stop"() : () -> ()
    %c0_6 = arith.constant 0 : index
    %c0_7 = arith.constant 0 : index
    %c0_8 = arith.constant 0 : index
    %6 = vector.load %arg7[%c0_6, %c0_7, %c0_8] : memref<4x16x1xf32, #tpu.memory_space<vmem>>, vector<4x16x1xf32>
    %cst_9 = arith.constant dense<0xFF800000> : vector<4x16xf32>
    %7 = vector.multi_reduction <maximumf>, %5, %cst_9 [2] : vector<4x16x16xf32> to vector<4x16xf32>
    %8 = vector.shape_cast %7 : vector<4x16xf32> to vector<4x16x1xf32>
    %9 = arith.maximumf %6, %8 : vector<4x16x1xf32>
    %10 = arith.subf %6, %9 : vector<4x16x1xf32>
    %11 = math.exp %10 : vector<4x16x1xf32>
    %12 = vector.broadcast %9 : vector<4x16x1xf32> to vector<4x16x16xf32>
    %13 = arith.subf %5, %12 : vector<4x16x16xf32>
    %14 = math.exp %13 : vector<4x16x16xf32>
    %c0_10 = arith.constant 0 : index
    %c0_11 = arith.constant 0 : index
    %c0_12 = arith.constant 0 : index
    %15 = vector.load %arg8[%c0_10, %c0_11, %c0_12] : memref<4x16x1xf32, #tpu.memory_space<vmem>>, vector<4x16x1xf32>
    %16 = arith.mulf %11, %15 : vector<4x16x1xf32>
    %cst_13 = arith.constant dense<0.000000e+00> : vector<4x16xf32>
    %17 = vector.multi_reduction <add>, %14, %cst_13 [2] : vector<4x16x16xf32> to vector<4x16xf32>
    %18 = vector.shape_cast %17 : vector<4x16xf32> to vector<4x16x1xf32>
    %19 = arith.addf %16, %18 : vector<4x16x1xf32>
    %c0_14 = arith.constant 0 : index
    %c0_15 = arith.constant 0 : index
    %c0_16 = arith.constant 0 : index
    %20 = vector.load %arg8[%c0_14, %c0_15, %c0_16] : memref<4x16x1xf32, #tpu.memory_space<vmem>>, vector<4x16x1xf32>
    tpu.vector_store %arg8[%c0_14, %c0_15, %c0_16], %19 {strides = array<i32>} : memref<4x16x1xf32, #tpu.memory_space<vmem>>, vector<4x16x1xf32>,
    %c0_17 = arith.constant 0 : index
    %c0_18 = arith.constant 0 : index
    %c0_19 = arith.constant 0 : index
    %21 = vector.load %arg9[%c0_17, %c0_18, %c0_19] : memref<4x16x32xf32, #tpu.memory_space<vmem>>, vector<4x16x32xf32>
    %22 = vector.broadcast %11 : vector<4x16x1xf32> to vector<4x16x32xf32>
    %23 = arith.mulf %22, %21 : vector<4x16x32xf32>
    %24 = arith.truncf %14 : vector<4x16x16xf32> to vector<4x16x16xbf16>
    %c0_20 = arith.constant 0 : index
    %c0_21 = arith.constant 0 : index
    %c0_22 = arith.constant 0 : index
    %25 = vector.load %arg5[%c0_20, %c0_21, %c0_22] : memref<4x16x32xbf16, #tpu.memory_space<vmem>>, vector<4x16x32xbf16>
    "tpu.trace_start"() <{level = 10 : i32, message = "bqk,bkd->bqd"}> : () -> ()
    %cst_23 = arith.constant dense<0.000000e+00> : vector<4x16x32xf32>
    %26 = tpu.matmul %24, %25, %cst_23 {dimension_numbers = #tpu.dot_dimension_numbers<[2], [1], [1], [2], [0, 0, 0, 1, 1, 2], [0], [0]>} : vector<4x16x16xbf16>, vector<4x16x32xbf16>, vector<4x16x32xf32> -> vector<4x16x32xf32>
    "tpu.trace_stop"() : () -> ()
    %27 = arith.addf %23, %26 : vector<4x16x32xf32>
    %c0_24 = arith.constant 0 : index
    %c0_25 = arith.constant 0 : index
    %c0_26 = arith.constant 0 : index
    %28 = vector.load %arg9[%c0_24, %c0_25, %c0_26] : memref<4x16x32xf32, #tpu.memory_space<vmem>>, vector<4x16x32xf32>
    tpu.vector_store %arg9[%c0_24, %c0_25, %c0_26], %27 {strides = array<i32>} : memref<4x16x32xf32, #tpu.memory_space<vmem>>, vector<4x16x32xf32>,
    %c0_27 = arith.constant 0 : index
    %c0_28 = arith.constant 0 : index
    %c0_29 = arith.constant 0 : index
    %29 = vector.load %arg7[%c0_27, %c0_28, %c0_29] : memref<4x16x1xf32, #tpu.memory_space<vmem>>, vector<4x16x1xf32>
    tpu.vector_store %arg7[%c0_27, %c0_28, %c0_29], %9 {strides = array<i32>} : memref<4x16x1xf32, #tpu.memory_space<vmem>>, vector<4x16x1xf32>,
    %c0_i32_30 = arith.constant 0 : i32
    %30 = arith.cmpi eq, %arg2, %c0_i32_30 : i32
    %31 = arith.extui %30 : i1 to i32
    %c0_i32_31 = arith.constant 0 : i32
    %32 = arith.cmpi ne, %31, %c0_i32_31 : i32
    scf.if %32 {
      %c0_32 = arith.constant 0 : index
      %c0_33 = arith.constant 0 : index
      %c0_34 = arith.constant 0 : index
      %33 = vector.load %arg8[%c0_32, %c0_33, %c0_34] : memref<4x16x1xf32, #tpu.memory_space<vmem>>, vector<4x16x1xf32>
      %34 = tpu.reciprocal %33 {approx = true} : vector<4x16x1xf32> -> vector<4x16x1xf32>
      %c0_35 = arith.constant 0 : index
      %c0_36 = arith.constant 0 : index
      %c0_37 = arith.constant 0 : index
      %35 = vector.load %arg9[%c0_35, %c0_36, %c0_37] : memref<4x16x32xf32, #tpu.memory_space<vmem>>, vector<4x16x32xf32>
      %36 = vector.broadcast %34 : vector<4x16x1xf32> to vector<4x16x32xf32>
      %37 = arith.mulf %35, %36 : vector<4x16x32xf32>
      %38 = vector.extract_strided_slice %37 {offsets = [0, 0, 0], sizes = [1, 16, 32], strides = [1, 1, 1]} : vector<4x16x32xf32> to vector<1x16x32xf32>
      %39 = vector.shape_cast %38 : vector<1x16x32xf32> to vector<16x32xf32>
      %40 = vector.extract_strided_slice %37 {offsets = [1, 0, 0], sizes = [1, 16, 32], strides = [1, 1, 1]} : vector<4x16x32xf32> to vector<1x16x32xf32>
      %41 = vector.shape_cast %40 : vector<1x16x32xf32> to vector<16x32xf32>
      %42 = vector.extract_strided_slice %37 {offsets = [2, 0, 0], sizes = [1, 16, 32], strides = [1, 1, 1]} : vector<4x16x32xf32> to vector<1x16x32xf32>
      %43 = vector.shape_cast %42 : vector<1x16x32xf32> to vector<16x32xf32>
      %44 = vector.extract_strided_slice %37 {offsets = [3, 0, 0], sizes = [1, 16, 32], strides = [1, 1, 1]} : vector<4x16x32xf32> to vector<1x16x32xf32>
      %45 = vector.shape_cast %44 : vector<1x16x32xf32> to vector<16x32xf32>
      %46 = tpu.concatenate %39, %41, %43, %45 in 1 : vector<16x32xf32>, vector<16x32xf32>, vector<16x32xf32>, vector<16x32xf32> -> vector<16x128xf32>
      %47 = arith.truncf %46 : vector<16x128xf32> to vector<16x128xbf16>
      %c0_38 = arith.constant 0 : index
      %c0_39 = arith.constant 0 : index
      %48 = vector.load %arg6[%c0_38, %c0_39] : memref<16x128xbf16, #tpu.memory_space<vmem>>, vector<16x128xbf16>
      tpu.vector_store %arg6[%c0_38, %c0_39], %47 {strides = array<i32>} : memref<16x128xbf16, #tpu.memory_space<vmem>>, vector<16x128xbf16>,
    } else {
    }
    return
  }
  func.func @transform_0(%arg0: i32, %arg1: i32, %arg2: i32) -> (i32, i32, i32) {
    %c0_i32 = arith.constant 0 : i32
    %c0_i32_0 = arith.constant 0 : i32
    return %arg0, %arg1, %c0_i32 : i32, i32, i32
  }
  func.func @transform_1(%arg0: i32, %arg1: i32, %arg2: i32) -> (i32, i32, i32) {
    %c0_i32 = arith.constant 0 : i32
    %c0_i32_0 = arith.constant 0 : i32
    return %arg0, %arg2, %c0_i32 : i32, i32, i32
  }
  func.func @transform_2(%arg0: i32, %arg1: i32, %arg2: i32) -> (i32, i32, i32) {
    %c0_i32 = arith.constant 0 : i32
    %c0_i32_0 = arith.constant 0 : i32
    return %arg0, %arg2, %c0_i32 : i32, i32, i32
  }
  func.func @transform_3(%arg0: i32, %arg1: i32, %arg2: i32) -> (i32, i32) {
    %c0_i32 = arith.constant 0 : i32
    return %arg1, %arg0 : i32, i32
  }
}

module attributes {stable_mosaic.version = 11 : i64} {
  func.func @_residual_ln_kernel(%arg0: i32, %arg1: memref<16x128xbf16, #tpu.memory_space<vmem>>, %arg2: memref<16x128xbf16, #tpu.memory_space<vmem>>, %arg3: memref<1x128xf32, #tpu.memory_space<vmem>>, %arg4: memref<1x128xf32, #tpu.memory_space<vmem>>, %arg5: memref<16x128xbf16, #tpu.memory_space<vmem>>) attributes {dimension_semantics = [#tpu.dimension_semantics<parallel>], iteration_bounds = array<i64: 1>, scalar_prefetch = 0 : i64, scratch_operands = 0 : i64, tpu.core_type = #tpu.core_type<tc>, window_params = [{transform_indices = @transform_0, window_bounds = array<i64: 16, 128>}, {transform_indices = @transform_1, window_bounds = array<i64: 16, 128>}, {pipeline_mode = #tpu.pipeline_mode<synchronous>, transform_indices = @transform_2, window_bounds = array<i64: 1, 128>}, {pipeline_mode = #tpu.pipeline_mode<synchronous>, transform_indices = @transform_3, window_bounds = array<i64: 1, 128>}, {transform_indices = @transform_4, window_bounds = array<i64: 16, 128>}]} {
    %c0 = arith.constant 0 : index
    %c0_0 = arith.constant 0 : index
    %0 = vector.load %arg1[%c0, %c0_0] : memref<16x128xbf16, #tpu.memory_space<vmem>>, vector<16x128xbf16>
    %1 = arith.extf %0 : vector<16x128xbf16> to vector<16x128xf32>
    %c0_1 = arith.constant 0 : index
    %c0_2 = arith.constant 0 : index
    %2 = vector.load %arg2[%c0_1, %c0_2] : memref<16x128xbf16, #tpu.memory_space<vmem>>, vector<16x128xbf16>
    %3 = arith.extf %2 : vector<16x128xbf16> to vector<16x128xf32>
    %4 = arith.addf %1, %3 : vector<16x128xf32>
    %cst = arith.constant dense<0.000000e+00> : vector<16xf32>
    %5 = vector.multi_reduction <add>, %4, %cst [1] : vector<16x128xf32> to vector<16xf32>
    %6 = vector.shape_cast %5 : vector<16xf32> to vector<16x1xf32>
    %cst_3 = arith.constant 1.280000e+02 : f32
    %7 = vector.broadcast %cst_3 : f32 to vector<16x1xf32>
    %8 = arith.divf %6, %7 : vector<16x1xf32>
    %9 = vector.broadcast %8 : vector<16x1xf32> to vector<16x128xf32>
    %10 = arith.subf %4, %9 : vector<16x128xf32>
    %11 = arith.mulf %10, %10 : vector<16x128xf32>
    %cst_4 = arith.constant dense<0.000000e+00> : vector<16xf32>
    %12 = vector.multi_reduction <add>, %11, %cst_4 [1] : vector<16x128xf32> to vector<16xf32>
    %13 = vector.shape_cast %12 : vector<16xf32> to vector<16x1xf32>
    %cst_5 = arith.constant 1.280000e+02 : f32
    %14 = vector.broadcast %cst_5 : f32 to vector<16x1xf32>
    %15 = arith.divf %13, %14 : vector<16x1xf32>
    %cst_6 = arith.constant 9.99999974E-6 : f32
    %16 = vector.broadcast %cst_6 : f32 to vector<16x1xf32>
    %17 = arith.addf %15, %16 : vector<16x1xf32>
    %18 = math.rsqrt %17 : vector<16x1xf32>
    %19 = vector.broadcast %18 : vector<16x1xf32> to vector<16x128xf32>
    %20 = arith.mulf %10, %19 : vector<16x128xf32>
    %c0_7 = arith.constant 0 : index
    %c0_8 = arith.constant 0 : index
    %21 = vector.load %arg3[%c0_7, %c0_8] : memref<1x128xf32, #tpu.memory_space<vmem>>, vector<1x128xf32>
    %22 = vector.broadcast %21 : vector<1x128xf32> to vector<16x128xf32>
    %23 = arith.mulf %20, %22 : vector<16x128xf32>
    %c0_9 = arith.constant 0 : index
    %c0_10 = arith.constant 0 : index
    %24 = vector.load %arg4[%c0_9, %c0_10] : memref<1x128xf32, #tpu.memory_space<vmem>>, vector<1x128xf32>
    %25 = vector.broadcast %24 : vector<1x128xf32> to vector<16x128xf32>
    %26 = arith.addf %23, %25 : vector<16x128xf32>
    %27 = arith.truncf %26 : vector<16x128xf32> to vector<16x128xbf16>
    %c0_11 = arith.constant 0 : index
    %c0_12 = arith.constant 0 : index
    %28 = vector.load %arg5[%c0_11, %c0_12] : memref<16x128xbf16, #tpu.memory_space<vmem>>, vector<16x128xbf16>
    tpu.vector_store %arg5[%c0_11, %c0_12], %27 {strides = array<i32>} : memref<16x128xbf16, #tpu.memory_space<vmem>>, vector<16x128xbf16>,
    return
  }
  func.func @transform_0(%arg0: i32) -> (i32, i32) {
    %c0_i32 = arith.constant 0 : i32
    %c0_i32_0 = arith.constant 0 : i32
    return %arg0, %c0_i32 : i32, i32
  }
  func.func @transform_1(%arg0: i32) -> (i32, i32) {
    %c0_i32 = arith.constant 0 : i32
    %c0_i32_0 = arith.constant 0 : i32
    return %arg0, %c0_i32 : i32, i32
  }
  func.func @transform_2(%arg0: i32) -> (i32, i32) {
    %c0_i32 = arith.constant 0 : i32
    %c0_i32_0 = arith.constant 0 : i32
    %c0_i32_1 = arith.constant 0 : i32
    return %c0_i32, %c0_i32_0 : i32, i32
  }
  func.func @transform_3(%arg0: i32) -> (i32, i32) {
    %c0_i32 = arith.constant 0 : i32
    %c0_i32_0 = arith.constant 0 : i32
    %c0_i32_1 = arith.constant 0 : i32
    return %c0_i32, %c0_i32_0 : i32, i32
  }
  func.func @transform_4(%arg0: i32) -> (i32, i32) {
    %c0_i32 = arith.constant 0 : i32
    %c0_i32_0 = arith.constant 0 : i32
    return %arg0, %c0_i32 : i32, i32
  }
}

module attributes {stable_mosaic.version = 11 : i64} {
  func.func @_ffn_residual_ln_kernel(%arg0: i32, %arg1: i32, %arg2: memref<16x128xbf16, #tpu.memory_space<vmem>>, %arg3: memref<128x512xbf16, #tpu.memory_space<vmem>>, %arg4: memref<1x512xf32, #tpu.memory_space<vmem>>, %arg5: memref<512x128xbf16, #tpu.memory_space<vmem>>, %arg6: memref<1x128xf32, #tpu.memory_space<vmem>>, %arg7: memref<1x128xf32, #tpu.memory_space<vmem>>, %arg8: memref<1x128xf32, #tpu.memory_space<vmem>>, %arg9: memref<16x128xbf16, #tpu.memory_space<vmem>>, %arg10: memref<16x128xf32, #tpu.memory_space<vmem>>) attributes {dimension_semantics = [#tpu.dimension_semantics<parallel>, #tpu.dimension_semantics<arbitrary>], iteration_bounds = array<i64: 1, 1>, scalar_prefetch = 0 : i64, scratch_operands = 1 : i64, tpu.core_type = #tpu.core_type<tc>, window_params = [{transform_indices = @transform_0, window_bounds = array<i64: 16, 128>}, {transform_indices = @transform_1, window_bounds = array<i64: 128, 512>}, {transform_indices = @transform_2, window_bounds = array<i64: 1, 512>}, {transform_indices = @transform_3, window_bounds = array<i64: 512, 128>}, {pipeline_mode = #tpu.pipeline_mode<synchronous>, transform_indices = @transform_4, window_bounds = array<i64: 1, 128>}, {pipeline_mode = #tpu.pipeline_mode<synchronous>, transform_indices = @transform_5, window_bounds = array<i64: 1, 128>}, {pipeline_mode = #tpu.pipeline_mode<synchronous>, transform_indices = @transform_6, window_bounds = array<i64: 1, 128>}, {transform_indices = @transform_7, window_bounds = array<i64: 16, 128>}]} {
    %c0_i32 = arith.constant 0 : i32
    %0 = arith.cmpi eq, %arg1, %c0_i32 : i32
    %1 = arith.extui %0 : i1 to i32
    %c0_i32_0 = arith.constant 0 : i32
    %2 = arith.cmpi ne, %1, %c0_i32_0 : i32
    scf.if %2 {
      %cst_16 = arith.constant 0.000000e+00 : f32
      %20 = vector.broadcast %cst_16 : f32 to vector<16x128xf32>
      %c0_17 = arith.constant 0 : index
      %c0_18 = arith.constant 0 : index
      %21 = vector.load %arg10[%c0_17, %c0_18] : memref<16x128xf32, #tpu.memory_space<vmem>>, vector<16x128xf32>
      tpu.vector_store %arg10[%c0_17, %c0_18], %20 {strides = array<i32>} : memref<16x128xf32, #tpu.memory_space<vmem>>, vector<16x128xf32>,
    } else {
    }
    %c0 = arith.constant 0 : index
    %c0_1 = arith.constant 0 : index
    %3 = vector.load %arg2[%c0, %c0_1] : memref<16x128xbf16, #tpu.memory_space<vmem>>, vector<16x128xbf16>
    %c0_2 = arith.constant 0 : index
    %c0_3 = arith.constant 0 : index
    %4 = vector.load %arg3[%c0_2, %c0_3] : memref<128x512xbf16, #tpu.memory_space<vmem>>, vector<128x512xbf16>
    %cst = arith.constant dense<0.000000e+00> : vector<16x512xf32>
    %5 = tpu.matmul %3, %4, %cst {dimension_numbers = #tpu.dot_dimension_numbers<[1], [0], [0], [1], [0, 0, 1, 1], [], []>} : vector<16x128xbf16>, vector<128x512xbf16>, vector<16x512xf32> -> vector<16x512xf32>
    %c0_4 = arith.constant 0 : index
    %c0_5 = arith.constant 0 : index
    %6 = vector.load %arg4[%c0_4, %c0_5] : memref<1x512xf32, #tpu.memory_space<vmem>>, vector<1x512xf32>
    %7 = vector.broadcast %6 : vector<1x512xf32> to vector<16x512xf32>
    %8 = arith.addf %5, %7 : vector<16x512xf32>
    %cst_6 = arith.constant 0.000000e+00 : f32
    %9 = vector.broadcast %cst_6 : f32 to vector<16x512xf32>
    %10 = arith.maximumf %8, %9 : vector<16x512xf32>
    %c0_7 = arith.constant 0 : index
    %c0_8 = arith.constant 0 : index
    %11 = vector.load %arg10[%c0_7, %c0_8] : memref<16x128xf32, #tpu.memory_space<vmem>>, vector<16x128xf32>
    %12 = arith.truncf %10 : vector<16x512xf32> to vector<16x512xbf16>
    %c0_9 = arith.constant 0 : index
    %c0_10 = arith.constant 0 : index
    %13 = vector.load %arg5[%c0_9, %c0_10] : memref<512x128xbf16, #tpu.memory_space<vmem>>, vector<512x128xbf16>
    %cst_11 = arith.constant dense<0.000000e+00> : vector<16x128xf32>
    %14 = tpu.matmul %12, %13, %cst_11 {dimension_numbers = #tpu.dot_dimension_numbers<[1], [0], [0], [1], [0, 0, 1, 1], [], []>} : vector<16x512xbf16>, vector<512x128xbf16>, vector<16x128xf32> -> vector<16x128xf32>
    %15 = arith.addf %11, %14 : vector<16x128xf32>
    %c0_12 = arith.constant 0 : index
    %c0_13 = arith.constant 0 : index
    %16 = vector.load %arg10[%c0_12, %c0_13] : memref<16x128xf32, #tpu.memory_space<vmem>>, vector<16x128xf32>
    tpu.vector_store %arg10[%c0_12, %c0_13], %15 {strides = array<i32>} : memref<16x128xf32, #tpu.memory_space<vmem>>, vector<16x128xf32>,
    %c0_i32_14 = arith.constant 0 : i32
    %17 = arith.cmpi eq, %arg1, %c0_i32_14 : i32
    %18 = arith.extui %17 : i1 to i32
    %c0_i32_15 = arith.constant 0 : i32
    %19 = arith.cmpi ne, %18, %c0_i32_15 : i32
    scf.if %19 {
      %c0_16 = arith.constant 0 : index
      %c0_17 = arith.constant 0 : index
      %20 = vector.load %arg10[%c0_16, %c0_17] : memref<16x128xf32, #tpu.memory_space<vmem>>, vector<16x128xf32>
      %c0_18 = arith.constant 0 : index
      %c0_19 = arith.constant 0 : index
      %21 = vector.load %arg6[%c0_18, %c0_19] : memref<1x128xf32, #tpu.memory_space<vmem>>, vector<1x128xf32>
      %22 = vector.broadcast %21 : vector<1x128xf32> to vector<16x128xf32>
      %23 = arith.addf %20, %22 : vector<16x128xf32>
      %c0_20 = arith.constant 0 : index
      %c0_21 = arith.constant 0 : index
      %24 = vector.load %arg2[%c0_20, %c0_21] : memref<16x128xbf16, #tpu.memory_space<vmem>>, vector<16x128xbf16>
      %25 = arith.extf %24 : vector<16x128xbf16> to vector<16x128xf32>
      %26 = arith.addf %23, %25 : vector<16x128xf32>
      %cst_22 = arith.constant dense<0.000000e+00> : vector<16xf32>
      %27 = vector.multi_reduction <add>, %26, %cst_22 [1] : vector<16x128xf32> to vector<16xf32>
      %28 = vector.shape_cast %27 : vector<16xf32> to vector<16x1xf32>
      %cst_23 = arith.constant 1.280000e+02 : f32
      %29 = vector.broadcast %cst_23 : f32 to vector<16x1xf32>
      %30 = arith.divf %28, %29 : vector<16x1xf32>
      %31 = vector.broadcast %30 : vector<16x1xf32> to vector<16x128xf32>
      %32 = arith.subf %26, %31 : vector<16x128xf32>
      %33 = arith.mulf %32, %32 : vector<16x128xf32>
      %cst_24 = arith.constant dense<0.000000e+00> : vector<16xf32>
      %34 = vector.multi_reduction <add>, %33, %cst_24 [1] : vector<16x128xf32> to vector<16xf32>
      %35 = vector.shape_cast %34 : vector<16xf32> to vector<16x1xf32>
      %cst_25 = arith.constant 1.280000e+02 : f32
      %36 = vector.broadcast %cst_25 : f32 to vector<16x1xf32>
      %37 = arith.divf %35, %36 : vector<16x1xf32>
      %cst_26 = arith.constant 9.99999974E-6 : f32
      %38 = vector.broadcast %cst_26 : f32 to vector<16x1xf32>
      %39 = arith.addf %37, %38 : vector<16x1xf32>
      %40 = math.rsqrt %39 : vector<16x1xf32>
      %41 = vector.broadcast %40 : vector<16x1xf32> to vector<16x128xf32>
      %42 = arith.mulf %32, %41 : vector<16x128xf32>
      %c0_27 = arith.constant 0 : index
      %c0_28 = arith.constant 0 : index
      %43 = vector.load %arg7[%c0_27, %c0_28] : memref<1x128xf32, #tpu.memory_space<vmem>>, vector<1x128xf32>
      %44 = vector.broadcast %43 : vector<1x128xf32> to vector<16x128xf32>
      %45 = arith.mulf %42, %44 : vector<16x128xf32>
      %c0_29 = arith.constant 0 : index
      %c0_30 = arith.constant 0 : index
      %46 = vector.load %arg8[%c0_29, %c0_30] : memref<1x128xf32, #tpu.memory_space<vmem>>, vector<1x128xf32>
      %47 = vector.broadcast %46 : vector<1x128xf32> to vector<16x128xf32>
      %48 = arith.addf %45, %47 : vector<16x128xf32>
      %49 = arith.truncf %48 : vector<16x128xf32> to vector<16x128xbf16>
      %c0_31 = arith.constant 0 : index
      %c0_32 = arith.constant 0 : index
      %50 = vector.load %arg9[%c0_31, %c0_32] : memref<16x128xbf16, #tpu.memory_space<vmem>>, vector<16x128xbf16>
      tpu.vector_store %arg9[%c0_31, %c0_32], %49 {strides = array<i32>} : memref<16x128xbf16, #tpu.memory_space<vmem>>, vector<16x128xbf16>,
    } else {
    }
    return
  }
  func.func @transform_0(%arg0: i32, %arg1: i32) -> (i32, i32) {
    %c0_i32 = arith.constant 0 : i32
    %c0_i32_0 = arith.constant 0 : i32
    return %arg0, %c0_i32 : i32, i32
  }
  func.func @transform_1(%arg0: i32, %arg1: i32) -> (i32, i32) {
    %c0_i32 = arith.constant 0 : i32
    %c0_i32_0 = arith.constant 0 : i32
    return %c0_i32, %arg1 : i32, i32
  }
  func.func @transform_2(%arg0: i32, %arg1: i32) -> (i32, i32) {
    %c0_i32 = arith.constant 0 : i32
    %c0_i32_0 = arith.constant 0 : i32
    return %c0_i32, %arg1 : i32, i32
  }
  func.func @transform_3(%arg0: i32, %arg1: i32) -> (i32, i32) {
    %c0_i32 = arith.constant 0 : i32
    %c0_i32_0 = arith.constant 0 : i32
    return %arg1, %c0_i32 : i32, i32
  }
  func.func @transform_4(%arg0: i32, %arg1: i32) -> (i32, i32) {
    %c0_i32 = arith.constant 0 : i32
    %c0_i32_0 = arith.constant 0 : i32
    %c0_i32_1 = arith.constant 0 : i32
    return %c0_i32, %c0_i32_0 : i32, i32
  }
  func.func @transform_5(%arg0: i32, %arg1: i32) -> (i32, i32) {
    %c0_i32 = arith.constant 0 : i32
    %c0_i32_0 = arith.constant 0 : i32
    %c0_i32_1 = arith.constant 0 : i32
    return %c0_i32, %c0_i32_0 : i32, i32
  }
  func.func @transform_6(%arg0: i32, %arg1: i32) -> (i32, i32) {
    %c0_i32 = arith.constant 0 : i32
    %c0_i32_0 = arith.constant 0 : i32
    %c0_i32_1 = arith.constant 0 : i32
    return %c0_i32, %c0_i32_0 : i32, i32
  }
  func.func @transform_7(%arg0: i32, %arg1: i32) -> (i32, i32) {
    %c0_i32 = arith.constant 0 : i32
    %c0_i32_0 = arith.constant 0 : i32
    return %arg0, %c0_i32 : i32, i32
  }
}

module attributes {stable_mosaic.version = 11 : i64} {
  func.func @_flash_mha_kernel(%arg0: i32, %arg1: i32, %arg2: i32, %arg3: memref<4x8x32xbf16, #tpu.memory_space<vmem>>, %arg4: memref<4x8x32xbf16, #tpu.memory_space<vmem>>, %arg5: memref<4x8x32xbf16, #tpu.memory_space<vmem>>, %arg6: memref<8x128xbf16, #tpu.memory_space<vmem>>, %arg7: memref<4x8x1xf32, #tpu.memory_space<vmem>>, %arg8: memref<4x8x1xf32, #tpu.memory_space<vmem>>, %arg9: memref<4x8x32xf32, #tpu.memory_space<vmem>>) attributes {dimension_semantics = [#tpu.dimension_semantics<parallel>, #tpu.dimension_semantics<parallel>, #tpu.dimension_semantics<arbitrary>], iteration_bounds = array<i64: 1, 1, 1>, scalar_prefetch = 0 : i64, scratch_operands = 3 : i64, tpu.core_type = #tpu.core_type<tc>, window_params = [{transform_indices = @transform_0, window_bounds = array<i64: 4, 8, 32>}, {transform_indices = @transform_1, window_bounds = array<i64: 4, 8, 32>}, {transform_indices = @transform_2, window_bounds = array<i64: 4, 8, 32>}, {transform_indices = @transform_3, window_bounds = array<i64: 8, 128>}]} {
    %c0_i32 = arith.constant 0 : i32
    %0 = arith.cmpi eq, %arg2, %c0_i32 : i32
    %1 = arith.extui %0 : i1 to i32
    %c0_i32_0 = arith.constant 0 : i32
    %2 = arith.cmpi ne, %1, %c0_i32_0 : i32
    scf.if %2 {
      %cst = arith.constant 0xFF800000 : f32
      %12 = vector.broadcast %cst : f32 to vector<4x8x1xf32>
      %c0 = arith.constant 0 : index
      %c0_5 = arith.constant 0 : index
      %c0_6 = arith.constant 0 : index
      %13 = vector.load %arg7[%c0, %c0_5, %c0_6] : memref<4x8x1xf32, #tpu.memory_space<vmem>>, vector<4x8x1xf32>
      tpu.vector_store %arg7[%c0, %c0_5, %c0_6], %12 {strides = array<i32>} : memref<4x8x1xf32, #tpu.memory_space<vmem>>, vector<4x8x1xf32>,
      %cst_7 = arith.constant 0.000000e+00 : f32
      %14 = vector.broadcast %cst_7 : f32 to vector<4x8x1xf32>
      %c0_8 = arith.constant 0 : index
      %c0_9 = arith.constant 0 : index
      %c0_10 = arith.constant 0 : index
      %15 = vector.load %arg8[%c0_8, %c0_9, %c0_10] : memref<4x8x1xf32, #tpu.memory_space<vmem>>, vector<4x8x1xf32>
      tpu.vector_store %arg8[%c0_8, %c0_9, %c0_10], %14 {strides = array<i32>} : memref<4x8x1xf32, #tpu.memory_space<vmem>>, vector<4x8x1xf32>,
      %cst_11 = arith.constant 0.000000e+00 : f32
      %16 = vector.broadcast %cst_11 : f32 to vector<4x8x32xf32>
      %c0_12 = arith.constant 0 : index
      %c0_13 = arith.constant 0 : index
      %c0_14 = arith.constant 0 : index
      %17 = vector.load %arg9[%c0_12, %c0_13, %c0_14] : memref<4x8x32xf32, #tpu.memory_space<vmem>>, vector<4x8x32xf32>
      tpu.vector_store %arg9[%c0_12, %c0_13, %c0_14], %16 {strides = array<i32>} : memref<4x8x32xf32, #tpu.memory_space<vmem>>, vector<4x8x32xf32>,
    } else {
    }
    %c8_i32 = arith.constant 8 : i32
    %3 = arith.muli %arg2, %c8_i32 : i32
    %c8_i32_1 = arith.constant 8 : i32
    %4 = arith.muli %arg1, %c8_i32_1 : i32
    %c7_i32 = arith.constant 7 : i32
    %5 = arith.addi %4, %c7_i32 : i32
    %6 = arith.cmpi sle, %3, %5 : i32
    %7 = arith.extui %6 : i1 to i32
    %c0_i32_2 = arith.constant 0 : i32
    %8 = arith.cmpi ne, %7, %c0_i32_2 : i32
    scf.if %8 {
      %c0 = arith.constant 0 : index
      %c0_5 = arith.constant 0 : index
      %c0_6 = arith.constant 0 : index
      %12 = vector.load %arg3[%c0, %c0_5, %c0_6] : memref<4x8x32xbf16, #tpu.memory_space<vmem>>, vector<4x8x32xbf16>
      %c0_7 = arith.constant 0 : index
      %c0_8 = arith.constant 0 : index
      %c0_9 = arith.constant 0 : index
      %13 = vector.load %arg4[%c0_7, %c0_8, %c0_9] : memref<4x8x32xbf16, #tpu.memory_space<vmem>>, vector<4x8x32xbf16>
      "tpu.trace_start"() <{level = 10 : i32, message = "bqd,bkd->bqk"}> : () -> ()
      %cst = arith.constant dense<0.000000e+00> : vector<4x8x8xf32>
      %14 = tpu.matmul %12, %13, %cst {dimension_numbers = #tpu.dot_dimension_numbers<[2], [2], [1], [1], [0, 0, 0, 1, 1, 1], [0], [0]>} : vector<4x8x32xbf16>, vector<4x8x32xbf16>, vector<4x8x8xf32> -> vector<4x8x8xf32>
      "tpu.trace_stop"() : () -> ()
      %c8_i32_10 = arith.constant 8 : i32
      %15 = arith.muli %arg1, %c8_i32_10 : i32
      %16 = tpu.iota {dimensions = array<i32: 0>} : vector<8x8xi32>
      %17 = vector.broadcast %15 : i32 to vector<8x8xi32>
      %18 = arith.addi %17, %16 : vector<8x8xi32>
      %c8_i32_11 = arith.constant 8 : i32
      %19 = arith.muli %arg2, %c8_i32_11 : i32
      %20 = tpu.iota {dimensions = array<i32: 1>} : vector<8x8xi32>
      %21 = vector.broadcast %19 : i32 to vector<8x8xi32>
      %22 = arith.addi %21, %20 : vector<8x8xi32>
      %23 = arith.cmpi sle, %22, %18 : vector<8x8xi32>
      %24 = vector.shape_cast %23 : vector<8x8xi1> to vector<1x8x8xi1>
      %cst_12 = arith.constant -1.000000e+30 : f32
      %25 = vector.shape_cast %24 : vector<1x8x8xi1> to vector<1x8x8xi1>
      %26 = vector.broadcast %25 : vector<1x8x8xi1> to vector<4x8x8xi1>
      %27 = vector.broadcast %cst_12 : f32 to vector<4x8x8xf32>
      %28 = arith.select %26, %14, %27 : vector<4x8x8xi1>, vector<4x8x8xf32>
      %c0_13 = arith.constant 0 : index
      %c0_14 = arith.constant 0 : index
      %c0_15 = arith.constant 0 : index
      %29 = vector.load %arg7[%c0_13, %c0_14, %c0_15] : memref<4x8x1xf32, #tpu.memory_space<vmem>>, vector<4x8x1xf32>
      %cst_16 = arith.constant dense<0xFF800000> : vector<4x8xf32>
      %30 = vector.multi_reduction <maximumf>, %28, %cst_16 [2] : vector<4x8x8xf32> to vector<4x8xf32>
      %31 = vector.shape_cast %30 : vector<4x8xf32> to vector<4x8x1xf32>
      %32 = arith.maximumf %29, %31 : vector<4x8x1xf32>
      %33 = arith.subf %29, %32 : vector<4x8x1xf32>
      %34 = math.exp %33 : vector<4x8x1xf32>
      %35 = vector.broadcast %32 : vector<4x8x1xf32> to vector<4x8x8xf32>
      %36 = arith.subf %28, %35 : vector<4x8x8xf32>
      %37 = math.exp %36 : vector<4x8x8xf32>
      %c0_17 = arith.constant 0 : index
      %c0_18 = arith.constant 0 : index
      %c0_19 = arith.constant 0 : index
      %38 = vector.load %arg8[%c0_17, %c0_18, %c0_19] : memref<4x8x1xf32, #tpu.memory_space<vmem>>, vector<4x8x1xf32>
      %39 = arith.mulf %34, %38 : vector<4x8x1xf32>
      %cst_20 = arith.constant dense<0.000000e+00> : vector<4x8xf32>
      %40 = vector.multi_reduction <add>, %37, %cst_20 [2] : vector<4x8x8xf32> to vector<4x8xf32>
      %41 = vector.shape_cast %40 : vector<4x8xf32> to vector<4x8x1xf32>
      %42 = arith.addf %39, %41 : vector<4x8x1xf32>
      %c0_21 = arith.constant 0 : index
      %c0_22 = arith.constant 0 : index
      %c0_23 = arith.constant 0 : index
      %43 = vector.load %arg8[%c0_21, %c0_22, %c0_23] : memref<4x8x1xf32, #tpu.memory_space<vmem>>, vector<4x8x1xf32>
      tpu.vector_store %arg8[%c0_21, %c0_22, %c0_23], %42 {strides = array<i32>} : memref<4x8x1xf32, #tpu.memory_space<vmem>>, vector<4x8x1xf32>,
      %c0_24 = arith.constant 0 : index
      %c0_25 = arith.constant 0 : index
      %c0_26 = arith.constant 0 : index
      %44 = vector.load %arg9[%c0_24, %c0_25, %c0_26] : memref<4x8x32xf32, #tpu.memory_space<vmem>>, vector<4x8x32xf32>
      %45 = vector.broadcast %34 : vector<4x8x1xf32> to vector<4x8x32xf32>
      %46 = arith.mulf %45, %44 : vector<4x8x32xf32>
      %47 = arith.truncf %37 : vector<4x8x8xf32> to vector<4x8x8xbf16>
      %c0_27 = arith.constant 0 : index
      %c0_28 = arith.constant 0 : index
      %c0_29 = arith.constant 0 : index
      %48 = vector.load %arg5[%c0_27, %c0_28, %c0_29] : memref<4x8x32xbf16, #tpu.memory_space<vmem>>, vector<4x8x32xbf16>
      "tpu.trace_start"() <{level = 10 : i32, message = "bqk,bkd->bqd"}> : () -> ()
      %cst_30 = arith.constant dense<0.000000e+00> : vector<4x8x32xf32>
      %49 = tpu.matmul %47, %48, %cst_30 {dimension_numbers = #tpu.dot_dimension_numbers<[2], [1], [1], [2], [0, 0, 0, 1, 1, 2], [0], [0]>} : vector<4x8x8xbf16>, vector<4x8x32xbf16>, vector<4x8x32xf32> -> vector<4x8x32xf32>
      "tpu.trace_stop"() : () -> ()
      %50 = arith.addf %46, %49 : vector<4x8x32xf32>
      %c0_31 = arith.constant 0 : index
      %c0_32 = arith.constant 0 : index
      %c0_33 = arith.constant 0 : index
      %51 = vector.load %arg9[%c0_31, %c0_32, %c0_33] : memref<4x8x32xf32, #tpu.memory_space<vmem>>, vector<4x8x32xf32>
      tpu.vector_store %arg9[%c0_31, %c0_32, %c0_33], %50 {strides = array<i32>} : memref<4x8x32xf32, #tpu.memory_space<vmem>>, vector<4x8x32xf32>,
      %c0_34 = arith.constant 0 : index
      %c0_35 = arith.constant 0 : index
      %c0_36 = arith.constant 0 : index
      %52 = vector.load %arg7[%c0_34, %c0_35, %c0_36] : memref<4x8x1xf32, #tpu.memory_space<vmem>>, vector<4x8x1xf32>
      tpu.vector_store %arg7[%c0_34, %c0_35, %c0_36], %32 {strides = array<i32>} : memref<4x8x1xf32, #tpu.memory_space<vmem>>, vector<4x8x1xf32>,
    } else {
    }
    %c0_i32_3 = arith.constant 0 : i32
    %9 = arith.cmpi eq, %arg2, %c0_i32_3 : i32
    %10 = arith.extui %9 : i1 to i32
    %c0_i32_4 = arith.constant 0 : i32
    %11 = arith.cmpi ne, %10, %c0_i32_4 : i32
    scf.if %11 {
      %c0 = arith.constant 0 : index
      %c0_5 = arith.constant 0 : index
      %c0_6 = arith.constant 0 : index
      %12 = vector.load %arg8[%c0, %c0_5, %c0_6] : memref<4x8x1xf32, #tpu.memory_space<vmem>>, vector<4x8x1xf32>
      %13 = tpu.reciprocal %12 {approx = true} : vector<4x8x1xf32> -> vector<4x8x1xf32>
      %c0_7 = arith.constant 0 : index
      %c0_8 = arith.constant 0 : index
      %c0_9 = arith.constant 0 : index
      %14 = vector.load %arg9[%c0_7, %c0_8, %c0_9] : memref<4x8x32xf32, #tpu.memory_space<vmem>>, vector<4x8x32xf32>
      %15 = vector.broadcast %13 : vector<4x8x1xf32> to vector<4x8x32xf32>
      %16 = arith.mulf %14, %15 : vector<4x8x32xf32>
      %17 = vector.extract_strided_slice %16 {offsets = [0, 0, 0], sizes = [1, 8, 32], strides = [1, 1, 1]} : vector<4x8x32xf32> to vector<1x8x32xf32>
      %18 = vector.shape_cast %17 : vector<1x8x32xf32> to vector<8x32xf32>
      %19 = vector.extract_strided_slice %16 {offsets = [1, 0, 0], sizes = [1, 8, 32], strides = [1, 1, 1]} : vector<4x8x32xf32> to vector<1x8x32xf32>
      %20 = vector.shape_cast %19 : vector<1x8x32xf32> to vector<8x32xf32>
      %21 = vector.extract_strided_slice %16 {offsets = [2, 0, 0], sizes = [1, 8, 32], strides = [1, 1, 1]} : vector<4x8x32xf32> to vector<1x8x32xf32>
      %22 = vector.shape_cast %21 : vector<1x8x32xf32> to vector<8x32xf32>
      %23 = vector.extract_strided_slice %16 {offsets = [3, 0, 0], sizes = [1, 8, 32], strides = [1, 1, 1]} : vector<4x8x32xf32> to vector<1x8x32xf32>
      %24 = vector.shape_cast %23 : vector<1x8x32xf32> to vector<8x32xf32>
      %25 = tpu.concatenate %18, %20, %22, %24 in 1 : vector<8x32xf32>, vector<8x32xf32>, vector<8x32xf32>, vector<8x32xf32> -> vector<8x128xf32>
      %26 = arith.truncf %25 : vector<8x128xf32> to vector<8x128xbf16>
      %c0_10 = arith.constant 0 : index
      %c0_11 = arith.constant 0 : index
      %27 = vector.load %arg6[%c0_10, %c0_11] : memref<8x128xbf16, #tpu.memory_space<vmem>>, vector<8x128xbf16>
      tpu.vector_store %arg6[%c0_10, %c0_11], %26 {strides = array<i32>} : memref<8x128xbf16, #tpu.memory_space<vmem>>, vector<8x128xbf16>,
    } else {
    }
    return
  }
  func.func @transform_0(%arg0: i32, %arg1: i32, %arg2: i32) -> (i32, i32, i32) {
    %c0_i32 = arith.constant 0 : i32
    %c0_i32_0 = arith.constant 0 : i32
    return %arg0, %arg1, %c0_i32 : i32, i32, i32
  }
  func.func @transform_1(%arg0: i32, %arg1: i32, %arg2: i32) -> (i32, i32, i32) {
    %c0_i32 = arith.constant 0 : i32
    %c0_i32_0 = arith.constant 0 : i32
    return %arg0, %arg2, %c0_i32 : i32, i32, i32
  }
  func.func @transform_2(%arg0: i32, %arg1: i32, %arg2: i32) -> (i32, i32, i32) {
    %c0_i32 = arith.constant 0 : i32
    %c0_i32_0 = arith.constant 0 : i32
    return %arg0, %arg2, %c0_i32 : i32, i32, i32
  }
  func.func @transform_3(%arg0: i32, %arg1: i32, %arg2: i32) -> (i32, i32) {
    %c0_i32 = arith.constant 0 : i32
    return %arg1, %arg0 : i32, i32
  }
}

module attributes {stable_mosaic.version = 11 : i64} {
  func.func @_residual_ln_kernel(%arg0: i32, %arg1: memref<8x128xbf16, #tpu.memory_space<vmem>>, %arg2: memref<8x128xbf16, #tpu.memory_space<vmem>>, %arg3: memref<1x128xf32, #tpu.memory_space<vmem>>, %arg4: memref<1x128xf32, #tpu.memory_space<vmem>>, %arg5: memref<8x128xbf16, #tpu.memory_space<vmem>>) attributes {dimension_semantics = [#tpu.dimension_semantics<parallel>], iteration_bounds = array<i64: 1>, scalar_prefetch = 0 : i64, scratch_operands = 0 : i64, tpu.core_type = #tpu.core_type<tc>, window_params = [{transform_indices = @transform_0, window_bounds = array<i64: 8, 128>}, {transform_indices = @transform_1, window_bounds = array<i64: 8, 128>}, {pipeline_mode = #tpu.pipeline_mode<synchronous>, transform_indices = @transform_2, window_bounds = array<i64: 1, 128>}, {pipeline_mode = #tpu.pipeline_mode<synchronous>, transform_indices = @transform_3, window_bounds = array<i64: 1, 128>}, {transform_indices = @transform_4, window_bounds = array<i64: 8, 128>}]} {
    %c0 = arith.constant 0 : index
    %c0_0 = arith.constant 0 : index
    %0 = vector.load %arg1[%c0, %c0_0] : memref<8x128xbf16, #tpu.memory_space<vmem>>, vector<8x128xbf16>
    %1 = arith.extf %0 : vector<8x128xbf16> to vector<8x128xf32>
    %c0_1 = arith.constant 0 : index
    %c0_2 = arith.constant 0 : index
    %2 = vector.load %arg2[%c0_1, %c0_2] : memref<8x128xbf16, #tpu.memory_space<vmem>>, vector<8x128xbf16>
    %3 = arith.extf %2 : vector<8x128xbf16> to vector<8x128xf32>
    %4 = arith.addf %1, %3 : vector<8x128xf32>
    %cst = arith.constant dense<0.000000e+00> : vector<8xf32>
    %5 = vector.multi_reduction <add>, %4, %cst [1] : vector<8x128xf32> to vector<8xf32>
    %6 = vector.shape_cast %5 : vector<8xf32> to vector<8x1xf32>
    %cst_3 = arith.constant 1.280000e+02 : f32
    %7 = vector.broadcast %cst_3 : f32 to vector<8x1xf32>
    %8 = arith.divf %6, %7 : vector<8x1xf32>
    %9 = vector.broadcast %8 : vector<8x1xf32> to vector<8x128xf32>
    %10 = arith.subf %4, %9 : vector<8x128xf32>
    %11 = arith.mulf %10, %10 : vector<8x128xf32>
    %cst_4 = arith.constant dense<0.000000e+00> : vector<8xf32>
    %12 = vector.multi_reduction <add>, %11, %cst_4 [1] : vector<8x128xf32> to vector<8xf32>
    %13 = vector.shape_cast %12 : vector<8xf32> to vector<8x1xf32>
    %cst_5 = arith.constant 1.280000e+02 : f32
    %14 = vector.broadcast %cst_5 : f32 to vector<8x1xf32>
    %15 = arith.divf %13, %14 : vector<8x1xf32>
    %cst_6 = arith.constant 9.99999974E-6 : f32
    %16 = vector.broadcast %cst_6 : f32 to vector<8x1xf32>
    %17 = arith.addf %15, %16 : vector<8x1xf32>
    %18 = math.rsqrt %17 : vector<8x1xf32>
    %19 = vector.broadcast %18 : vector<8x1xf32> to vector<8x128xf32>
    %20 = arith.mulf %10, %19 : vector<8x128xf32>
    %c0_7 = arith.constant 0 : index
    %c0_8 = arith.constant 0 : index
    %21 = vector.load %arg3[%c0_7, %c0_8] : memref<1x128xf32, #tpu.memory_space<vmem>>, vector<1x128xf32>
    %22 = vector.broadcast %21 : vector<1x128xf32> to vector<8x128xf32>
    %23 = arith.mulf %20, %22 : vector<8x128xf32>
    %c0_9 = arith.constant 0 : index
    %c0_10 = arith.constant 0 : index
    %24 = vector.load %arg4[%c0_9, %c0_10] : memref<1x128xf32, #tpu.memory_space<vmem>>, vector<1x128xf32>
    %25 = vector.broadcast %24 : vector<1x128xf32> to vector<8x128xf32>
    %26 = arith.addf %23, %25 : vector<8x128xf32>
    %27 = arith.truncf %26 : vector<8x128xf32> to vector<8x128xbf16>
    %c0_11 = arith.constant 0 : index
    %c0_12 = arith.constant 0 : index
    %28 = vector.load %arg5[%c0_11, %c0_12] : memref<8x128xbf16, #tpu.memory_space<vmem>>, vector<8x128xbf16>
    tpu.vector_store %arg5[%c0_11, %c0_12], %27 {strides = array<i32>} : memref<8x128xbf16, #tpu.memory_space<vmem>>, vector<8x128xbf16>,
    return
  }
  func.func @transform_0(%arg0: i32) -> (i32, i32) {
    %c0_i32 = arith.constant 0 : i32
    %c0_i32_0 = arith.constant 0 : i32
    return %arg0, %c0_i32 : i32, i32
  }
  func.func @transform_1(%arg0: i32) -> (i32, i32) {
    %c0_i32 = arith.constant 0 : i32
    %c0_i32_0 = arith.constant 0 : i32
    return %arg0, %c0_i32 : i32, i32
  }
  func.func @transform_2(%arg0: i32) -> (i32, i32) {
    %c0_i32 = arith.constant 0 : i32
    %c0_i32_0 = arith.constant 0 : i32
    %c0_i32_1 = arith.constant 0 : i32
    return %c0_i32, %c0_i32_0 : i32, i32
  }
  func.func @transform_3(%arg0: i32) -> (i32, i32) {
    %c0_i32 = arith.constant 0 : i32
    %c0_i32_0 = arith.constant 0 : i32
    %c0_i32_1 = arith.constant 0 : i32
    return %c0_i32, %c0_i32_0 : i32, i32
  }
  func.func @transform_4(%arg0: i32) -> (i32, i32) {
    %c0_i32 = arith.constant 0 : i32
    %c0_i32_0 = arith.constant 0 : i32
    return %arg0, %c0_i32 : i32, i32
  }
}

module attributes {stable_mosaic.version = 11 : i64} {
  func.func @_flash_mha_kernel(%arg0: i32, %arg1: i32, %arg2: i32, %arg3: memref<4x8x32xbf16, #tpu.memory_space<vmem>>, %arg4: memref<4x16x32xbf16, #tpu.memory_space<vmem>>, %arg5: memref<4x16x32xbf16, #tpu.memory_space<vmem>>, %arg6: memref<8x128xbf16, #tpu.memory_space<vmem>>, %arg7: memref<4x8x1xf32, #tpu.memory_space<vmem>>, %arg8: memref<4x8x1xf32, #tpu.memory_space<vmem>>, %arg9: memref<4x8x32xf32, #tpu.memory_space<vmem>>) attributes {dimension_semantics = [#tpu.dimension_semantics<parallel>, #tpu.dimension_semantics<parallel>, #tpu.dimension_semantics<arbitrary>], iteration_bounds = array<i64: 1, 1, 1>, scalar_prefetch = 0 : i64, scratch_operands = 3 : i64, tpu.core_type = #tpu.core_type<tc>, window_params = [{transform_indices = @transform_0, window_bounds = array<i64: 4, 8, 32>}, {transform_indices = @transform_1, window_bounds = array<i64: 4, 16, 32>}, {transform_indices = @transform_2, window_bounds = array<i64: 4, 16, 32>}, {transform_indices = @transform_3, window_bounds = array<i64: 8, 128>}]} {
    %c0_i32 = arith.constant 0 : i32
    %0 = arith.cmpi eq, %arg2, %c0_i32 : i32
    %1 = arith.extui %0 : i1 to i32
    %c0_i32_0 = arith.constant 0 : i32
    %2 = arith.cmpi ne, %1, %c0_i32_0 : i32
    scf.if %2 {
      %cst_32 = arith.constant 0xFF800000 : f32
      %33 = vector.broadcast %cst_32 : f32 to vector<4x8x1xf32>
      %c0_33 = arith.constant 0 : index
      %c0_34 = arith.constant 0 : index
      %c0_35 = arith.constant 0 : index
      %34 = vector.load %arg7[%c0_33, %c0_34, %c0_35] : memref<4x8x1xf32, #tpu.memory_space<vmem>>, vector<4x8x1xf32>
      tpu.vector_store %arg7[%c0_33, %c0_34, %c0_35], %33 {strides = array<i32>} : memref<4x8x1xf32, #tpu.memory_space<vmem>>, vector<4x8x1xf32>,
      %cst_36 = arith.constant 0.000000e+00 : f32
      %35 = vector.broadcast %cst_36 : f32 to vector<4x8x1xf32>
      %c0_37 = arith.constant 0 : index
      %c0_38 = arith.constant 0 : index
      %c0_39 = arith.constant 0 : index
      %36 = vector.load %arg8[%c0_37, %c0_38, %c0_39] : memref<4x8x1xf32, #tpu.memory_space<vmem>>, vector<4x8x1xf32>
      tpu.vector_store %arg8[%c0_37, %c0_38, %c0_39], %35 {strides = array<i32>} : memref<4x8x1xf32, #tpu.memory_space<vmem>>, vector<4x8x1xf32>,
      %cst_40 = arith.constant 0.000000e+00 : f32
      %37 = vector.broadcast %cst_40 : f32 to vector<4x8x32xf32>
      %c0_41 = arith.constant 0 : index
      %c0_42 = arith.constant 0 : index
      %c0_43 = arith.constant 0 : index
      %38 = vector.load %arg9[%c0_41, %c0_42, %c0_43] : memref<4x8x32xf32, #tpu.memory_space<vmem>>, vector<4x8x32xf32>
      tpu.vector_store %arg9[%c0_41, %c0_42, %c0_43], %37 {strides = array<i32>} : memref<4x8x32xf32, #tpu.memory_space<vmem>>, vector<4x8x32xf32>,
    } else {
    }
    %c0 = arith.constant 0 : index
    %c0_1 = arith.constant 0 : index
    %c0_2 = arith.constant 0 : index
    %3 = vector.load %arg3[%c0, %c0_1, %c0_2] : memref<4x8x32xbf16, #tpu.memory_space<vmem>>, vector<4x8x32xbf16>
    %c0_3 = arith.constant 0 : index
    %c0_4 = arith.constant 0 : index
    %c0_5 = arith.constant 0 : index
    %4 = vector.load %arg4[%c0_3, %c0_4, %c0_5] : memref<4x16x32xbf16, #tpu.memory_space<vmem>>, vector<4x16x32xbf16>
    "tpu.trace_start"() <{level = 10 : i32, message = "bqd,bkd->bqk"}> : () -> ()
    %cst = arith.constant dense<0.000000e+00> : vector<4x8x16xf32>
    %5 = tpu.matmul %3, %4, %cst {dimension_numbers = #tpu.dot_dimension_numbers<[2], [2], [1], [1], [0, 0, 0, 1, 1, 1], [0], [0]>} : vector<4x8x32xbf16>, vector<4x16x32xbf16>, vector<4x8x16xf32> -> vector<4x8x16xf32>
    "tpu.trace_stop"() : () -> ()
    %c0_6 = arith.constant 0 : index
    %c0_7 = arith.constant 0 : index
    %c0_8 = arith.constant 0 : index
    %6 = vector.load %arg7[%c0_6, %c0_7, %c0_8] : memref<4x8x1xf32, #tpu.memory_space<vmem>>, vector<4x8x1xf32>
    %cst_9 = arith.constant dense<0xFF800000> : vector<4x8xf32>
    %7 = vector.multi_reduction <maximumf>, %5, %cst_9 [2] : vector<4x8x16xf32> to vector<4x8xf32>
    %8 = vector.shape_cast %7 : vector<4x8xf32> to vector<4x8x1xf32>
    %9 = arith.maximumf %6, %8 : vector<4x8x1xf32>
    %10 = arith.subf %6, %9 : vector<4x8x1xf32>
    %11 = math.exp %10 : vector<4x8x1xf32>
    %12 = vector.broadcast %9 : vector<4x8x1xf32> to vector<4x8x16xf32>
    %13 = arith.subf %5, %12 : vector<4x8x16xf32>
    %14 = math.exp %13 : vector<4x8x16xf32>
    %c0_10 = arith.constant 0 : index
    %c0_11 = arith.constant 0 : index
    %c0_12 = arith.constant 0 : index
    %15 = vector.load %arg8[%c0_10, %c0_11, %c0_12] : memref<4x8x1xf32, #tpu.memory_space<vmem>>, vector<4x8x1xf32>
    %16 = arith.mulf %11, %15 : vector<4x8x1xf32>
    %cst_13 = arith.constant dense<0.000000e+00> : vector<4x8xf32>
    %17 = vector.multi_reduction <add>, %14, %cst_13 [2] : vector<4x8x16xf32> to vector<4x8xf32>
    %18 = vector.shape_cast %17 : vector<4x8xf32> to vector<4x8x1xf32>
    %19 = arith.addf %16, %18 : vector<4x8x1xf32>
    %c0_14 = arith.constant 0 : index
    %c0_15 = arith.constant 0 : index
    %c0_16 = arith.constant 0 : index
    %20 = vector.load %arg8[%c0_14, %c0_15, %c0_16] : memref<4x8x1xf32, #tpu.memory_space<vmem>>, vector<4x8x1xf32>
    tpu.vector_store %arg8[%c0_14, %c0_15, %c0_16], %19 {strides = array<i32>} : memref<4x8x1xf32, #tpu.memory_space<vmem>>, vector<4x8x1xf32>,
    %c0_17 = arith.constant 0 : index
    %c0_18 = arith.constant 0 : index
    %c0_19 = arith.constant 0 : index
    %21 = vector.load %arg9[%c0_17, %c0_18, %c0_19] : memref<4x8x32xf32, #tpu.memory_space<vmem>>, vector<4x8x32xf32>
    %22 = vector.broadcast %11 : vector<4x8x1xf32> to vector<4x8x32xf32>
    %23 = arith.mulf %22, %21 : vector<4x8x32xf32>
    %24 = arith.truncf %14 : vector<4x8x16xf32> to vector<4x8x16xbf16>
    %c0_20 = arith.constant 0 : index
    %c0_21 = arith.constant 0 : index
    %c0_22 = arith.constant 0 : index
    %25 = vector.load %arg5[%c0_20, %c0_21, %c0_22] : memref<4x16x32xbf16, #tpu.memory_space<vmem>>, vector<4x16x32xbf16>
    "tpu.trace_start"() <{level = 10 : i32, message = "bqk,bkd->bqd"}> : () -> ()
    %cst_23 = arith.constant dense<0.000000e+00> : vector<4x8x32xf32>
    %26 = tpu.matmul %24, %25, %cst_23 {dimension_numbers = #tpu.dot_dimension_numbers<[2], [1], [1], [2], [0, 0, 0, 1, 1, 2], [0], [0]>} : vector<4x8x16xbf16>, vector<4x16x32xbf16>, vector<4x8x32xf32> -> vector<4x8x32xf32>
    "tpu.trace_stop"() : () -> ()
    %27 = arith.addf %23, %26 : vector<4x8x32xf32>
    %c0_24 = arith.constant 0 : index
    %c0_25 = arith.constant 0 : index
    %c0_26 = arith.constant 0 : index
    %28 = vector.load %arg9[%c0_24, %c0_25, %c0_26] : memref<4x8x32xf32, #tpu.memory_space<vmem>>, vector<4x8x32xf32>
    tpu.vector_store %arg9[%c0_24, %c0_25, %c0_26], %27 {strides = array<i32>} : memref<4x8x32xf32, #tpu.memory_space<vmem>>, vector<4x8x32xf32>,
    %c0_27 = arith.constant 0 : index
    %c0_28 = arith.constant 0 : index
    %c0_29 = arith.constant 0 : index
    %29 = vector.load %arg7[%c0_27, %c0_28, %c0_29] : memref<4x8x1xf32, #tpu.memory_space<vmem>>, vector<4x8x1xf32>
    tpu.vector_store %arg7[%c0_27, %c0_28, %c0_29], %9 {strides = array<i32>} : memref<4x8x1xf32, #tpu.memory_space<vmem>>, vector<4x8x1xf32>,
    %c0_i32_30 = arith.constant 0 : i32
    %30 = arith.cmpi eq, %arg2, %c0_i32_30 : i32
    %31 = arith.extui %30 : i1 to i32
    %c0_i32_31 = arith.constant 0 : i32
    %32 = arith.cmpi ne, %31, %c0_i32_31 : i32
    scf.if %32 {
      %c0_32 = arith.constant 0 : index
      %c0_33 = arith.constant 0 : index
      %c0_34 = arith.constant 0 : index
      %33 = vector.load %arg8[%c0_32, %c0_33, %c0_34] : memref<4x8x1xf32, #tpu.memory_space<vmem>>, vector<4x8x1xf32>
      %34 = tpu.reciprocal %33 {approx = true} : vector<4x8x1xf32> -> vector<4x8x1xf32>
      %c0_35 = arith.constant 0 : index
      %c0_36 = arith.constant 0 : index
      %c0_37 = arith.constant 0 : index
      %35 = vector.load %arg9[%c0_35, %c0_36, %c0_37] : memref<4x8x32xf32, #tpu.memory_space<vmem>>, vector<4x8x32xf32>
      %36 = vector.broadcast %34 : vector<4x8x1xf32> to vector<4x8x32xf32>
      %37 = arith.mulf %35, %36 : vector<4x8x32xf32>
      %38 = vector.extract_strided_slice %37 {offsets = [0, 0, 0], sizes = [1, 8, 32], strides = [1, 1, 1]} : vector<4x8x32xf32> to vector<1x8x32xf32>
      %39 = vector.shape_cast %38 : vector<1x8x32xf32> to vector<8x32xf32>
      %40 = vector.extract_strided_slice %37 {offsets = [1, 0, 0], sizes = [1, 8, 32], strides = [1, 1, 1]} : vector<4x8x32xf32> to vector<1x8x32xf32>
      %41 = vector.shape_cast %40 : vector<1x8x32xf32> to vector<8x32xf32>
      %42 = vector.extract_strided_slice %37 {offsets = [2, 0, 0], sizes = [1, 8, 32], strides = [1, 1, 1]} : vector<4x8x32xf32> to vector<1x8x32xf32>
      %43 = vector.shape_cast %42 : vector<1x8x32xf32> to vector<8x32xf32>
      %44 = vector.extract_strided_slice %37 {offsets = [3, 0, 0], sizes = [1, 8, 32], strides = [1, 1, 1]} : vector<4x8x32xf32> to vector<1x8x32xf32>
      %45 = vector.shape_cast %44 : vector<1x8x32xf32> to vector<8x32xf32>
      %46 = tpu.concatenate %39, %41, %43, %45 in 1 : vector<8x32xf32>, vector<8x32xf32>, vector<8x32xf32>, vector<8x32xf32> -> vector<8x128xf32>
      %47 = arith.truncf %46 : vector<8x128xf32> to vector<8x128xbf16>
      %c0_38 = arith.constant 0 : index
      %c0_39 = arith.constant 0 : index
      %48 = vector.load %arg6[%c0_38, %c0_39] : memref<8x128xbf16, #tpu.memory_space<vmem>>, vector<8x128xbf16>
      tpu.vector_store %arg6[%c0_38, %c0_39], %47 {strides = array<i32>} : memref<8x128xbf16, #tpu.memory_space<vmem>>, vector<8x128xbf16>,
    } else {
    }
    return
  }
  func.func @transform_0(%arg0: i32, %arg1: i32, %arg2: i32) -> (i32, i32, i32) {
    %c0_i32 = arith.constant 0 : i32
    %c0_i32_0 = arith.constant 0 : i32
    return %arg0, %arg1, %c0_i32 : i32, i32, i32
  }
  func.func @transform_1(%arg0: i32, %arg1: i32, %arg2: i32) -> (i32, i32, i32) {
    %c0_i32 = arith.constant 0 : i32
    %c0_i32_0 = arith.constant 0 : i32
    return %arg0, %arg2, %c0_i32 : i32, i32, i32
  }
  func.func @transform_2(%arg0: i32, %arg1: i32, %arg2: i32) -> (i32, i32, i32) {
    %c0_i32 = arith.constant 0 : i32
    %c0_i32_0 = arith.constant 0 : i32
    return %arg0, %arg2, %c0_i32 : i32, i32, i32
  }
  func.func @transform_3(%arg0: i32, %arg1: i32, %arg2: i32) -> (i32, i32) {
    %c0_i32 = arith.constant 0 : i32
    return %arg1, %arg0 : i32, i32
  }
}

module attributes {stable_mosaic.version = 11 : i64} {
  func.func @_ffn_residual_ln_kernel(%arg0: i32, %arg1: i32, %arg2: memref<8x128xbf16, #tpu.memory_space<vmem>>, %arg3: memref<128x512xbf16, #tpu.memory_space<vmem>>, %arg4: memref<1x512xf32, #tpu.memory_space<vmem>>, %arg5: memref<512x128xbf16, #tpu.memory_space<vmem>>, %arg6: memref<1x128xf32, #tpu.memory_space<vmem>>, %arg7: memref<1x128xf32, #tpu.memory_space<vmem>>, %arg8: memref<1x128xf32, #tpu.memory_space<vmem>>, %arg9: memref<8x128xbf16, #tpu.memory_space<vmem>>, %arg10: memref<8x128xf32, #tpu.memory_space<vmem>>) attributes {dimension_semantics = [#tpu.dimension_semantics<parallel>, #tpu.dimension_semantics<arbitrary>], iteration_bounds = array<i64: 1, 1>, scalar_prefetch = 0 : i64, scratch_operands = 1 : i64, tpu.core_type = #tpu.core_type<tc>, window_params = [{transform_indices = @transform_0, window_bounds = array<i64: 8, 128>}, {transform_indices = @transform_1, window_bounds = array<i64: 128, 512>}, {transform_indices = @transform_2, window_bounds = array<i64: 1, 512>}, {transform_indices = @transform_3, window_bounds = array<i64: 512, 128>}, {pipeline_mode = #tpu.pipeline_mode<synchronous>, transform_indices = @transform_4, window_bounds = array<i64: 1, 128>}, {pipeline_mode = #tpu.pipeline_mode<synchronous>, transform_indices = @transform_5, window_bounds = array<i64: 1, 128>}, {pipeline_mode = #tpu.pipeline_mode<synchronous>, transform_indices = @transform_6, window_bounds = array<i64: 1, 128>}, {transform_indices = @transform_7, window_bounds = array<i64: 8, 128>}]} {
    %c0_i32 = arith.constant 0 : i32
    %0 = arith.cmpi eq, %arg1, %c0_i32 : i32
    %1 = arith.extui %0 : i1 to i32
    %c0_i32_0 = arith.constant 0 : i32
    %2 = arith.cmpi ne, %1, %c0_i32_0 : i32
    scf.if %2 {
      %cst_16 = arith.constant 0.000000e+00 : f32
      %20 = vector.broadcast %cst_16 : f32 to vector<8x128xf32>
      %c0_17 = arith.constant 0 : index
      %c0_18 = arith.constant 0 : index
      %21 = vector.load %arg10[%c0_17, %c0_18] : memref<8x128xf32, #tpu.memory_space<vmem>>, vector<8x128xf32>
      tpu.vector_store %arg10[%c0_17, %c0_18], %20 {strides = array<i32>} : memref<8x128xf32, #tpu.memory_space<vmem>>, vector<8x128xf32>,
    } else {
    }
    %c0 = arith.constant 0 : index
    %c0_1 = arith.constant 0 : index
    %3 = vector.load %arg2[%c0, %c0_1] : memref<8x128xbf16, #tpu.memory_space<vmem>>, vector<8x128xbf16>
    %c0_2 = arith.constant 0 : index
    %c0_3 = arith.constant 0 : index
    %4 = vector.load %arg3[%c0_2, %c0_3] : memref<128x512xbf16, #tpu.memory_space<vmem>>, vector<128x512xbf16>
    %cst = arith.constant dense<0.000000e+00> : vector<8x512xf32>
    %5 = tpu.matmul %3, %4, %cst {dimension_numbers = #tpu.dot_dimension_numbers<[1], [0], [0], [1], [0, 0, 1, 1], [], []>} : vector<8x128xbf16>, vector<128x512xbf16>, vector<8x512xf32> -> vector<8x512xf32>
    %c0_4 = arith.constant 0 : index
    %c0_5 = arith.constant 0 : index
    %6 = vector.load %arg4[%c0_4, %c0_5] : memref<1x512xf32, #tpu.memory_space<vmem>>, vector<1x512xf32>
    %7 = vector.broadcast %6 : vector<1x512xf32> to vector<8x512xf32>
    %8 = arith.addf %5, %7 : vector<8x512xf32>
    %cst_6 = arith.constant 0.000000e+00 : f32
    %9 = vector.broadcast %cst_6 : f32 to vector<8x512xf32>
    %10 = arith.maximumf %8, %9 : vector<8x512xf32>
    %c0_7 = arith.constant 0 : index
    %c0_8 = arith.constant 0 : index
    %11 = vector.load %arg10[%c0_7, %c0_8] : memref<8x128xf32, #tpu.memory_space<vmem>>, vector<8x128xf32>
    %12 = arith.truncf %10 : vector<8x512xf32> to vector<8x512xbf16>
    %c0_9 = arith.constant 0 : index
    %c0_10 = arith.constant 0 : index
    %13 = vector.load %arg5[%c0_9, %c0_10] : memref<512x128xbf16, #tpu.memory_space<vmem>>, vector<512x128xbf16>
    %cst_11 = arith.constant dense<0.000000e+00> : vector<8x128xf32>
    %14 = tpu.matmul %12, %13, %cst_11 {dimension_numbers = #tpu.dot_dimension_numbers<[1], [0], [0], [1], [0, 0, 1, 1], [], []>} : vector<8x512xbf16>, vector<512x128xbf16>, vector<8x128xf32> -> vector<8x128xf32>
    %15 = arith.addf %11, %14 : vector<8x128xf32>
    %c0_12 = arith.constant 0 : index
    %c0_13 = arith.constant 0 : index
    %16 = vector.load %arg10[%c0_12, %c0_13] : memref<8x128xf32, #tpu.memory_space<vmem>>, vector<8x128xf32>
    tpu.vector_store %arg10[%c0_12, %c0_13], %15 {strides = array<i32>} : memref<8x128xf32, #tpu.memory_space<vmem>>, vector<8x128xf32>,
    %c0_i32_14 = arith.constant 0 : i32
    %17 = arith.cmpi eq, %arg1, %c0_i32_14 : i32
    %18 = arith.extui %17 : i1 to i32
    %c0_i32_15 = arith.constant 0 : i32
    %19 = arith.cmpi ne, %18, %c0_i32_15 : i32
    scf.if %19 {
      %c0_16 = arith.constant 0 : index
      %c0_17 = arith.constant 0 : index
      %20 = vector.load %arg10[%c0_16, %c0_17] : memref<8x128xf32, #tpu.memory_space<vmem>>, vector<8x128xf32>
      %c0_18 = arith.constant 0 : index
      %c0_19 = arith.constant 0 : index
      %21 = vector.load %arg6[%c0_18, %c0_19] : memref<1x128xf32, #tpu.memory_space<vmem>>, vector<1x128xf32>
      %22 = vector.broadcast %21 : vector<1x128xf32> to vector<8x128xf32>
      %23 = arith.addf %20, %22 : vector<8x128xf32>
      %c0_20 = arith.constant 0 : index
      %c0_21 = arith.constant 0 : index
      %24 = vector.load %arg2[%c0_20, %c0_21] : memref<8x128xbf16, #tpu.memory_space<vmem>>, vector<8x128xbf16>
      %25 = arith.extf %24 : vector<8x128xbf16> to vector<8x128xf32>
      %26 = arith.addf %23, %25 : vector<8x128xf32>
      %cst_22 = arith.constant dense<0.000000e+00> : vector<8xf32>
      %27 = vector.multi_reduction <add>, %26, %cst_22 [1] : vector<8x128xf32> to vector<8xf32>
      %28 = vector.shape_cast %27 : vector<8xf32> to vector<8x1xf32>
      %cst_23 = arith.constant 1.280000e+02 : f32
      %29 = vector.broadcast %cst_23 : f32 to vector<8x1xf32>
      %30 = arith.divf %28, %29 : vector<8x1xf32>
      %31 = vector.broadcast %30 : vector<8x1xf32> to vector<8x128xf32>
      %32 = arith.subf %26, %31 : vector<8x128xf32>
      %33 = arith.mulf %32, %32 : vector<8x128xf32>
      %cst_24 = arith.constant dense<0.000000e+00> : vector<8xf32>
      %34 = vector.multi_reduction <add>, %33, %cst_24 [1] : vector<8x128xf32> to vector<8xf32>
      %35 = vector.shape_cast %34 : vector<8xf32> to vector<8x1xf32>
      %cst_25 = arith.constant 1.280000e+02 : f32
      %36 = vector.broadcast %cst_25 : f32 to vector<8x1xf32>
      %37 = arith.divf %35, %36 : vector<8x1xf32>
      %cst_26 = arith.constant 9.99999974E-6 : f32
      %38 = vector.broadcast %cst_26 : f32 to vector<8x1xf32>
      %39 = arith.addf %37, %38 : vector<8x1xf32>
      %40 = math.rsqrt %39 : vector<8x1xf32>
      %41 = vector.broadcast %40 : vector<8x1xf32> to vector<8x128xf32>
      %42 = arith.mulf %32, %41 : vector<8x128xf32>
      %c0_27 = arith.constant 0 : index
      %c0_28 = arith.constant 0 : index
      %43 = vector.load %arg7[%c0_27, %c0_28] : memref<1x128xf32, #tpu.memory_space<vmem>>, vector<1x128xf32>
      %44 = vector.broadcast %43 : vector<1x128xf32> to vector<8x128xf32>
      %45 = arith.mulf %42, %44 : vector<8x128xf32>
      %c0_29 = arith.constant 0 : index
      %c0_30 = arith.constant 0 : index
      %46 = vector.load %arg8[%c0_29, %c0_30] : memref<1x128xf32, #tpu.memory_space<vmem>>, vector<1x128xf32>
      %47 = vector.broadcast %46 : vector<1x128xf32> to vector<8x128xf32>
      %48 = arith.addf %45, %47 : vector<8x128xf32>
      %49 = arith.truncf %48 : vector<8x128xf32> to vector<8x128xbf16>
      %c0_31 = arith.constant 0 : index
      %c0_32 = arith.constant 0 : index
      %50 = vector.load %arg9[%c0_31, %c0_32] : memref<8x128xbf16, #tpu.memory_space<vmem>>, vector<8x128xbf16>
      tpu.vector_store %arg9[%c0_31, %c0_32], %49 {strides = array<i32>} : memref<8x128xbf16, #tpu.memory_space<vmem>>, vector<8x128xbf16>,
    } else {
    }
    return
  }
  func.func @transform_0(%arg0: i32, %arg1: i32) -> (i32, i32) {
    %c0_i32 = arith.constant 0 : i32
    %c0_i32_0 = arith.constant 0 : i32
    return %arg0, %c0_i32 : i32, i32
  }
  func.func @transform_1(%arg0: i32, %arg1: i32) -> (i32, i32) {
    %c0_i32 = arith.constant 0 : i32
    %c0_i32_0 = arith.constant 0 : i32
    return %c0_i32, %arg1 : i32, i32
  }
  func.func @transform_2(%arg0: i32, %arg1: i32) -> (i32, i32) {
    %c0_i32 = arith.constant 0 : i32
    %c0_i32_0 = arith.constant 0 : i32
    return %c0_i32, %arg1 : i32, i32
  }
  func.func @transform_3(%arg0: i32, %arg1: i32) -> (i32, i32) {
    %c0_i32 = arith.constant 0 : i32
    %c0_i32_0 = arith.constant 0 : i32
    return %arg1, %c0_i32 : i32, i32
  }
  func.func @transform_4(%arg0: i32, %arg1: i32) -> (i32, i32) {
    %c0_i32 = arith.constant 0 : i32
    %c0_i32_0 = arith.constant 0 : i32
    %c0_i32_1 = arith.constant 0 : i32
    return %c0_i32, %c0_i32_0 : i32, i32
  }
  func.func @transform_5(%arg0: i32, %arg1: i32) -> (i32, i32) {
    %c0_i32 = arith.constant 0 : i32
    %c0_i32_0 = arith.constant 0 : i32
    %c0_i32_1 = arith.constant 0 : i32
    return %c0_i32, %c0_i32_0 : i32, i32
  }
  func.func @transform_6(%arg0: i32, %arg1: i32) -> (i32, i32) {
    %c0_i32 = arith.constant 0 : i32
    %c0_i32_0 = arith.constant 0 : i32
    %c0_i32_1 = arith.constant 0 : i32
    return %c0_i32, %c0_i32_0 : i32, i32
  }
  func.func @transform_7(%arg0: i32, %arg1: i32) -> (i32, i32) {
    %c0_i32 = arith.constant 0 : i32
    %c0_i32_0 = arith.constant 0 : i32
    return %arg0, %c0_i32 : i32, i32
  }
}

module attributes {stable_mosaic.version = 11 : i64} {
  func.func @_ffn_residual_ln_kernel(%arg0: i32, %arg1: i32, %arg2: memref<8x128xbf16, #tpu.memory_space<vmem>>, %arg3: memref<128x512xbf16, #tpu.memory_space<vmem>>, %arg4: memref<1x512xf32, #tpu.memory_space<vmem>>, %arg5: memref<512x128xbf16, #tpu.memory_space<vmem>>, %arg6: memref<1x128xf32, #tpu.memory_space<vmem>>, %arg7: memref<1x128xf32, #tpu.memory_space<vmem>>, %arg8: memref<1x128xf32, #tpu.memory_space<vmem>>, %arg9: memref<8x128xbf16, #tpu.memory_space<vmem>>, %arg10: memref<8x128xf32, #tpu.memory_space<vmem>>) attributes {dimension_semantics = [#tpu.dimension_semantics<parallel>, #tpu.dimension_semantics<arbitrary>], iteration_bounds = array<i64: 1, 1>, scalar_prefetch = 0 : i64, scratch_operands = 1 : i64, tpu.core_type = #tpu.core_type<tc>, window_params = [{transform_indices = @transform_0, window_bounds = array<i64: 8, 128>}, {transform_indices = @transform_1, window_bounds = array<i64: 128, 512>}, {transform_indices = @transform_2, window_bounds = array<i64: 1, 512>}, {transform_indices = @transform_3, window_bounds = array<i64: 512, 128>}, {pipeline_mode = #tpu.pipeline_mode<synchronous>, transform_indices = @transform_4, window_bounds = array<i64: 1, 128>}, {pipeline_mode = #tpu.pipeline_mode<synchronous>, transform_indices = @transform_5, window_bounds = array<i64: 1, 128>}, {pipeline_mode = #tpu.pipeline_mode<synchronous>, transform_indices = @transform_6, window_bounds = array<i64: 1, 128>}, {transform_indices = @transform_7, window_bounds = array<i64: 8, 128>}]} {
    %c0_i32 = arith.constant 0 : i32
    %0 = arith.cmpi eq, %arg1, %c0_i32 : i32
    %1 = arith.extui %0 : i1 to i32
    %c0_i32_0 = arith.constant 0 : i32
    %2 = arith.cmpi ne, %1, %c0_i32_0 : i32
    scf.if %2 {
      %cst_16 = arith.constant 0.000000e+00 : f32
      %20 = vector.broadcast %cst_16 : f32 to vector<8x128xf32>
      %c0_17 = arith.constant 0 : index
      %c0_18 = arith.constant 0 : index
      %21 = vector.load %arg10[%c0_17, %c0_18] : memref<8x128xf32, #tpu.memory_space<vmem>>, vector<8x128xf32>
      tpu.vector_store %arg10[%c0_17, %c0_18], %20 {strides = array<i32>} : memref<8x128xf32, #tpu.memory_space<vmem>>, vector<8x128xf32>,
    } else {
    }
    %c0 = arith.constant 0 : index
    %c0_1 = arith.constant 0 : index
    %3 = vector.load %arg2[%c0, %c0_1] : memref<8x128xbf16, #tpu.memory_space<vmem>>, vector<8x128xbf16>
    %c0_2 = arith.constant 0 : index
    %c0_3 = arith.constant 0 : index
    %4 = vector.load %arg3[%c0_2, %c0_3] : memref<128x512xbf16, #tpu.memory_space<vmem>>, vector<128x512xbf16>
    %cst = arith.constant dense<0.000000e+00> : vector<8x512xf32>
    %5 = tpu.matmul %3, %4, %cst {dimension_numbers = #tpu.dot_dimension_numbers<[1], [0], [0], [1], [0, 0, 1, 1], [], []>} : vector<8x128xbf16>, vector<128x512xbf16>, vector<8x512xf32> -> vector<8x512xf32>
    %c0_4 = arith.constant 0 : index
    %c0_5 = arith.constant 0 : index
    %6 = vector.load %arg4[%c0_4, %c0_5] : memref<1x512xf32, #tpu.memory_space<vmem>>, vector<1x512xf32>
    %7 = vector.broadcast %6 : vector<1x512xf32> to vector<8x512xf32>
    %8 = arith.addf %5, %7 : vector<8x512xf32>
    %cst_6 = arith.constant 0.000000e+00 : f32
    %9 = vector.broadcast %cst_6 : f32 to vector<8x512xf32>
    %10 = arith.maximumf %8, %9 : vector<8x512xf32>
    %c0_7 = arith.constant 0 : index
    %c0_8 = arith.constant 0 : index
    %11 = vector.load %arg10[%c0_7, %c0_8] : memref<8x128xf32, #tpu.memory_space<vmem>>, vector<8x128xf32>
    %12 = arith.truncf %10 : vector<8x512xf32> to vector<8x512xbf16>
    %c0_9 = arith.constant 0 : index
    %c0_10 = arith.constant 0 : index
    %13 = vector.load %arg5[%c0_9, %c0_10] : memref<512x128xbf16, #tpu.memory_space<vmem>>, vector<512x128xbf16>
    %cst_11 = arith.constant dense<0.000000e+00> : vector<8x128xf32>
    %14 = tpu.matmul %12, %13, %cst_11 {dimension_numbers = #tpu.dot_dimension_numbers<[1], [0], [0], [1], [0, 0, 1, 1], [], []>} : vector<8x512xbf16>, vector<512x128xbf16>, vector<8x128xf32> -> vector<8x128xf32>
    %15 = arith.addf %11, %14 : vector<8x128xf32>
    %c0_12 = arith.constant 0 : index
    %c0_13 = arith.constant 0 : index
    %16 = vector.load %arg10[%c0_12, %c0_13] : memref<8x128xf32, #tpu.memory_space<vmem>>, vector<8x128xf32>
    tpu.vector_store %arg10[%c0_12, %c0_13], %15 {strides = array<i32>} : memref<8x128xf32, #tpu.memory_space<vmem>>, vector<8x128xf32>,
    %c0_i32_14 = arith.constant 0 : i32
    %17 = arith.cmpi eq, %arg1, %c0_i32_14 : i32
    %18 = arith.extui %17 : i1 to i32
    %c0_i32_15 = arith.constant 0 : i32
    %19 = arith.cmpi ne, %18, %c0_i32_15 : i32
    scf.if %19 {
      %c0_16 = arith.constant 0 : index
      %c0_17 = arith.constant 0 : index
      %20 = vector.load %arg10[%c0_16, %c0_17] : memref<8x128xf32, #tpu.memory_space<vmem>>, vector<8x128xf32>
      %c0_18 = arith.constant 0 : index
      %c0_19 = arith.constant 0 : index
      %21 = vector.load %arg6[%c0_18, %c0_19] : memref<1x128xf32, #tpu.memory_space<vmem>>, vector<1x128xf32>
      %22 = vector.broadcast %21 : vector<1x128xf32> to vector<8x128xf32>
      %23 = arith.addf %20, %22 : vector<8x128xf32>
      %c0_20 = arith.constant 0 : index
      %c0_21 = arith.constant 0 : index
      %24 = vector.load %arg2[%c0_20, %c0_21] : memref<8x128xbf16, #tpu.memory_space<vmem>>, vector<8x128xbf16>
      %25 = arith.extf %24 : vector<8x128xbf16> to vector<8x128xf32>
      %26 = arith.addf %23, %25 : vector<8x128xf32>
      %cst_22 = arith.constant dense<0.000000e+00> : vector<8xf32>
      %27 = vector.multi_reduction <add>, %26, %cst_22 [1] : vector<8x128xf32> to vector<8xf32>
      %28 = vector.shape_cast %27 : vector<8xf32> to vector<8x1xf32>
      %cst_23 = arith.constant 1.280000e+02 : f32
      %29 = vector.broadcast %cst_23 : f32 to vector<8x1xf32>
      %30 = arith.divf %28, %29 : vector<8x1xf32>
      %31 = vector.broadcast %30 : vector<8x1xf32> to vector<8x128xf32>
      %32 = arith.subf %26, %31 : vector<8x128xf32>
      %33 = arith.mulf %32, %32 : vector<8x128xf32>
      %cst_24 = arith.constant dense<0.000000e+00> : vector<8xf32>
      %34 = vector.multi_reduction <add>, %33, %cst_24 [1] : vector<8x128xf32> to vector<8xf32>
      %35 = vector.shape_cast %34 : vector<8xf32> to vector<8x1xf32>
      %cst_25 = arith.constant 1.280000e+02 : f32
      %36 = vector.broadcast %cst_25 : f32 to vector<8x1xf32>
      %37 = arith.divf %35, %36 : vector<8x1xf32>
      %cst_26 = arith.constant 9.99999974E-6 : f32
      %38 = vector.broadcast %cst_26 : f32 to vector<8x1xf32>
      %39 = arith.addf %37, %38 : vector<8x1xf32>
      %40 = math.rsqrt %39 : vector<8x1xf32>
      %41 = vector.broadcast %40 : vector<8x1xf32> to vector<8x128xf32>
      %42 = arith.mulf %32, %41 : vector<8x128xf32>
      %c0_27 = arith.constant 0 : index
      %c0_28 = arith.constant 0 : index
      %43 = vector.load %arg7[%c0_27, %c0_28] : memref<1x128xf32, #tpu.memory_space<vmem>>, vector<1x128xf32>
      %44 = vector.broadcast %43 : vector<1x128xf32> to vector<8x128xf32>
      %45 = arith.mulf %42, %44 : vector<8x128xf32>
      %c0_29 = arith.constant 0 : index
      %c0_30 = arith.constant 0 : index
      %46 = vector.load %arg8[%c0_29, %c0_30] : memref<1x128xf32, #tpu.memory_space<vmem>>, vector<1x128xf32>
      %47 = vector.broadcast %46 : vector<1x128xf32> to vector<8x128xf32>
      %48 = arith.addf %45, %47 : vector<8x128xf32>
      %49 = arith.truncf %48 : vector<8x128xf32> to vector<8x128xbf16>
      %c0_31 = arith.constant 0 : index
      %c0_32 = arith.constant 0 : index
      %50 = vector.load %arg9[%c0_31, %c0_32] : memref<8x128xbf16, #tpu.memory_space<vmem>>, vector<8x128xbf16>
      tpu.vector_store %arg9[%c0_31, %c0_32], %49 {strides = array<i32>} : memref<8x128xbf16, #tpu.memory_space<vmem>>, vector<8x128xbf16>,
    } else {
    }
    return
  }
  func.func @transform_0(%arg0: i32, %arg1: i32) -> (i32, i32) {
    %c0_i32 = arith.constant 0 : i32
    %c0_i32_0 = arith.constant 0 : i32
    return %arg0, %c0_i32 : i32, i32
  }
  func.func @transform_1(%arg0: i32, %arg1: i32) -> (i32, i32) {
    %c0_i32 = arith.constant 0 : i32
    %c0_i32_0 = arith.constant 0 : i32
    return %c0_i32, %arg1 : i32, i32
  }
  func.func @transform_2(%arg0: i32, %arg1: i32) -> (i32, i32) {
    %c0_i32 = arith.constant 0 : i32
    %c0_i32_0 = arith.constant 0 : i32
    return %c0_i32, %arg1 : i32, i32
  }
  func.func @transform_3(%arg0: i32, %arg1: i32) -> (i32, i32) {
    %c0_i32 = arith.constant 0 : i32
    %c0_i32_0 = arith.constant 0 : i32
    return %arg1, %c0_i32 : i32, i32
  }
  func.func @transform_4(%arg0: i32, %arg1: i32) -> (i32, i32) {
    %c0_i32 = arith.constant 0 : i32
    %c0_i32_0 = arith.constant 0 : i32
    %c0_i32_1 = arith.constant 0 : i32
    return %c0_i32, %c0_i32_0 : i32, i32
  }
  func.func @transform_5(%arg0: i32, %arg1: i32) -> (i32, i32) {
    %c0_i32 = arith.constant 0 : i32
    %c0_i32_0 = arith.constant 0 : i32
    %c0_i32_1 = arith.constant 0 : i32
    return %c0_i32, %c0_i32_0 : i32, i32
  }
  func.func @transform_6(%arg0: i32, %arg1: i32) -> (i32, i32) {
    %c0_i32 = arith.constant 0 : i32
    %c0_i32_0 = arith.constant 0 : i32
    %c0_i32_1 = arith.constant 0 : i32
    return %c0_i32, %c0_i32_0 : i32, i32
  }
  func.func @transform_7(%arg0: i32, %arg1: i32) -> (i32, i32) {
    %c0_i32 = arith.constant 0 : i32
    %c0_i32_0 = arith.constant 0 : i32
    return %arg0, %c0_i32 : i32, i32
  }
}

</mosaic_0001>

<llo_original>
// kernel: transformer_forward.17
$region0: #{transformer_forward.17}
  #allocation0 [shape = 'u32[]', space=smem, size = 0x4, offset = 0x4, fixed_abs, tag = 'smem constant byte address 0x4 - core index']
  #allocation1 [shape = 'u32[72,128]{1,0:T(1,128)}', space=vmem, size = 0x9000, scoped, tag = 'internal scratch']
  %s0 = inlined_call_operand.vmem [shape: bf16[16,128], index: 0, kind: input, shape index: {}]
  %s1 = inlined_call_operand.vmem [shape: bf16[16,128], index: 1, kind: input, shape index: {}]
  %s2 = inlined_call_operand.vmem [shape: f32[1,128], index: 2, kind: input, shape index: {}]
  %s3 = inlined_call_operand.vmem [shape: f32[1,128], index: 3, kind: input, shape index: {}]
  %s4 = inlined_call_operand.vmem [shape: bf16[16,128], index: 4, kind: output, shape index: {}]
  %s5 = sld [smem:[#allocation0]]
  $region26: #{transformer_forward.17} parent=0
    _
  %s7 = ssub.s32 1, %s5
  %s8 = scalar_select 0, %s7, %s5
  // Predicated region
  $region2: #{transformer_forward.17} parent=0 // pred_check
    _
  $region3: #{transformer_forward.17} parent=0 // pred_check_branch
    %10 = sbr.rel (0) target = $region5
  $region4: #{transformer_forward.17} parent=0 // pred_region
    _
  $region5: #{transformer_forward.17} parent=0 // pred_fallthru
    _
  // Predicated region
  $region6: #{transformer_forward.17} parent=0 // pred_check
    _
  $region7: #{transformer_forward.17} parent=0 // pred_check_branch
    %12 = sbr.rel (0) target = $region9
  $region8: #{transformer_forward.17} parent=0 // pred_region
    _
  $region9: #{transformer_forward.17} parent=0 // pred_fallthru
    _
  // Predicated region
  $region10: #{transformer_forward.17} parent=0 // pred_check
    _
  $region11: #{transformer_forward.17} parent=0 // pred_check_branch
    %14 = sbr.rel (0) target = $region13
  $region12: #{transformer_forward.17} parent=0 // pred_region
    _
  $region13: #{transformer_forward.17} parent=0 // pred_fallthru
    _
  // Predicated region
  $region14: #{transformer_forward.17} parent=0 // pred_check
    _
  $region15: #{transformer_forward.17} parent=0 // pred_check_branch
    %16 = sbr.rel (0) target = $region17
  $region16: #{transformer_forward.17} parent=0 // pred_region
    _
  $region17: #{transformer_forward.17} parent=0 // pred_fallthru
    _
  %v17 = vld [vmem:[%s0] sm:$0xf]
  %v18 = vld [vmem:[%s0 + $0x4] sm:$0xf]
  %v19 = vunpack.c.l.bf16 %v17
  %v20 = vunpack.c.l.bf16 %v18
  %v21 = vld [vmem:[%s1] sm:$0xf]
  %v22 = vld [vmem:[%s1 + $0x4] sm:$0xf]
  %v23 = vunpack.c.l.bf16 %v21
  %v24 = vunpack.c.l.bf16 %v22
  %v25 = vadd.f32 %v19, %v23
  %v26 = vadd.f32 %v20, %v24
  %27 = vadd.xlane.f32.xlu0 %v25
  %v28 = vpop.xlane.xlu0 %27
  %29 = vadd.xlane.f32.xlu0 %v26
  %v30 = vpop.xlane.xlu0 %29
  %v31 = vrcp.pop 128.0
  %v32 = vmul.f32 128.0, %v31
  %v33 = vsub.f32 1.0, %v32
  %v34 = vmul.f32 %v31, %v33
  %v35 = vadd.f32 %v31, %v34
  %vm36 = vweird.f32 %v31
  %v37 = vsel %vm36, %v31, %v35
  %v38 = vmul.f32 %v28, %v37
  %v39 = vmul.f32 %v30, %v37
  %v40 = vsub.f32 %v25, %v38
  %v41 = vsub.f32 %v26, %v39
  %v42 = vmul.f32 %v40, %v40
  %v43 = vmul.f32 %v41, %v41
  %44 = vadd.xlane.f32.xlu0 %v42
  %v45 = vpop.xlane.xlu0 %44
  %46 = vadd.xlane.f32.xlu0 %v43
  %v47 = vpop.xlane.xlu0 %46
  %v48 = vmul.f32 %v45, %v37
  %v49 = vmul.f32 %v47, %v37
  %v50 = vadd.f32 %v48, 1e-05
  %v51 = vadd.f32 %v49, 1e-05
  %v52 = vrsqrt.pop %v50
  %v53 = vmul.f32 %v52, %v50
  %v54 = vmul.f32 %v53, %v52
  %v55 = vmul.f32 0.5, %v54
  %v56 = vsub.f32 1.5, %v55
  %v57 = vmul.f32 %v52, %v56
  %vm58 = vweird.f32 %v50
  %vm59 = vweird.f32 %v52
  %vm60 = vmor %vm58, %vm59
  %v61 = vsel %vm60, %v52, %v57
  %v62 = vrsqrt.pop %v51
  %v63 = vmul.f32 %v62, %v51
  %v64 = vmul.f32 %v63, %v62
  %v65 = vmul.f32 0.5, %v64
  %v66 = vsub.f32 1.5, %v65
  %v67 = vmul.f32 %v62, %v66
  %vm68 = vweird.f32 %v51
  %vm69 = vweird.f32 %v62
  %vm70 = vmor %vm68, %vm69
  %v71 = vsel %vm70, %v62, %v67
  %v72 = vmul.f32 %v40, %v61
  %v73 = vmul.f32 %v41, %v71
  %v74 = vld [vmem:[%s2] sm:$0x1]
  %v76 = vperm.slane %v74, 0
  %v78 = vmul.f32 %v72, %v76
  %v79 = vmul.f32 %v73, %v76
  %v80 = vld [vmem:[%s3] sm:$0x1]
  %v82 = vperm.slane %v80, 0
  %v84 = vadd.f32 %v78, %v82
  %v85 = vadd.f32 %v79, %v82
  %v86 = vpack.c.bf16 %v84, %v84
  %v87 = vpack.c.bf16 %v85, %v85
  %88 = vst [vmem:[%s4] sm:$0xf] %v86
  %89 = vst [vmem:[%s4 + $0x4] sm:$0xf] %v87
  // Predicated region
  $region18: #{transformer_forward.17} parent=0 // pred_check
    _
  $region19: #{transformer_forward.17} parent=0 // pred_check_branch
    %91 = sbr.rel (0) target = $region21
  $region20: #{transformer_forward.17} parent=0 // pred_region
    _
  $region21: #{transformer_forward.17} parent=0 // pred_fallthru
    _
  // Predicated region
  $region22: #{transformer_forward.17} parent=0 // pred_check
    _
  $region23: #{transformer_forward.17} parent=0 // pred_check_branch
    %93 = sbr.rel (0) target = $region25
  $region24: #{transformer_forward.17} parent=0 // pred_region
    _
  $region25: #{transformer_forward.17} parent=0 // pred_fallthru
    _

// kernel: transformer_forward.16
$region0: #{transformer_forward.16}
  #allocation0 [shape = 'u32[]', space=smem, size = 0x4, offset = 0x4, fixed_abs, tag = 'smem constant byte address 0x4 - core index']
  #allocation1 [shape = 'u32[72,128]{1,0:T(1,128)}', space=vmem, size = 0x9000, scoped, tag = 'internal scratch']
  #allocation2 [shape = 'f32[4,16,1]{2,1,0:T(8,128)}', space=vmem, size = 0x8000, scoped, tag = 'scratch operand']
  #allocation3 [shape = 'f32[4,16,1]{2,1,0:T(8,128)}', space=vmem, size = 0x8000, scoped, tag = 'scratch operand']
  #allocation4 [shape = 'f32[4,16,32]{2,1,0:T(8,128)}', space=vmem, size = 0x8000, scoped, tag = 'scratch operand']
  %s0 = inlined_call_operand.vmem [shape: bf16[4,16,32], index: 0, kind: input, shape index: {}]
  %s1 = inlined_call_operand.vmem [shape: bf16[4,16,32], index: 1, kind: input, shape index: {}]
  %s2 = inlined_call_operand.vmem [shape: bf16[4,16,32], index: 2, kind: input, shape index: {}]
  %s3 = inlined_call_operand.vmem [shape: bf16[16,128], index: 3, kind: output, shape index: {}]
  %s4 = sld [smem:[#allocation0]]
  $region30: #{transformer_forward.16} parent=0
    _
  %s6 = ssub.s32 1, %s4
  %s7 = scalar_select 0, %s6, %s4
  // Predicated region
  $region2: #{transformer_forward.16} parent=0 // pred_check
    _
  $region3: #{transformer_forward.16} parent=0 // pred_check_branch
    %9 = sbr.rel (0) target = $region5
  $region4: #{transformer_forward.16} parent=0 // pred_region
    _
  $region5: #{transformer_forward.16} parent=0 // pred_fallthru
    _
  // Predicated region
  $region6: #{transformer_forward.16} parent=0 // pred_check
    _
  $region7: #{transformer_forward.16} parent=0 // pred_check_branch
    %11 = sbr.rel (0) target = $region9
  $region8: #{transformer_forward.16} parent=0 // pred_region
    _
  $region9: #{transformer_forward.16} parent=0 // pred_fallthru
    _
  // Predicated region
  $region10: #{transformer_forward.16} parent=0 // pred_check
    _
  $region11: #{transformer_forward.16} parent=0 // pred_check_branch
    %13 = sbr.rel (0) target = $region13
  $region12: #{transformer_forward.16} parent=0 // pred_region
    _
  $region13: #{transformer_forward.16} parent=0 // pred_fallthru
    _
  %p15 = scmp.eq.s32.totalorder 0, 0
  // Predicated region
  $region14: #{transformer_forward.16} parent=0 // pred_check
    %p16 = pneg %p15
  $region15: #{transformer_forward.16} parent=0 // pred_check_branch
    %18 = sbr.rel (%p16) target = $region17
  $region16: #{transformer_forward.16} parent=0 // pred_region
    %vm19 = vcmask 7168
    %20 = vst.msk [vmem:[#allocation2] sm:$0xff] %vm19, -inf
    %21 = vst.msk [vmem:[#allocation2 + $0x8] sm:$0xff] %vm19, -inf
    %22 = vst.msk [vmem:[#allocation2 + $0x10] sm:$0xff] %vm19, -inf
    %23 = vst.msk [vmem:[#allocation2 + $0x18] sm:$0xff] %vm19, -inf
    %24 = vst.msk [vmem:[#allocation2 + $0x20] sm:$0xff] %vm19, -inf
    %25 = vst.msk [vmem:[#allocation2 + $0x28] sm:$0xff] %vm19, -inf
    %26 = vst.msk [vmem:[#allocation2 + $0x30] sm:$0xff] %vm19, -inf
    %27 = vst.msk [vmem:[#allocation2 + $0x38] sm:$0xff] %vm19, -inf
    %28 = vst.msk [vmem:[#allocation3] sm:$0xff] %vm19, 0.0
    %29 = vst.msk [vmem:[#allocation3 + $0x8] sm:$0xff] %vm19, 0.0
    %30 = vst.msk [vmem:[#allocation3 + $0x10] sm:$0xff] %vm19, 0.0
    %31 = vst.msk [vmem:[#allocation3 + $0x18] sm:$0xff] %vm19, 0.0
    %32 = vst.msk [vmem:[#allocation3 + $0x20] sm:$0xff] %vm19, 0.0
    %33 = vst.msk [vmem:[#allocation3 + $0x28] sm:$0xff] %vm19, 0.0
    %34 = vst.msk [vmem:[#allocation3 + $0x30] sm:$0xff] %vm19, 0.0
    %35 = vst.msk [vmem:[#allocation3 + $0x38] sm:$0xff] %vm19, 0.0
    %vm36 = vcmask 261120
    %37 = vst.msk [vmem:[#allocation4] sm:$0xff] %vm36, 0.0
    %38 = vst.msk [vmem:[#allocation4 + $0x8] sm:$0xff] %vm36, 0.0
    %39 = vst.msk [vmem:[#allocation4 + $0x10] sm:$0xff] %vm36, 0.0
    %40 = vst.msk [vmem:[#allocation4 + $0x18] sm:$0xff] %vm36, 0.0
    %41 = vst.msk [vmem:[#allocation4 + $0x20] sm:$0xff] %vm36, 0.0
    %42 = vst.msk [vmem:[#allocation4 + $0x28] sm:$0xff] %vm36, 0.0
    %43 = vst.msk [vmem:[#allocation4 + $0x30] sm:$0xff] %vm36, 0.0
    %44 = vst.msk [vmem:[#allocation4 + $0x38] sm:$0xff] %vm36, 0.0
  $region17: #{transformer_forward.16} parent=0 // pred_fallthru
    _
  %v45 = vld [vmem:[%s0] sm:$0xf]
  %v46 = vld [vmem:[%s0 + $0x4] sm:$0xf]
  %v47 = vld [vmem:[%s0 + $0x8] sm:$0xf]
  %v48 = vld [vmem:[%s0 + $0xc] sm:$0xf]
  %v49 = vld [vmem:[%s0 + $0x10] sm:$0xf]
  %v50 = vld [vmem:[%s0 + $0x14] sm:$0xf]
  %v51 = vld [vmem:[%s0 + $0x18] sm:$0xf]
  %v52 = vld [vmem:[%s0 + $0x1c] sm:$0xf]
  %v53 = vld [vmem:[%s1] sm:$0xf]
  %v54 = vld [vmem:[%s1 + $0x4] sm:$0xf]
  %v55 = vld [vmem:[%s1 + $0x8] sm:$0xf]
  %v56 = vld [vmem:[%s1 + $0xc] sm:$0xf]
  %v57 = vld [vmem:[%s1 + $0x10] sm:$0xf]
  %v58 = vld [vmem:[%s1 + $0x14] sm:$0xf]
  %v59 = vld [vmem:[%s1 + $0x18] sm:$0xf]
  %v60 = vld [vmem:[%s1 + $0x1c] sm:$0xf]
  %v63 = vunpack.c.l.b16 %v45
  %v64 = vunpack.c.l.b16 %v46
  %v65 = vpack.c.b16 %v64, %v63
  %v68 = vunpack.c.l.b16 %v53
  %v69 = vunpack.c.l.b16 %v54
  %v70 = vpack.c.b16 %v69, %v68
  %vm71 = vcmask 261120
  %v73 = vsel %vm71, %v65, 0
  %v76 = vsel %vm71, %v70, 0
  %78 = vmatpush.bf16.xpose.msra.mxu0 0
  %79 = vmatpush.bf16.xpose.msra.mxu0 0
  %80 = vmatpush.bf16.xpose.msra.mxu0 0
  %81 = vmatpush.bf16.xpose.msra.mxu0 0
  %82 = vmatpush.bf16.xpose.msra.mxu0 0
  %83 = vmatpush.bf16.xpose.msra.mxu0 0
  %84 = vmatpush.bf16.xpose.msra.mxu0 0
  %85 = vmatpush.bf16.xpose.msra.mxu0 %v76
  %86 = vmatmul.bf16.gmra.mxu0 %v73
  %v87 = vpop.f32.mrf.mxu0
  %v88 = vadd.f32 0.0, %v87
  %v89 = vpop.f32.mrf.mxu0
  %v90 = vadd.f32 0.0, %v89
  %91 = vdwg.mxu0
  %v94 = vunpack.c.l.b16 %v47
  %v95 = vunpack.c.l.b16 %v48
  %v96 = vpack.c.b16 %v95, %v94
  %v99 = vunpack.c.l.b16 %v55
  %v100 = vunpack.c.l.b16 %v56
  %v101 = vpack.c.b16 %v100, %v99
  %v103 = vsel %vm71, %v96, 0
  %v106 = vsel %vm71, %v101, 0
  %108 = vmatpush.bf16.xpose.msra.mxu0 0
  %109 = vmatpush.bf16.xpose.msra.mxu0 0
  %110 = vmatpush.bf16.xpose.msra.mxu0 0
  %111 = vmatpush.bf16.xpose.msra.mxu0 0
  %112 = vmatpush.bf16.xpose.msra.mxu0 0
  %113 = vmatpush.bf16.xpose.msra.mxu0 0
  %114 = vmatpush.bf16.xpose.msra.mxu0 0
  %115 = vmatpush.bf16.xpose.msra.mxu0 %v106
  %116 = vmatmul.bf16.gmra.mxu0 %v103
  %v117 = vpop.f32.mrf.mxu0
  %v118 = vadd.f32 0.0, %v117
  %v119 = vpop.f32.mrf.mxu0
  %v120 = vadd.f32 0.0, %v119
  %121 = vdwg.mxu0
  %v124 = vunpack.c.l.b16 %v49
  %v125 = vunpack.c.l.b16 %v50
  %v126 = vpack.c.b16 %v125, %v124
  %v129 = vunpack.c.l.b16 %v57
  %v130 = vunpack.c.l.b16 %v58
  %v131 = vpack.c.b16 %v130, %v129
  %v133 = vsel %vm71, %v126, 0
  %v136 = vsel %vm71, %v131, 0
  %138 = vmatpush.bf16.xpose.msra.mxu0 0
  %139 = vmatpush.bf16.xpose.msra.mxu0 0
  %140 = vmatpush.bf16.xpose.msra.mxu0 0
  %141 = vmatpush.bf16.xpose.msra.mxu0 0
  %142 = vmatpush.bf16.xpose.msra.mxu0 0
  %143 = vmatpush.bf16.xpose.msra.mxu0 0
  %144 = vmatpush.bf16.xpose.msra.mxu0 0
  %145 = vmatpush.bf16.xpose.msra.mxu0 %v136
  %146 = vmatmul.bf16.gmra.mxu0 %v133
  %v147 = vpop.f32.mrf.mxu0
  %v148 = vadd.f32 0.0, %v147
  %v149 = vpop.f32.mrf.mxu0
  %v150 = vadd.f32 0.0, %v149
  %151 = vdwg.mxu0
  %v154 = vunpack.c.l.b16 %v51
  %v155 = vunpack.c.l.b16 %v52
  %v156 = vpack.c.b16 %v155, %v154
  %v159 = vunpack.c.l.b16 %v59
  %v160 = vunpack.c.l.b16 %v60
  %v161 = vpack.c.b16 %v160, %v159
  %v163 = vsel %vm71, %v156, 0
  %v166 = vsel %vm71, %v161, 0
  %168 = vmatpush.bf16.xpose.msra.mxu0 0
  %169 = vmatpush.bf16.xpose.msra.mxu0 0
  %170 = vmatpush.bf16.xpose.msra.mxu0 0
  %171 = vmatpush.bf16.xpose.msra.mxu0 0
  %172 = vmatpush.bf16.xpose.msra.mxu0 0
  %173 = vmatpush.bf16.xpose.msra.mxu0 0
  %174 = vmatpush.bf16.xpose.msra.mxu0 0
  %175 = vmatpush.bf16.xpose.msra.mxu0 %v166
  %176 = vmatmul.bf16.gmra.mxu0 %v163
  %v177 = vpop.f32.mrf.mxu0
  %v178 = vadd.f32 0.0, %v177
  %v179 = vpop.f32.mrf.mxu0
  %v180 = vadd.f32 0.0, %v179
  %181 = vdwg.mxu0
  %v182 = vld [vmem:[#allocation2] sm:$0xff]
  %v183 = vld [vmem:[#allocation2 + $0x8] sm:$0xff]
  %v184 = vld [vmem:[#allocation2 + $0x10] sm:$0xff]
  %v185 = vld [vmem:[#allocation2 + $0x18] sm:$0xff]
  %v186 = vld [vmem:[#allocation2 + $0x20] sm:$0xff]
  %v187 = vld [vmem:[#allocation2 + $0x28] sm:$0xff]
  %v188 = vld [vmem:[#allocation2 + $0x30] sm:$0xff]
  %v189 = vld [vmem:[#allocation2 + $0x38] sm:$0xff]
  %vm190 = vcmask 130048
  %v191 = vsel %vm190, %v88, -inf
  %192 = vmax.xlane.f32.xlu0 %v191
  %v193 = vpop.xlane.xlu0 %192
  %v194 = vsel %vm190, %v90, -inf
  %195 = vmax.xlane.f32.xlu0 %v194
  %v196 = vpop.xlane.xlu0 %195
  %v197 = vsel %vm190, %v118, -inf
  %198 = vmax.xlane.f32.xlu0 %v197
  %v199 = vpop.xlane.xlu0 %198
  %v200 = vsel %vm190, %v120, -inf
  %201 = vmax.xlane.f32.xlu0 %v200
  %v202 = vpop.xlane.xlu0 %201
  %v203 = vsel %vm190, %v148, -inf
  %204 = vmax.xlane.f32.xlu0 %v203
  %v205 = vpop.xlane.xlu0 %204
  %v206 = vsel %vm190, %v150, -inf
  %207 = vmax.xlane.f32.xlu0 %v206
  %v208 = vpop.xlane.xlu0 %207
  %v209 = vsel %vm190, %v178, -inf
  %210 = vmax.xlane.f32.xlu0 %v209
  %v211 = vpop.xlane.xlu0 %210
  %v212 = vsel %vm190, %v180, -inf
  %213 = vmax.xlane.f32.xlu0 %v212
  %v214 = vpop.xlane.xlu0 %213
  %v215 = vmax.f32 %v182, %v193
  %v216 = vmax.f32 %v183, %v196
  %v217 = vmax.f32 %v184, %v199
  %v218 = vmax.f32 %v185, %v202
  %v219 = vmax.f32 %v186, %v205
  %v220 = vmax.f32 %v187, %v208
  %v221 = vmax.f32 %v188, %v211
  %v222 = vmax.f32 %v189, %v214
  %v223 = vsub.f32 %v182, %v215
  %v224 = vsub.f32 %v183, %v216
  %v225 = vsub.f32 %v184, %v217
  %v226 = vsub.f32 %v185, %v218
  %v227 = vsub.f32 %v186, %v219
  %v228 = vsub.f32 %v187, %v220
  %v229 = vsub.f32 %v188, %v221
  %v230 = vsub.f32 %v189, %v222
  %v231 = vmul.f32 %v223, 1.442695
  %v232 = vpow.pop %v231
  %v233 = vmul.f32 %v224, 1.442695
  %v234 = vpow.pop %v233
  %v235 = vmul.f32 %v225, 1.442695
  %v236 = vpow.pop %v235
  %v237 = vmul.f32 %v226, 1.442695
  %v238 = vpow.pop %v237
  %v239 = vmul.f32 %v227, 1.442695
  %v240 = vpow.pop %v239
  %v241 = vmul.f32 %v228, 1.442695
  %v242 = vpow.pop %v241
  %v243 = vmul.f32 %v229, 1.442695
  %v244 = vpow.pop %v243
  %v245 = vmul.f32 %v230, 1.442695
  %v246 = vpow.pop %v245
  %248 = vset.pattern.permute.xlu0 0
  %249 = vperm.xlu0 %248, %v215
  %v250 = vpop.permute.xlu0 %249
  %253 = vset.pattern.permute.xlu0 0
  %254 = vperm.xlu0 %253, %v216
  %v255 = vpop.permute.xlu0 %254
  %258 = vset.pattern.permute.xlu0 0
  %259 = vperm.xlu0 %258, %v217
  %v260 = vpop.permute.xlu0 %259
  %263 = vset.pattern.permute.xlu0 0
  %264 = vperm.xlu0 %263, %v218
  %v265 = vpop.permute.xlu0 %264
  %268 = vset.pattern.permute.xlu0 0
  %269 = vperm.xlu0 %268, %v219
  %v270 = vpop.permute.xlu0 %269
  %273 = vset.pattern.permute.xlu0 0
  %274 = vperm.xlu0 %273, %v220
  %v275 = vpop.permute.xlu0 %274
  %278 = vset.pattern.permute.xlu0 0
  %279 = vperm.xlu0 %278, %v221
  %v280 = vpop.permute.xlu0 %279
  %283 = vset.pattern.permute.xlu0 0
  %284 = vperm.xlu0 %283, %v222
  %v285 = vpop.permute.xlu0 %284
  %v287 = vsub.f32 %v88, %v250
  %v288 = vsub.f32 %v90, %v255
  %v289 = vsub.f32 %v118, %v260
  %v290 = vsub.f32 %v120, %v265
  %v291 = vsub.f32 %v148, %v270
  %v292 = vsub.f32 %v150, %v275
  %v293 = vsub.f32 %v178, %v280
  %v294 = vsub.f32 %v180, %v285
  %v295 = vmul.f32 %v287, 1.442695
  %v296 = vpow.pop %v295
  %v297 = vmul.f32 %v288, 1.442695
  %v298 = vpow.pop %v297
  %v299 = vmul.f32 %v289, 1.442695
  %v300 = vpow.pop %v299
  %v301 = vmul.f32 %v290, 1.442695
  %v302 = vpow.pop %v301
  %v303 = vmul.f32 %v291, 1.442695
  %v304 = vpow.pop %v303
  %v305 = vmul.f32 %v292, 1.442695
  %v306 = vpow.pop %v305
  %v307 = vmul.f32 %v293, 1.442695
  %v308 = vpow.pop %v307
  %v309 = vmul.f32 %v294, 1.442695
  %v310 = vpow.pop %v309
  %v311 = vld [vmem:[#allocation3] sm:$0xff]
  %v312 = vld [vmem:[#allocation3 + $0x8] sm:$0xff]
  %v313 = vld [vmem:[#allocation3 + $0x10] sm:$0xff]
  %v314 = vld [vmem:[#allocation3 + $0x18] sm:$0xff]
  %v315 = vld [vmem:[#allocation3 + $0x20] sm:$0xff]
  %v316 = vld [vmem:[#allocation3 + $0x28] sm:$0xff]
  %v317 = vld [vmem:[#allocation3 + $0x30] sm:$0xff]
  %v318 = vld [vmem:[#allocation3 + $0x38] sm:$0xff]
  %v319 = vmul.f32 %v232, %v311
  %v320 = vmul.f32 %v234, %v312
  %v321 = vmul.f32 %v236, %v313
  %v322 = vmul.f32 %v238, %v314
  %v323 = vmul.f32 %v240, %v315
  %v324 = vmul.f32 %v242, %v316
  %v325 = vmul.f32 %v244, %v317
  %v326 = vmul.f32 %v246, %v318
  %v327 = vsel %vm190, %v296, 0.0
  %328 = vadd.xlane.f32.xlu0 %v327
  %v329 = vpop.xlane.xlu0 %328
  %v330 = vsel %vm190, %v298, 0.0
  %331 = vadd.xlane.f32.xlu0 %v330
  %v332 = vpop.xlane.xlu0 %331
  %v333 = vsel %vm190, %v300, 0.0
  %334 = vadd.xlane.f32.xlu0 %v333
  %v335 = vpop.xlane.xlu0 %334
  %v336 = vsel %vm190, %v302, 0.0
  %337 = vadd.xlane.f32.xlu0 %v336
  %v338 = vpop.xlane.xlu0 %337
  %v339 = vsel %vm190, %v304, 0.0
  %340 = vadd.xlane.f32.xlu0 %v339
  %v341 = vpop.xlane.xlu0 %340
  %v342 = vsel %vm190, %v306, 0.0
  %343 = vadd.xlane.f32.xlu0 %v342
  %v344 = vpop.xlane.xlu0 %343
  %v345 = vsel %vm190, %v308, 0.0
  %346 = vadd.xlane.f32.xlu0 %v345
  %v347 = vpop.xlane.xlu0 %346
  %v348 = vsel %vm190, %v310, 0.0
  %349 = vadd.xlane.f32.xlu0 %v348
  %v350 = vpop.xlane.xlu0 %349
  %v351 = vadd.f32 %v319, %v329
  %v352 = vadd.f32 %v320, %v332
  %v353 = vadd.f32 %v321, %v335
  %v354 = vadd.f32 %v322, %v338
  %v355 = vadd.f32 %v323, %v341
  %v356 = vadd.f32 %v324, %v344
  %v357 = vadd.f32 %v325, %v347
  %v358 = vadd.f32 %v326, %v350
  %vm359 = vcmask 7168
  %360 = vst.msk [vmem:[#allocation3] sm:$0xff] %vm359, %v351
  %361 = vst.msk [vmem:[#allocation3 + $0x8] sm:$0xff] %vm359, %v352
  %362 = vst.msk [vmem:[#allocation3 + $0x10] sm:$0xff] %vm359, %v353
  %363 = vst.msk [vmem:[#allocation3 + $0x18] sm:$0xff] %vm359, %v354
  %364 = vst.msk [vmem:[#allocation3 + $0x20] sm:$0xff] %vm359, %v355
  %365 = vst.msk [vmem:[#allocation3 + $0x28] sm:$0xff] %vm359, %v356
  %366 = vst.msk [vmem:[#allocation3 + $0x30] sm:$0xff] %vm359, %v357
  %367 = vst.msk [vmem:[#allocation3 + $0x38] sm:$0xff] %vm359, %v358
  %v368 = vld [vmem:[#allocation4] sm:$0xff]
  %v369 = vld [vmem:[#allocation4 + $0x8] sm:$0xff]
  %v370 = vld [vmem:[#allocation4 + $0x10] sm:$0xff]
  %v371 = vld [vmem:[#allocation4 + $0x18] sm:$0xff]
  %v372 = vld [vmem:[#allocation4 + $0x20] sm:$0xff]
  %v373 = vld [vmem:[#allocation4 + $0x28] sm:$0xff]
  %v374 = vld [vmem:[#allocation4 + $0x30] sm:$0xff]
  %v375 = vld [vmem:[#allocation4 + $0x38] sm:$0xff]
  %377 = vset.pattern.permute.xlu0 0
  %378 = vperm.xlu0 %377, %v232
  %v379 = vpop.permute.xlu0 %378
  %382 = vset.pattern.permute.xlu0 0
  %383 = vperm.xlu0 %382, %v234
  %v384 = vpop.permute.xlu0 %383
  %387 = vset.pattern.permute.xlu0 0
  %388 = vperm.xlu0 %387, %v236
  %v389 = vpop.permute.xlu0 %388
  %392 = vset.pattern.permute.xlu0 0
  %393 = vperm.xlu0 %392, %v238
  %v394 = vpop.permute.xlu0 %393
  %397 = vset.pattern.permute.xlu0 0
  %398 = vperm.xlu0 %397, %v240
  %v399 = vpop.permute.xlu0 %398
  %402 = vset.pattern.permute.xlu0 0
  %403 = vperm.xlu0 %402, %v242
  %v404 = vpop.permute.xlu0 %403
  %407 = vset.pattern.permute.xlu0 0
  %408 = vperm.xlu0 %407, %v244
  %v409 = vpop.permute.xlu0 %408
  %412 = vset.pattern.permute.xlu0 0
  %413 = vperm.xlu0 %412, %v246
  %v414 = vpop.permute.xlu0 %413
  %v416 = vmul.f32 %v379, %v368
  %v417 = vmul.f32 %v384, %v369
  %v418 = vmul.f32 %v389, %v370
  %v419 = vmul.f32 %v394, %v371
  %v420 = vmul.f32 %v399, %v372
  %v421 = vmul.f32 %v404, %v373
  %v422 = vmul.f32 %v409, %v374
  %v423 = vmul.f32 %v414, %v375
  %v424 = vpack.c.bf16 %v296, %v296
  %v425 = vpack.c.bf16 %v298, %v298
  %v426 = vpack.c.bf16 %v300, %v300
  %v427 = vpack.c.bf16 %v302, %v302
  %v428 = vpack.c.bf16 %v304, %v304
  %v429 = vpack.c.bf16 %v306, %v306
  %v430 = vpack.c.bf16 %v308, %v308
  %v431 = vpack.c.bf16 %v310, %v310
  %v432 = vld [vmem:[%s2] sm:$0xf]
  %v433 = vld [vmem:[%s2 + $0x4] sm:$0xf]
  %v434 = vld [vmem:[%s2 + $0x8] sm:$0xf]
  %v435 = vld [vmem:[%s2 + $0xc] sm:$0xf]
  %v436 = vld [vmem:[%s2 + $0x10] sm:$0xf]
  %v437 = vld [vmem:[%s2 + $0x14] sm:$0xf]
  %v438 = vld [vmem:[%s2 + $0x18] sm:$0xf]
  %v439 = vld [vmem:[%s2 + $0x1c] sm:$0xf]
  %v442 = vunpack.c.l.b16 %v424
  %v443 = vunpack.c.l.b16 %v425
  %v444 = vpack.c.b16 %v443, %v442
  %v447 = vunpack.c.l.b16 %v432
  %v448 = vunpack.c.l.b16 %v433
  %v449 = vpack.c.b16 %v448, %v447
  %v452 = vsel %vm190, %v444, 0
  %454 = vmatpush.bf16.msra.mxu0 0
  %455 = vmatpush.bf16.msra.mxu0 0
  %456 = vmatpush.bf16.msra.mxu0 0
  %457 = vmatpush.bf16.msra.mxu0 0
  %458 = vmatpush.bf16.msra.mxu0 0
  %459 = vmatpush.bf16.msra.mxu0 0
  %460 = vmatpush.bf16.msra.mxu0 0
  %461 = vmatpush.bf16.msra.mxu0 %v449
  %462 = vmatmul.bf16.gmra.mxu0 %v452
  %v463 = vpop.f32.mrf.mxu0
  %v464 = vadd.f32 0.0, %v463
  %v465 = vpop.f32.mrf.mxu0
  %v466 = vadd.f32 0.0, %v465
  %467 = vdwg.mxu0
  %v470 = vunpack.c.l.b16 %v426
  %v471 = vunpack.c.l.b16 %v427
  %v472 = vpack.c.b16 %v471, %v470
  %v475 = vunpack.c.l.b16 %v434
  %v476 = vunpack.c.l.b16 %v435
  %v477 = vpack.c.b16 %v476, %v475
  %v480 = vsel %vm190, %v472, 0
  %482 = vmatpush.bf16.msra.mxu0 0
  %483 = vmatpush.bf16.msra.mxu0 0
  %484 = vmatpush.bf16.msra.mxu0 0
  %485 = vmatpush.bf16.msra.mxu0 0
  %486 = vmatpush.bf16.msra.mxu0 0
  %487 = vmatpush.bf16.msra.mxu0 0
  %488 = vmatpush.bf16.msra.mxu0 0
  %489 = vmatpush.bf16.msra.mxu0 %v477
  %490 = vmatmul.bf16.gmra.mxu0 %v480
  %v491 = vpop.f32.mrf.mxu0
  %v492 = vadd.f32 0.0, %v491
  %v493 = vpop.f32.mrf.mxu0
  %v494 = vadd.f32 0.0, %v493
  %495 = vdwg.mxu0
  %v498 = vunpack.c.l.b16 %v428
  %v499 = vunpack.c.l.b16 %v429
  %v500 = vpack.c.b16 %v499, %v498
  %v503 = vunpack.c.l.b16 %v436
  %v504 = vunpack.c.l.b16 %v437
  %v505 = vpack.c.b16 %v504, %v503
  %v508 = vsel %vm190, %v500, 0
  %510 = vmatpush.bf16.msra.mxu0 0
  %511 = vmatpush.bf16.msra.mxu0 0
  %512 = vmatpush.bf16.msra.mxu0 0
  %513 = vmatpush.bf16.msra.mxu0 0
  %514 = vmatpush.bf16.msra.mxu0 0
  %515 = vmatpush.bf16.msra.mxu0 0
  %516 = vmatpush.bf16.msra.mxu0 0
  %517 = vmatpush.bf16.msra.mxu0 %v505
  %518 = vmatmul.bf16.gmra.mxu0 %v508
  %v519 = vpop.f32.mrf.mxu0
  %v520 = vadd.f32 0.0, %v519
  %v521 = vpop.f32.mrf.mxu0
  %v522 = vadd.f32 0.0, %v521
  %523 = vdwg.mxu0
  %v526 = vunpack.c.l.b16 %v430
  %v527 = vunpack.c.l.b16 %v431
  %v528 = vpack.c.b16 %v527, %v526
  %v531 = vunpack.c.l.b16 %v438
  %v532 = vunpack.c.l.b16 %v439
  %v533 = vpack.c.b16 %v532, %v531
  %v536 = vsel %vm190, %v528, 0
  %538 = vmatpush.bf16.msra.mxu0 0
  %539 = vmatpush.bf16.msra.mxu0 0
  %540 = vmatpush.bf16.msra.mxu0 0
  %541 = vmatpush.bf16.msra.mxu0 0
  %542 = vmatpush.bf16.msra.mxu0 0
  %543 = vmatpush.bf16.msra.mxu0 0
  %544 = vmatpush.bf16.msra.mxu0 0
  %545 = vmatpush.bf16.msra.mxu0 %v533
  %546 = vmatmul.bf16.gmra.mxu0 %v536
  %v547 = vpop.f32.mrf.mxu0
  %v548 = vadd.f32 0.0, %v547
  %v549 = vpop.f32.mrf.mxu0
  %v550 = vadd.f32 0.0, %v549
  %551 = vdwg.mxu0
  %v552 = vadd.f32 %v416, %v464
  %v553 = vadd.f32 %v417, %v466
  %v554 = vadd.f32 %v418, %v492
  %v555 = vadd.f32 %v419, %v494
  %v556 = vadd.f32 %v420, %v520
  %v557 = vadd.f32 %v421, %v522
  %v558 = vadd.f32 %v422, %v548
  %v559 = vadd.f32 %v423, %v550
  %560 = vst.msk [vmem:[#allocation4] sm:$0xff] %vm71, %v552
  %561 = vst.msk [vmem:[#allocation4 + $0x8] sm:$0xff] %vm71, %v553
  %562 = vst.msk [vmem:[#allocation4 + $0x10] sm:$0xff] %vm71, %v554
  %563 = vst.msk [vmem:[#allocation4 + $0x18] sm:$0xff] %vm71, %v555
  %564 = vst.msk [vmem:[#allocation4 + $0x20] sm:$0xff] %vm71, %v556
  %565 = vst.msk [vmem:[#allocation4 + $0x28] sm:$0xff] %vm71, %v557
  %566 = vst.msk [vmem:[#allocation4 + $0x30] sm:$0xff] %vm71, %v558
  %567 = vst.msk [vmem:[#allocation4 + $0x38] sm:$0xff] %vm71, %v559
  %568 = vst.msk [vmem:[#allocation2] sm:$0xff] %vm359, %v215
  %569 = vst.msk [vmem:[#allocation2 + $0x8] sm:$0xff] %vm359, %v216
  %570 = vst.msk [vmem:[#allocation2 + $0x10] sm:$0xff] %vm359, %v217
  %571 = vst.msk [vmem:[#allocation2 + $0x18] sm:$0xff] %vm359, %v218
  %572 = vst.msk [vmem:[#allocation2 + $0x20] sm:$0xff] %vm359, %v219
  %573 = vst.msk [vmem:[#allocation2 + $0x28] sm:$0xff] %vm359, %v220
  %574 = vst.msk [vmem:[#allocation2 + $0x30] sm:$0xff] %vm359, %v221
  %575 = vst.msk [vmem:[#allocation2 + $0x38] sm:$0xff] %vm359, %v222
  // Predicated region
  $region18: #{transformer_forward.16} parent=0 // pred_check
    %p576 = pneg %p15
  $region19: #{transformer_forward.16} parent=0 // pred_check_branch
    %578 = sbr.rel (%p576) target = $region21
  $region20: #{transformer_forward.16} parent=0 // pred_region
    %v579 = vld [vmem:[#allocation3] sm:$0xff]
    %v580 = vld [vmem:[#allocation3 + $0x8] sm:$0xff]
    %v581 = vld [vmem:[#allocation3 + $0x10] sm:$0xff]
    %v582 = vld [vmem:[#allocation3 + $0x18] sm:$0xff]
    %v583 = vld [vmem:[#allocation3 + $0x20] sm:$0xff]
    %v584 = vld [vmem:[#allocation3 + $0x28] sm:$0xff]
    %v585 = vld [vmem:[#allocation3 + $0x30] sm:$0xff]
    %v586 = vld [vmem:[#allocation3 + $0x38] sm:$0xff]
    %v587 = vrcp.pop %v579
    %v588 = vrcp.pop %v580
    %v589 = vrcp.pop %v581
    %v590 = vrcp.pop %v582
    %v591 = vrcp.pop %v583
    %v592 = vrcp.pop %v584
    %v593 = vrcp.pop %v585
    %v594 = vrcp.pop %v586
    %v595 = vld [vmem:[#allocation4] sm:$0xff]
    %v596 = vld [vmem:[#allocation4 + $0x8] sm:$0xff]
    %v597 = vld [vmem:[#allocation4 + $0x10] sm:$0xff]
    %v598 = vld [vmem:[#allocation4 + $0x18] sm:$0xff]
    %v599 = vld [vmem:[#allocation4 + $0x20] sm:$0xff]
    %v600 = vld [vmem:[#allocation4 + $0x28] sm:$0xff]
    %v601 = vld [vmem:[#allocation4 + $0x30] sm:$0xff]
    %v602 = vld [vmem:[#allocation4 + $0x38] sm:$0xff]
    %604 = vset.pattern.permute.xlu0 0
    %605 = vperm.xlu0 %604, %v587
    %v606 = vpop.permute.xlu0 %605
    %609 = vset.pattern.permute.xlu0 0
    %610 = vperm.xlu0 %609, %v588
    %v611 = vpop.permute.xlu0 %610
    %614 = vset.pattern.permute.xlu0 0
    %615 = vperm.xlu0 %614, %v589
    %v616 = vpop.permute.xlu0 %615
    %619 = vset.pattern.permute.xlu0 0
    %620 = vperm.xlu0 %619, %v590
    %v621 = vpop.permute.xlu0 %620
    %624 = vset.pattern.permute.xlu0 0
    %625 = vperm.xlu0 %624, %v591
    %v626 = vpop.permute.xlu0 %625
    %629 = vset.pattern.permute.xlu0 0
    %630 = vperm.xlu0 %629, %v592
    %v631 = vpop.permute.xlu0 %630
    %634 = vset.pattern.permute.xlu0 0
    %635 = vperm.xlu0 %634, %v593
    %v636 = vpop.permute.xlu0 %635
    %639 = vset.pattern.permute.xlu0 0
    %640 = vperm.xlu0 %639, %v594
    %v641 = vpop.permute.xlu0 %640
    %v643 = vmul.f32 %v595, %v606
    %v644 = vmul.f32 %v596, %v611
    %v645 = vmul.f32 %v597, %v616
    %v646 = vmul.f32 %v598, %v621
    %v647 = vmul.f32 %v599, %v626
    %v648 = vmul.f32 %v600, %v631
    %v649 = vmul.f32 %v601, %v636
    %v650 = vmul.f32 %v602, %v641
    %653 = vrot.lane.b32.xlu0 %v645, 32
    %v654 = vpop.permute.xlu0 %653
    %655 = vrot.lane.b32.xlu0 %v646, 32
    %v656 = vpop.permute.xlu0 %655
    %661 = vrot.lane.b32.xlu0 %v647, 64
    %v662 = vpop.permute.xlu0 %661
    %663 = vrot.lane.b32.xlu0 %v648, 64
    %v664 = vpop.permute.xlu0 %663
    %669 = vrot.lane.b32.xlu0 %v649, 96
    %v670 = vpop.permute.xlu0 %669
    %671 = vrot.lane.b32.xlu0 %v650, 96
    %v672 = vpop.permute.xlu0 %671
    %v675 = vsel %vm71, %v643, %v654
    %v676 = vsel %vm71, %v644, %v656
    %vm677 = vcmask 523264
    %v678 = vsel %vm677, %v675, %v662
    %v679 = vsel %vm677, %v676, %v664
    %vm680 = vcmask 785408
    %v681 = vsel %vm680, %v678, %v670
    %v682 = vsel %vm680, %v679, %v672
    %v683 = vpack.c.bf16 %v681, %v681
    %v684 = vpack.c.bf16 %v682, %v682
    %685 = vst [vmem:[%s3] sm:$0xf] %v683
    %686 = vst [vmem:[%s3 + $0x4] sm:$0xf] %v684
  $region21: #{transformer_forward.16} parent=0 // pred_fallthru
    _
  // Predicated region
  $region22: #{transformer_forward.16} parent=0 // pred_check
    _
  $region23: #{transformer_forward.16} parent=0 // pred_check_branch
    %688 = sbr.rel (0) target = $region25
  $region24: #{transformer_forward.16} parent=0 // pred_region
    _
  $region25: #{transformer_forward.16} parent=0 // pred_fallthru
    _
  // Predicated region
  $region26: #{transformer_forward.16} parent=0 // pred_check
    _
  $region27: #{transformer_forward.16} parent=0 // pred_check_branch
    %690 = sbr.rel (0) target = $region29
  $region28: #{transformer_forward.16} parent=0 // pred_region
    _
  $region29: #{transformer_forward.16} parent=0 // pred_fallthru
    _

// kernel: transformer_forward.23
$region0: #{transformer_forward.23}
  #allocation0 [shape = 'u32[]', space=smem, size = 0x4, offset = 0x4, fixed_abs, tag = 'smem constant byte address 0x4 - core index']
  #allocation1 [shape = 'u32[72,128]{1,0:T(1,128)}', space=vmem, size = 0x9000, scoped, tag = 'internal scratch']
  %s0 = inlined_call_operand.vmem [shape: bf16[8,128], index: 0, kind: input, shape index: {}]
  %s1 = inlined_call_operand.vmem [shape: bf16[8,128], index: 1, kind: input, shape index: {}]
  %s2 = inlined_call_operand.vmem [shape: f32[1,128], index: 2, kind: input, shape index: {}]
  %s3 = inlined_call_operand.vmem [shape: f32[1,128], index: 3, kind: input, shape index: {}]
  %s4 = inlined_call_operand.vmem [shape: bf16[8,128], index: 4, kind: output, shape index: {}]
  %s5 = sld [smem:[#allocation0]]
  $region26: #{transformer_forward.23} parent=0
    _
  %s7 = ssub.s32 1, %s5
  %s8 = scalar_select 0, %s7, %s5
  // Predicated region
  $region2: #{transformer_forward.23} parent=0 // pred_check
    _
  $region3: #{transformer_forward.23} parent=0 // pred_check_branch
    %10 = sbr.rel (0) target = $region5
  $region4: #{transformer_forward.23} parent=0 // pred_region
    _
  $region5: #{transformer_forward.23} parent=0 // pred_fallthru
    _
  // Predicated region
  $region6: #{transformer_forward.23} parent=0 // pred_check
    _
  $region7: #{transformer_forward.23} parent=0 // pred_check_branch
    %12 = sbr.rel (0) target = $region9
  $region8: #{transformer_forward.23} parent=0 // pred_region
    _
  $region9: #{transformer_forward.23} parent=0 // pred_fallthru
    _
  // Predicated region
  $region10: #{transformer_forward.23} parent=0 // pred_check
    _
  $region11: #{transformer_forward.23} parent=0 // pred_check_branch
    %14 = sbr.rel (0) target = $region13
  $region12: #{transformer_forward.23} parent=0 // pred_region
    _
  $region13: #{transformer_forward.23} parent=0 // pred_fallthru
    _
  // Predicated region
  $region14: #{transformer_forward.23} parent=0 // pred_check
    _
  $region15: #{transformer_forward.23} parent=0 // pred_check_branch
    %16 = sbr.rel (0) target = $region17
  $region16: #{transformer_forward.23} parent=0 // pred_region
    _
  $region17: #{transformer_forward.23} parent=0 // pred_fallthru
    _
  %v17 = vld [vmem:[%s0] sm:$0xf]
  %v18 = vunpack.c.l.bf16 %v17
  %v19 = vld [vmem:[%s1] sm:$0xf]
  %v20 = vunpack.c.l.bf16 %v19
  %v21 = vadd.f32 %v18, %v20
  %22 = vadd.xlane.f32.xlu0 %v21
  %v23 = vpop.xlane.xlu0 %22
  %v24 = vrcp.pop 128.0
  %v25 = vmul.f32 128.0, %v24
  %v26 = vsub.f32 1.0, %v25
  %v27 = vmul.f32 %v24, %v26
  %v28 = vadd.f32 %v24, %v27
  %vm29 = vweird.f32 %v24
  %v30 = vsel %vm29, %v24, %v28
  %v31 = vmul.f32 %v23, %v30
  %v32 = vsub.f32 %v21, %v31
  %v33 = vmul.f32 %v32, %v32
  %34 = vadd.xlane.f32.xlu0 %v33
  %v35 = vpop.xlane.xlu0 %34
  %v36 = vmul.f32 %v35, %v30
  %v37 = vadd.f32 %v36, 1e-05
  %v38 = vrsqrt.pop %v37
  %v39 = vmul.f32 %v38, %v37
  %v40 = vmul.f32 %v39, %v38
  %v41 = vmul.f32 0.5, %v40
  %v42 = vsub.f32 1.5, %v41
  %v43 = vmul.f32 %v38, %v42
  %vm44 = vweird.f32 %v37
  %vm45 = vweird.f32 %v38
  %vm46 = vmor %vm44, %vm45
  %v47 = vsel %vm46, %v38, %v43
  %v48 = vmul.f32 %v32, %v47
  %v49 = vld [vmem:[%s2] sm:$0x1]
  %v51 = vperm.slane %v49, 0
  %v53 = vmul.f32 %v48, %v51
  %v54 = vld [vmem:[%s3] sm:$0x1]
  %v56 = vperm.slane %v54, 0
  %v58 = vadd.f32 %v53, %v56
  %v59 = vpack.c.bf16 %v58, %v58
  %60 = vst [vmem:[%s4] sm:$0xf] %v59
  // Predicated region
  $region18: #{transformer_forward.23} parent=0 // pred_check
    _
  $region19: #{transformer_forward.23} parent=0 // pred_check_branch
    %62 = sbr.rel (0) target = $region21
  $region20: #{transformer_forward.23} parent=0 // pred_region
    _
  $region21: #{transformer_forward.23} parent=0 // pred_fallthru
    _
  // Predicated region
  $region22: #{transformer_forward.23} parent=0 // pred_check
    _
  $region23: #{transformer_forward.23} parent=0 // pred_check_branch
    %64 = sbr.rel (0) target = $region25
  $region24: #{transformer_forward.23} parent=0 // pred_region
    _
  $region25: #{transformer_forward.23} parent=0 // pred_fallthru
    _

// kernel: transformer_forward.22
$region0: #{transformer_forward.22}
  #allocation0 [shape = 'u32[]', space=smem, size = 0x4, offset = 0x4, fixed_abs, tag = 'smem constant byte address 0x4 - core index']
  #allocation1 [shape = 'u32[72,128]{1,0:T(1,128)}', space=vmem, size = 0x9000, scoped, tag = 'internal scratch']
  #allocation2 [shape = 'f32[4,8,1]{2,1,0:T(8,128)}', space=vmem, size = 0x4000, scoped, tag = 'scratch operand']
  #allocation3 [shape = 'f32[4,8,1]{2,1,0:T(8,128)}', space=vmem, size = 0x4000, scoped, tag = 'scratch operand']
  #allocation4 [shape = 'f32[4,8,32]{2,1,0:T(8,128)}', space=vmem, size = 0x4000, scoped, tag = 'scratch operand']
  %s0 = inlined_call_operand.vmem [shape: bf16[4,8,32], index: 0, kind: input, shape index: {}]
  %s1 = inlined_call_operand.vmem [shape: bf16[4,8,32], index: 1, kind: input, shape index: {}]
  %s2 = inlined_call_operand.vmem [shape: bf16[4,8,32], index: 2, kind: input, shape index: {}]
  %s3 = inlined_call_operand.vmem [shape: bf16[8,128], index: 3, kind: output, shape index: {}]
  %s4 = sld [smem:[#allocation0]]
  $region34: #{transformer_forward.22} parent=0
    _
  %s6 = ssub.s32 1, %s4
  %s7 = scalar_select 0, %s6, %s4
  // Predicated region
  $region2: #{transformer_forward.22} parent=0 // pred_check
    _
  $region3: #{transformer_forward.22} parent=0 // pred_check_branch
    %9 = sbr.rel (0) target = $region5
  $region4: #{transformer_forward.22} parent=0 // pred_region
    _
  $region5: #{transformer_forward.22} parent=0 // pred_fallthru
    _
  // Predicated region
  $region6: #{transformer_forward.22} parent=0 // pred_check
    _
  $region7: #{transformer_forward.22} parent=0 // pred_check_branch
    %11 = sbr.rel (0) target = $region9
  $region8: #{transformer_forward.22} parent=0 // pred_region
    _
  $region9: #{transformer_forward.22} parent=0 // pred_fallthru
    _
  // Predicated region
  $region10: #{transformer_forward.22} parent=0 // pred_check
    _
  $region11: #{transformer_forward.22} parent=0 // pred_check_branch
    %13 = sbr.rel (0) target = $region13
  $region12: #{transformer_forward.22} parent=0 // pred_region
    _
  $region13: #{transformer_forward.22} parent=0 // pred_fallthru
    _
  %p15 = scmp.eq.s32.totalorder 0, 0
  // Predicated region
  $region14: #{transformer_forward.22} parent=0 // pred_check
    %p16 = pneg %p15
  $region15: #{transformer_forward.22} parent=0 // pred_check_branch
    %18 = sbr.rel (%p16) target = $region17
  $region16: #{transformer_forward.22} parent=0 // pred_region
    %vm19 = vcmask 7168
    %20 = vst.msk [vmem:[#allocation2] sm:$0xff] %vm19, -inf
    %21 = vst.msk [vmem:[#allocation2 + $0x8] sm:$0xff] %vm19, -inf
    %22 = vst.msk [vmem:[#allocation2 + $0x10] sm:$0xff] %vm19, -inf
    %23 = vst.msk [vmem:[#allocation2 + $0x18] sm:$0xff] %vm19, -inf
    %24 = vst.msk [vmem:[#allocation3] sm:$0xff] %vm19, 0.0
    %25 = vst.msk [vmem:[#allocation3 + $0x8] sm:$0xff] %vm19, 0.0
    %26 = vst.msk [vmem:[#allocation3 + $0x10] sm:$0xff] %vm19, 0.0
    %27 = vst.msk [vmem:[#allocation3 + $0x18] sm:$0xff] %vm19, 0.0
    %vm28 = vcmask 261120
    %29 = vst.msk [vmem:[#allocation4] sm:$0xff] %vm28, 0.0
    %30 = vst.msk [vmem:[#allocation4 + $0x8] sm:$0xff] %vm28, 0.0
    %31 = vst.msk [vmem:[#allocation4 + $0x10] sm:$0xff] %vm28, 0.0
    %32 = vst.msk [vmem:[#allocation4 + $0x18] sm:$0xff] %vm28, 0.0
  $region17: #{transformer_forward.22} parent=0 // pred_fallthru
    _
  %s33 = smul.u32 0, 8
  %s34 = smul.u32 0, 8
  %s35 = sadd.s32 %s34, 7
  %p36 = scmp.le.s32.totalorder %s33, %s35
  // Predicated region
  $region18: #{transformer_forward.22} parent=0 // pred_check
    %p37 = pneg %p36
  $region19: #{transformer_forward.22} parent=0 // pred_check_branch
    %39 = sbr.rel (%p37) target = $region21
  $region20: #{transformer_forward.22} parent=0 // pred_region
    %v40 = vld [vmem:[%s0] sm:$0xf]
    %v41 = vld [vmem:[%s0 + $0x4] sm:$0xf]
    %v42 = vld [vmem:[%s0 + $0x8] sm:$0xf]
    %v43 = vld [vmem:[%s0 + $0xc] sm:$0xf]
    %v44 = vld [vmem:[%s1] sm:$0xf]
    %v45 = vld [vmem:[%s1 + $0x4] sm:$0xf]
    %v46 = vld [vmem:[%s1 + $0x8] sm:$0xf]
    %v47 = vld [vmem:[%s1 + $0xc] sm:$0xf]
    %vm48 = vcmask 261120
    %v50 = vsel %vm48, %v40, 0
    %v53 = vsel %vm48, %v44, 0
    %55 = vmatpush.bf16.xpose.msra.mxu0 0
    %56 = vmatpush.bf16.xpose.msra.mxu0 0
    %57 = vmatpush.bf16.xpose.msra.mxu0 0
    %58 = vmatpush.bf16.xpose.msra.mxu0 0
    %59 = vmatpush.bf16.xpose.msra.mxu0 0
    %60 = vmatpush.bf16.xpose.msra.mxu0 0
    %61 = vmatpush.bf16.xpose.msra.mxu0 0
    %62 = vmatpush.bf16.xpose.msra.mxu0 %v53
    %63 = vmatmul.bf16.gmra.mxu0 %v50
    %v64 = vpop.f32.mrf.mxu0
    %v65 = vadd.f32 0.0, %v64
    %v66 = vpop.f32.mrf.mxu0
    %67 = vdwg.mxu0
    %v69 = vsel %vm48, %v41, 0
    %v72 = vsel %vm48, %v45, 0
    %74 = vmatpush.bf16.xpose.msra.mxu0 0
    %75 = vmatpush.bf16.xpose.msra.mxu0 0
    %76 = vmatpush.bf16.xpose.msra.mxu0 0
    %77 = vmatpush.bf16.xpose.msra.mxu0 0
    %78 = vmatpush.bf16.xpose.msra.mxu0 0
    %79 = vmatpush.bf16.xpose.msra.mxu0 0
    %80 = vmatpush.bf16.xpose.msra.mxu0 0
    %81 = vmatpush.bf16.xpose.msra.mxu0 %v72
    %82 = vmatmul.bf16.gmra.mxu0 %v69
    %v83 = vpop.f32.mrf.mxu0
    %v84 = vadd.f32 0.0, %v83
    %v85 = vpop.f32.mrf.mxu0
    %86 = vdwg.mxu0
    %v88 = vsel %vm48, %v42, 0
    %v91 = vsel %vm48, %v46, 0
    %93 = vmatpush.bf16.xpose.msra.mxu0 0
    %94 = vmatpush.bf16.xpose.msra.mxu0 0
    %95 = vmatpush.bf16.xpose.msra.mxu0 0
    %96 = vmatpush.bf16.xpose.msra.mxu0 0
    %97 = vmatpush.bf16.xpose.msra.mxu0 0
    %98 = vmatpush.bf16.xpose.msra.mxu0 0
    %99 = vmatpush.bf16.xpose.msra.mxu0 0
    %100 = vmatpush.bf16.xpose.msra.mxu0 %v91
    %101 = vmatmul.bf16.gmra.mxu0 %v88
    %v102 = vpop.f32.mrf.mxu0
    %v103 = vadd.f32 0.0, %v102
    %v104 = vpop.f32.mrf.mxu0
    %105 = vdwg.mxu0
    %v107 = vsel %vm48, %v43, 0
    %v110 = vsel %vm48, %v47, 0
    %112 = vmatpush.bf16.xpose.msra.mxu0 0
    %113 = vmatpush.bf16.xpose.msra.mxu0 0
    %114 = vmatpush.bf16.xpose.msra.mxu0 0
    %115 = vmatpush.bf16.xpose.msra.mxu0 0
    %116 = vmatpush.bf16.xpose.msra.mxu0 0
    %117 = vmatpush.bf16.xpose.msra.mxu0 0
    %118 = vmatpush.bf16.xpose.msra.mxu0 0
    %119 = vmatpush.bf16.xpose.msra.mxu0 %v110
    %120 = vmatmul.bf16.gmra.mxu0 %v107
    %v121 = vpop.f32.mrf.mxu0
    %v122 = vadd.f32 0.0, %v121
    %v123 = vpop.f32.mrf.mxu0
    %124 = vdwg.mxu0
    %v125 = vlaneseq
    %v126 = vshrl.u32 %v125, 7
    %v127 = vstv %s34
    %v128 = vadd.s32 %v127, %v126
    %v129 = vlaneseq
    %v130 = vand.u32 %v129, 127
    %v131 = vstv %s33
    %v132 = vadd.s32 %v131, %v130
    %vm133 = vcmp.le.s32.totalorder %v132, %v128
    %v134 = vsel %vm133, 1, 0
    %vm135 = vcmp.eq.s32.totalorder %v134, 1
    %v136 = vsel %vm135, %v65, -1e+30
    %v137 = vsel %vm135, %v84, -1e+30
    %v138 = vsel %vm135, %v103, -1e+30
    %v139 = vsel %vm135, %v122, -1e+30
    %v140 = vld [vmem:[#allocation2] sm:$0xff]
    %v141 = vld [vmem:[#allocation2 + $0x8] sm:$0xff]
    %v142 = vld [vmem:[#allocation2 + $0x10] sm:$0xff]
    %v143 = vld [vmem:[#allocation2 + $0x18] sm:$0xff]
    %vm144 = vcmask 64512
    %v145 = vsel %vm144, %v136, -inf
    %146 = vmax.xlane.f32.xlu0 %v145
    %v147 = vpop.xlane.xlu0 %146
    %v148 = vsel %vm144, %v137, -inf
    %149 = vmax.xlane.f32.xlu0 %v148
    %v150 = vpop.xlane.xlu0 %149
    %v151 = vsel %vm144, %v138, -inf
    %152 = vmax.xlane.f32.xlu0 %v151
    %v153 = vpop.xlane.xlu0 %152
    %v154 = vsel %vm144, %v139, -inf
    %155 = vmax.xlane.f32.xlu0 %v154
    %v156 = vpop.xlane.xlu0 %155
    %v157 = vmax.f32 %v140, %v147
    %v158 = vmax.f32 %v141, %v150
    %v159 = vmax.f32 %v142, %v153
    %v160 = vmax.f32 %v143, %v156
    %v161 = vsub.f32 %v140, %v157
    %v162 = vsub.f32 %v141, %v158
    %v163 = vsub.f32 %v142, %v159
    %v164 = vsub.f32 %v143, %v160
    %v165 = vmul.f32 %v161, 1.442695
    %v166 = vpow.pop %v165
    %v167 = vmul.f32 %v162, 1.442695
    %v168 = vpow.pop %v167
    %v169 = vmul.f32 %v163, 1.442695
    %v170 = vpow.pop %v169
    %v171 = vmul.f32 %v164, 1.442695
    %v172 = vpow.pop %v171
    %174 = vset.pattern.permute.xlu0 0
    %175 = vperm.xlu0 %174, %v157
    %v176 = vpop.permute.xlu0 %175
    %179 = vset.pattern.permute.xlu0 0
    %180 = vperm.xlu0 %179, %v158
    %v181 = vpop.permute.xlu0 %180
    %184 = vset.pattern.permute.xlu0 0
    %185 = vperm.xlu0 %184, %v159
    %v186 = vpop.permute.xlu0 %185
    %189 = vset.pattern.permute.xlu0 0
    %190 = vperm.xlu0 %189, %v160
    %v191 = vpop.permute.xlu0 %190
    %v193 = vsub.f32 %v136, %v176
    %v194 = vsub.f32 %v137, %v181
    %v195 = vsub.f32 %v138, %v186
    %v196 = vsub.f32 %v139, %v191
    %v197 = vmul.f32 %v193, 1.442695
    %v198 = vpow.pop %v197
    %v199 = vmul.f32 %v194, 1.442695
    %v200 = vpow.pop %v199
    %v201 = vmul.f32 %v195, 1.442695
    %v202 = vpow.pop %v201
    %v203 = vmul.f32 %v196, 1.442695
    %v204 = vpow.pop %v203
    %v205 = vld [vmem:[#allocation3] sm:$0xff]
    %v206 = vld [vmem:[#allocation3 + $0x8] sm:$0xff]
    %v207 = vld [vmem:[#allocation3 + $0x10] sm:$0xff]
    %v208 = vld [vmem:[#allocation3 + $0x18] sm:$0xff]
    %v209 = vmul.f32 %v166, %v205
    %v210 = vmul.f32 %v168, %v206
    %v211 = vmul.f32 %v170, %v207
    %v212 = vmul.f32 %v172, %v208
    %v213 = vsel %vm144, %v198, 0.0
    %214 = vadd.xlane.f32.xlu0 %v213
    %v215 = vpop.xlane.xlu0 %214
    %v216 = vsel %vm144, %v200, 0.0
    %217 = vadd.xlane.f32.xlu0 %v216
    %v218 = vpop.xlane.xlu0 %217
    %v219 = vsel %vm144, %v202, 0.0
    %220 = vadd.xlane.f32.xlu0 %v219
    %v221 = vpop.xlane.xlu0 %220
    %v222 = vsel %vm144, %v204, 0.0
    %223 = vadd.xlane.f32.xlu0 %v222
    %v224 = vpop.xlane.xlu0 %223
    %v225 = vadd.f32 %v209, %v215
    %v226 = vadd.f32 %v210, %v218
    %v227 = vadd.f32 %v211, %v221
    %v228 = vadd.f32 %v212, %v224
    %vm229 = vcmask 7168
    %230 = vst.msk [vmem:[#allocation3] sm:$0xff] %vm229, %v225
    %231 = vst.msk [vmem:[#allocation3 + $0x8] sm:$0xff] %vm229, %v226
    %232 = vst.msk [vmem:[#allocation3 + $0x10] sm:$0xff] %vm229, %v227
    %233 = vst.msk [vmem:[#allocation3 + $0x18] sm:$0xff] %vm229, %v228
    %v234 = vld [vmem:[#allocation4] sm:$0xff]
    %v235 = vld [vmem:[#allocation4 + $0x8] sm:$0xff]
    %v236 = vld [vmem:[#allocation4 + $0x10] sm:$0xff]
    %v237 = vld [vmem:[#allocation4 + $0x18] sm:$0xff]
    %239 = vset.pattern.permute.xlu0 0
    %240 = vperm.xlu0 %239, %v166
    %v241 = vpop.permute.xlu0 %240
    %244 = vset.pattern.permute.xlu0 0
    %245 = vperm.xlu0 %244, %v168
    %v246 = vpop.permute.xlu0 %245
    %249 = vset.pattern.permute.xlu0 0
    %250 = vperm.xlu0 %249, %v170
    %v251 = vpop.permute.xlu0 %250
    %254 = vset.pattern.permute.xlu0 0
    %255 = vperm.xlu0 %254, %v172
    %v256 = vpop.permute.xlu0 %255
    %v258 = vmul.f32 %v241, %v234
    %v259 = vmul.f32 %v246, %v235
    %v260 = vmul.f32 %v251, %v236
    %v261 = vmul.f32 %v256, %v237
    %v262 = vpack.c.bf16 %v198, %v198
    %v263 = vpack.c.bf16 %v200, %v200
    %v264 = vpack.c.bf16 %v202, %v202
    %v265 = vpack.c.bf16 %v204, %v204
    %v266 = vld [vmem:[%s2] sm:$0xf]
    %v267 = vld [vmem:[%s2 + $0x4] sm:$0xf]
    %v268 = vld [vmem:[%s2 + $0x8] sm:$0xf]
    %v269 = vld [vmem:[%s2 + $0xc] sm:$0xf]
    %v271 = vsel %vm144, %v262, 0
    %vm273 = vcmask 1043456
    %v275 = vsel %vm273, %v266, 0
    %277 = vmatpush.bf16.msra.mxu0 0
    %278 = vmatpush.bf16.msra.mxu0 0
    %279 = vmatpush.bf16.msra.mxu0 0
    %280 = vmatpush.bf16.msra.mxu0 0
    %281 = vmatpush.bf16.msra.mxu0 0
    %282 = vmatpush.bf16.msra.mxu0 0
    %283 = vmatpush.bf16.msra.mxu0 0
    %284 = vmatpush.bf16.msra.mxu0 %v275
    %285 = vmatmul.bf16.gmra.mxu0 %v271
    %v286 = vpop.f32.mrf.mxu0
    %v287 = vadd.f32 0.0, %v286
    %v288 = vpop.f32.mrf.mxu0
    %289 = vdwg.mxu0
    %v291 = vsel %vm144, %v263, 0
    %v294 = vsel %vm273, %v267, 0
    %296 = vmatpush.bf16.msra.mxu0 0
    %297 = vmatpush.bf16.msra.mxu0 0
    %298 = vmatpush.bf16.msra.mxu0 0
    %299 = vmatpush.bf16.msra.mxu0 0
    %300 = vmatpush.bf16.msra.mxu0 0
    %301 = vmatpush.bf16.msra.mxu0 0
    %302 = vmatpush.bf16.msra.mxu0 0
    %303 = vmatpush.bf16.msra.mxu0 %v294
    %304 = vmatmul.bf16.gmra.mxu0 %v291
    %v305 = vpop.f32.mrf.mxu0
    %v306 = vadd.f32 0.0, %v305
    %v307 = vpop.f32.mrf.mxu0
    %308 = vdwg.mxu0
    %v310 = vsel %vm144, %v264, 0
    %v313 = vsel %vm273, %v268, 0
    %315 = vmatpush.bf16.msra.mxu0 0
    %316 = vmatpush.bf16.msra.mxu0 0
    %317 = vmatpush.bf16.msra.mxu0 0
    %318 = vmatpush.bf16.msra.mxu0 0
    %319 = vmatpush.bf16.msra.mxu0 0
    %320 = vmatpush.bf16.msra.mxu0 0
    %321 = vmatpush.bf16.msra.mxu0 0
    %322 = vmatpush.bf16.msra.mxu0 %v313
    %323 = vmatmul.bf16.gmra.mxu0 %v310
    %v324 = vpop.f32.mrf.mxu0
    %v325 = vadd.f32 0.0, %v324
    %v326 = vpop.f32.mrf.mxu0
    %327 = vdwg.mxu0
    %v329 = vsel %vm144, %v265, 0
    %v332 = vsel %vm273, %v269, 0
    %334 = vmatpush.bf16.msra.mxu0 0
    %335 = vmatpush.bf16.msra.mxu0 0
    %336 = vmatpush.bf16.msra.mxu0 0
    %337 = vmatpush.bf16.msra.mxu0 0
    %338 = vmatpush.bf16.msra.mxu0 0
    %339 = vmatpush.bf16.msra.mxu0 0
    %340 = vmatpush.bf16.msra.mxu0 0
    %341 = vmatpush.bf16.msra.mxu0 %v332
    %342 = vmatmul.bf16.gmra.mxu0 %v329
    %v343 = vpop.f32.mrf.mxu0
    %v344 = vadd.f32 0.0, %v343
    %v345 = vpop.f32.mrf.mxu0
    %346 = vdwg.mxu0
    %v347 = vadd.f32 %v258, %v287
    %v348 = vadd.f32 %v259, %v306
    %v349 = vadd.f32 %v260, %v325
    %v350 = vadd.f32 %v261, %v344
    %351 = vst.msk [vmem:[#allocation4] sm:$0xff] %vm48, %v347
    %352 = vst.msk [vmem:[#allocation4 + $0x8] sm:$0xff] %vm48, %v348
    %353 = vst.msk [vmem:[#allocation4 + $0x10] sm:$0xff] %vm48, %v349
    %354 = vst.msk [vmem:[#allocation4 + $0x18] sm:$0xff] %vm48, %v350
    %355 = vst.msk [vmem:[#allocation2] sm:$0xff] %vm229, %v157
    %356 = vst.msk [vmem:[#allocation2 + $0x8] sm:$0xff] %vm229, %v158
    %357 = vst.msk [vmem:[#allocation2 + $0x10] sm:$0xff] %vm229, %v159
    %358 = vst.msk [vmem:[#allocation2 + $0x18] sm:$0xff] %vm229, %v160
  $region21: #{transformer_forward.22} parent=0 // pred_fallthru
    _
  // Predicated region
  $region22: #{transformer_forward.22} parent=0 // pred_check
    %p359 = pneg %p15
  $region23: #{transformer_forward.22} parent=0 // pred_check_branch
    %361 = sbr.rel (%p359) target = $region25
  $region24: #{transformer_forward.22} parent=0 // pred_region
    %v362 = vld [vmem:[#allocation3] sm:$0xff]
    %v363 = vld [vmem:[#allocation3 + $0x8] sm:$0xff]
    %v364 = vld [vmem:[#allocation3 + $0x10] sm:$0xff]
    %v365 = vld [vmem:[#allocation3 + $0x18] sm:$0xff]
    %v366 = vrcp.pop %v362
    %v367 = vrcp.pop %v363
    %v368 = vrcp.pop %v364
    %v369 = vrcp.pop %v365
    %v370 = vld [vmem:[#allocation4] sm:$0xff]
    %v371 = vld [vmem:[#allocation4 + $0x8] sm:$0xff]
    %v372 = vld [vmem:[#allocation4 + $0x10] sm:$0xff]
    %v373 = vld [vmem:[#allocation4 + $0x18] sm:$0xff]
    %375 = vset.pattern.permute.xlu0 0
    %376 = vperm.xlu0 %375, %v366
    %v377 = vpop.permute.xlu0 %376
    %380 = vset.pattern.permute.xlu0 0
    %381 = vperm.xlu0 %380, %v367
    %v382 = vpop.permute.xlu0 %381
    %385 = vset.pattern.permute.xlu0 0
    %386 = vperm.xlu0 %385, %v368
    %v387 = vpop.permute.xlu0 %386
    %390 = vset.pattern.permute.xlu0 0
    %391 = vperm.xlu0 %390, %v369
    %v392 = vpop.permute.xlu0 %391
    %v394 = vmul.f32 %v370, %v377
    %v395 = vmul.f32 %v371, %v382
    %v396 = vmul.f32 %v372, %v387
    %v397 = vmul.f32 %v373, %v392
    %399 = vrot.lane.b32.xlu0 %v395, 32
    %v400 = vpop.permute.xlu0 %399
    %403 = vrot.lane.b32.xlu0 %v396, 64
    %v404 = vpop.permute.xlu0 %403
    %407 = vrot.lane.b32.xlu0 %v397, 96
    %v408 = vpop.permute.xlu0 %407
    %vm410 = vcmask 261120
    %v411 = vsel %vm410, %v394, %v400
    %vm412 = vcmask 523264
    %v413 = vsel %vm412, %v411, %v404
    %vm414 = vcmask 785408
    %v415 = vsel %vm414, %v413, %v408
    %v416 = vpack.c.bf16 %v415, %v415
    %417 = vst [vmem:[%s3] sm:$0xf] %v416
  $region25: #{transformer_forward.22} parent=0 // pred_fallthru
    _
  // Predicated region
  $region26: #{transformer_forward.22} parent=0 // pred_check
    _
  $region27: #{transformer_forward.22} parent=0 // pred_check_branch
    %419 = sbr.rel (0) target = $region29
  $region28: #{transformer_forward.22} parent=0 // pred_region
    _
  $region29: #{transformer_forward.22} parent=0 // pred_fallthru
    _
  // Predicated region
  $region30: #{transformer_forward.22} parent=0 // pred_check
    _
  $region31: #{transformer_forward.22} parent=0 // pred_check_branch
    %421 = sbr.rel (0) target = $region33
  $region32: #{transformer_forward.22} parent=0 // pred_region
    _
  $region33: #{transformer_forward.22} parent=0 // pred_fallthru
    _

// kernel: transformer_forward.18
$region0: #{transformer_forward.18}
  #allocation0 [shape = 'u32[]', space=smem, size = 0x4, offset = 0x4, fixed_abs, tag = 'smem constant byte address 0x4 - core index']
  #allocation1 [shape = 'u32[72,128]{1,0:T(1,128)}', space=vmem, size = 0x9000, scoped, tag = 'internal scratch']
  #allocation2 [shape = 'f32[16,128]{1,0:T(8,128)}', space=vmem, size = 0x2000, scoped, tag = 'scratch operand']
  %s0 = inlined_call_operand.vmem [shape: bf16[16,128], index: 0, kind: input, shape index: {}]
  %s1 = inlined_call_operand.hbm [shape: bf16[128,512], index: 1, kind: input, shape index: {}]
  %s2 = inlined_call_operand.vmem [shape: f32[1,512], index: 2, kind: input, shape index: {}]
  %s3 = inlined_call_operand.hbm [shape: bf16[512,128], index: 3, kind: input, shape index: {}]
  %s4 = inlined_call_operand.vmem [shape: f32[1,128], index: 4, kind: input, shape index: {}]
  %s5 = inlined_call_operand.vmem [shape: f32[1,128], index: 5, kind: input, shape index: {}]
  %s6 = inlined_call_operand.vmem [shape: f32[1,128], index: 6, kind: input, shape index: {}]
  %s7 = inlined_call_operand.vmem [shape: bf16[16,128], index: 7, kind: output, shape index: {}]
  %s8 = sld [smem:[#allocation0]]
  $region54: #{transformer_forward.18} parent=0
    _
  %s10 = ssub.s32 1, %s8
  %s11 = scalar_select 0, %s10, %s8
  $region1: #{transformer_forward.18} parent=0
    #allocation3 [shape = 'u8[131072]{0}', space=vmem, size = 0x20000, scoped, tag = 'input window, operand 1, single buffered']
    #allocation4 [shape = 's32[1]{0}', space=sflag, size = 0x4, scoped, tag = 'scoped memory for transformer_forward.18']
    #allocation5 [shape = 'u8[131072]{0}', space=vmem, size = 0x20000, scoped, tag = 'input window, operand 3, single buffered']
    #allocation6 [shape = 's32[1]{0}', space=sflag, size = 0x4, scoped, tag = 'scoped memory for transformer_forward.18']
    %12 = vsyncpa [#allocation4], 0
    %13 = vsyncpa [#allocation6], 0
    // Predicated region
    $region2: #{transformer_forward.18} parent=1 // pred_check
      _
    $region3: #{transformer_forward.18} parent=1 // pred_check_branch
      %15 = sbr.rel (0) target = $region5
    $region4: #{transformer_forward.18} parent=1 // pred_region
      _
    $region5: #{transformer_forward.18} parent=1 // pred_fallthru
      _
    // Predicated region
    $region6: #{transformer_forward.18} parent=1 // pred_check
      _
    $region7: #{transformer_forward.18} parent=1 // pred_check_branch
      %17 = sbr.rel (0) target = $region9
    $region8: #{transformer_forward.18} parent=1 // pred_region
      %19 = vsyncadd [#allocation4], 0
      %s20 = sshll.u32 %s1, 4
      %s21 = int_to_ptr.hbm [resolvable:$true] %s20
      %s22 = sshll.u32 [#allocation3], 4
      %s23 = int_to_ptr.vmem [resolvable:$true] %s22
      %28 = dma.hbm_to_vmem [thread:$0]  %s21, 4096, %s23, [#allocation4], 256, 256, 16
    $region9: #{transformer_forward.18} parent=1 // pred_fallthru
      _
    // Predicated region
    $region10: #{transformer_forward.18} parent=1 // pred_check
      _
    $region11: #{transformer_forward.18} parent=1 // pred_check_branch
      %30 = sbr.rel (0) target = $region13
    $region12: #{transformer_forward.18} parent=1 // pred_region
      _
    $region13: #{transformer_forward.18} parent=1 // pred_fallthru
      _
    // Predicated region
    $region14: #{transformer_forward.18} parent=1 // pred_check
      _
    $region15: #{transformer_forward.18} parent=1 // pred_check_branch
      %32 = sbr.rel (0) target = $region17
    $region16: #{transformer_forward.18} parent=1 // pred_region
      %34 = vsyncadd [#allocation6], 0
      %s35 = sshll.u32 %s3, 4
      %s36 = int_to_ptr.hbm [resolvable:$true] %s35
      %s37 = sshll.u32 [#allocation5], 4
      %s38 = int_to_ptr.vmem [resolvable:$true] %s37
      %43 = dma.hbm_to_vmem [thread:$0]  %s36, 4096, %s38, [#allocation6], 64, 64, 4
    $region17: #{transformer_forward.18} parent=1 // pred_fallthru
      _
    // Predicated region
    $region18: #{transformer_forward.18} parent=1 // pred_check
      _
    $region19: #{transformer_forward.18} parent=1 // pred_check_branch
      %45 = sbr.rel (0) target = $region21
    $region20: #{transformer_forward.18} parent=1 // pred_region
      _
    $region21: #{transformer_forward.18} parent=1 // pred_fallthru
      _
    // Predicated region
    $region22: #{transformer_forward.18} parent=1 // pred_check
      _
    $region23: #{transformer_forward.18} parent=1 // pred_check_branch
      %47 = sbr.rel (0) target = $region25
    $region24: #{transformer_forward.18} parent=1 // pred_region
      _
    $region25: #{transformer_forward.18} parent=1 // pred_fallthru
      _
    // Predicated region
    $region26: #{transformer_forward.18} parent=1 // pred_check
      _
    $region27: #{transformer_forward.18} parent=1 // pred_check_branch
      %49 = sbr.rel (0) target = $region29
    $region28: #{transformer_forward.18} parent=1 // pred_region
      _
    $region29: #{transformer_forward.18} parent=1 // pred_fallthru
      _
    // Predicated region
    $region30: #{transformer_forward.18} parent=1 // pred_check
      _
    $region31: #{transformer_forward.18} parent=1 // pred_check_branch
      %51 = sbr.rel (0) target = $region33
    $region32: #{transformer_forward.18} parent=1 // pred_region
      %53 = dma.done [#allocation4], 4096
    $region33: #{transformer_forward.18} parent=1 // pred_fallthru
      _
    // Predicated region
    $region34: #{transformer_forward.18} parent=1 // pred_check
      _
    $region35: #{transformer_forward.18} parent=1 // pred_check_branch
      %55 = sbr.rel (0) target = $region37
    $region36: #{transformer_forward.18} parent=1 // pred_region
      %57 = dma.done [#allocation6], 4096
    $region37: #{transformer_forward.18} parent=1 // pred_fallthru
      _
    %p58 = scmp.eq.s32.totalorder 0, 0
    // Predicated region
    $region38: #{transformer_forward.18} parent=1 // pred_check
      %p59 = pneg %p58
    $region39: #{transformer_forward.18} parent=1 // pred_check_branch
      %61 = sbr.rel (%p59) target = $region41
    $region40: #{transformer_forward.18} parent=1 // pred_region
      %62 = vst [vmem:[#allocation2] sm:$0xff] 0.0
      %63 = vst [vmem:[#allocation2 + $0x8] sm:$0xff] 0.0
    $region41: #{transformer_forward.18} parent=1 // pred_fallthru
      _
    %v64 = vld [vmem:[%s0] sm:$0xf]
    %v65 = vld [vmem:[%s0 + $0x4] sm:$0xf]
    %v66 = vld [vmem:[#allocation3] sm:$0xff]
    %v67 = vld [vmem:[#allocation3 + $0x8] sm:$0xff]
    %v68 = vld [vmem:[#allocation3 + $0x10] sm:$0xff]
    %v69 = vld [vmem:[#allocation3 + $0x18] sm:$0xff]
    %v70 = vld [vmem:[#allocation3 + $0x20] sm:$0xff]
    %v71 = vld [vmem:[#allocation3 + $0x28] sm:$0xff]
    %v72 = vld [vmem:[#allocation3 + $0x30] sm:$0xff]
    %v73 = vld [vmem:[#allocation3 + $0x38] sm:$0xff]
    %v74 = vld [vmem:[#allocation3 + $0x40] sm:$0xff]
    %v75 = vld [vmem:[#allocation3 + $0x48] sm:$0xff]
    %v76 = vld [vmem:[#allocation3 + $0x50] sm:$0xff]
    %v77 = vld [vmem:[#allocation3 + $0x58] sm:$0xff]
    %v78 = vld [vmem:[#allocation3 + $0x60] sm:$0xff]
    %v79 = vld [vmem:[#allocation3 + $0x68] sm:$0xff]
    %v80 = vld [vmem:[#allocation3 + $0x70] sm:$0xff]
    %v81 = vld [vmem:[#allocation3 + $0x78] sm:$0xff]
    %v82 = vld [vmem:[#allocation3 + $0x80] sm:$0xff]
    %v83 = vld [vmem:[#allocation3 + $0x88] sm:$0xff]
    %v84 = vld [vmem:[#allocation3 + $0x90] sm:$0xff]
    %v85 = vld [vmem:[#allocation3 + $0x98] sm:$0xff]
    %v86 = vld [vmem:[#allocation3 + $0xa0] sm:$0xff]
    %v87 = vld [vmem:[#allocation3 + $0xa8] sm:$0xff]
    %v88 = vld [vmem:[#allocation3 + $0xb0] sm:$0xff]
    %v89 = vld [vmem:[#allocation3 + $0xb8] sm:$0xff]
    %v90 = vld [vmem:[#allocation3 + $0xc0] sm:$0xff]
    %v91 = vld [vmem:[#allocation3 + $0xc8] sm:$0xff]
    %v92 = vld [vmem:[#allocation3 + $0xd0] sm:$0xff]
    %v93 = vld [vmem:[#allocation3 + $0xd8] sm:$0xff]
    %v94 = vld [vmem:[#allocation3 + $0xe0] sm:$0xff]
    %v95 = vld [vmem:[#allocation3 + $0xe8] sm:$0xff]
    %v96 = vld [vmem:[#allocation3 + $0xf0] sm:$0xff]
    %v97 = vld [vmem:[#allocation3 + $0xf8] sm:$0xff]
    %v98 = vld [vmem:[%s2] sm:$0xf]
    %v100 = vperm.slane %v98, 0
    %v101 = vperm.slane %v98, 1
    %v102 = vperm.slane %v98, 2
    %v103 = vperm.slane %v98, 3
    %v110 = vunpack.c.l.b16 %v64
    %v111 = vunpack.c.l.b16 %v65
    %v112 = vpack.c.b16 %v111, %v110
    %v146 = vunpack.c.l.b16 %v66
    %v147 = vunpack.c.h.b16 %v66
    %v148 = vunpack.c.l.b16 %v67
    %v149 = vunpack.c.h.b16 %v67
    %v150 = vunpack.c.l.b16 %v68
    %v151 = vunpack.c.h.b16 %v68
    %v152 = vunpack.c.l.b16 %v69
    %v153 = vunpack.c.h.b16 %v69
    %v154 = vunpack.c.l.b16 %v70
    %v155 = vunpack.c.h.b16 %v70
    %v156 = vunpack.c.l.b16 %v71
    %v157 = vunpack.c.h.b16 %v71
    %v158 = vunpack.c.l.b16 %v72
    %v159 = vunpack.c.h.b16 %v72
    %v160 = vunpack.c.l.b16 %v73
    %v161 = vunpack.c.h.b16 %v73
    %v162 = vunpack.c.l.b16 %v74
    %v163 = vunpack.c.h.b16 %v74
    %v164 = vunpack.c.l.b16 %v75
    %v165 = vunpack.c.h.b16 %v75
    %v166 = vunpack.c.l.b16 %v76
    %v167 = vunpack.c.h.b16 %v76
    %v168 = vunpack.c.l.b16 %v77
    %v169 = vunpack.c.h.b16 %v77
    %v170 = vunpack.c.l.b16 %v78
    %v171 = vunpack.c.h.b16 %v78
    %v172 = vunpack.c.l.b16 %v79
    %v173 = vunpack.c.h.b16 %v79
    %v174 = vunpack.c.l.b16 %v80
    %v175 = vunpack.c.h.b16 %v80
    %v176 = vunpack.c.l.b16 %v81
    %v177 = vunpack.c.h.b16 %v81
    %v178 = vunpack.c.l.b16 %v82
    %v179 = vunpack.c.h.b16 %v82
    %v180 = vunpack.c.l.b16 %v83
    %v181 = vunpack.c.h.b16 %v83
    %v182 = vunpack.c.l.b16 %v84
    %v183 = vunpack.c.h.b16 %v84
    %v184 = vunpack.c.l.b16 %v85
    %v185 = vunpack.c.h.b16 %v85
    %v186 = vunpack.c.l.b16 %v86
    %v187 = vunpack.c.h.b16 %v86
    %v188 = vunpack.c.l.b16 %v87
    %v189 = vunpack.c.h.b16 %v87
    %v190 = vunpack.c.l.b16 %v88
    %v191 = vunpack.c.h.b16 %v88
    %v192 = vunpack.c.l.b16 %v89
    %v193 = vunpack.c.h.b16 %v89
    %v194 = vunpack.c.l.b16 %v90
    %v195 = vunpack.c.h.b16 %v90
    %v196 = vunpack.c.l.b16 %v91
    %v197 = vunpack.c.h.b16 %v91
    %v198 = vunpack.c.l.b16 %v92
    %v199 = vunpack.c.h.b16 %v92
    %v200 = vunpack.c.l.b16 %v93
    %v201 = vunpack.c.h.b16 %v93
    %v202 = vunpack.c.l.b16 %v94
    %v203 = vunpack.c.h.b16 %v94
    %v204 = vunpack.c.l.b16 %v95
    %v205 = vunpack.c.h.b16 %v95
    %v206 = vunpack.c.l.b16 %v96
    %v207 = vunpack.c.h.b16 %v96
    %v208 = vunpack.c.l.b16 %v97
    %v209 = vunpack.c.h.b16 %v97
    %v210 = vpack.c.b16 %v150, %v146
    %v211 = vpack.c.b16 %v151, %v147
    %v212 = vpack.c.b16 %v152, %v148
    %v213 = vpack.c.b16 %v153, %v149
    %v214 = vpack.c.b16 %v158, %v154
    %v215 = vpack.c.b16 %v159, %v155
    %v216 = vpack.c.b16 %v160, %v156
    %v217 = vpack.c.b16 %v161, %v157
    %v218 = vpack.c.b16 %v166, %v162
    %v219 = vpack.c.b16 %v167, %v163
    %v220 = vpack.c.b16 %v168, %v164
    %v221 = vpack.c.b16 %v169, %v165
    %v222 = vpack.c.b16 %v174, %v170
    %v223 = vpack.c.b16 %v175, %v171
    %v224 = vpack.c.b16 %v176, %v172
    %v225 = vpack.c.b16 %v177, %v173
    %v226 = vpack.c.b16 %v182, %v178
    %v227 = vpack.c.b16 %v183, %v179
    %v228 = vpack.c.b16 %v184, %v180
    %v229 = vpack.c.b16 %v185, %v181
    %v230 = vpack.c.b16 %v190, %v186
    %v231 = vpack.c.b16 %v191, %v187
    %v232 = vpack.c.b16 %v192, %v188
    %v233 = vpack.c.b16 %v193, %v189
    %v234 = vpack.c.b16 %v198, %v194
    %v235 = vpack.c.b16 %v199, %v195
    %v236 = vpack.c.b16 %v200, %v196
    %v237 = vpack.c.b16 %v201, %v197
    %v238 = vpack.c.b16 %v206, %v202
    %v239 = vpack.c.b16 %v207, %v203
    %v240 = vpack.c.b16 %v208, %v204
    %v241 = vpack.c.b16 %v209, %v205
    %274 = vmatpush.bf16.msra.mxu0 %v238
    %275 = vmatpush.bf16.msra.mxu0 %v234
    %276 = vmatpush.bf16.msra.mxu0 %v230
    %277 = vmatpush.bf16.msra.mxu0 %v226
    %278 = vmatpush.bf16.msra.mxu0 %v222
    %279 = vmatpush.bf16.msra.mxu0 %v218
    %280 = vmatpush.bf16.msra.mxu0 %v214
    %281 = vmatpush.bf16.msra.mxu0 %v210
    %282 = vmatmul.bf16.gmra.mxu0 %v112
    %v283 = vpop.f32.mrf.mxu0
    %v284 = vadd.f32 %v100, %v283
    %v285 = vpop.f32.mrf.mxu0
    %v286 = vadd.f32 %v100, %v285
    %287 = vdwg.mxu0
    %288 = vmatpush.bf16.msra.mxu0 %v239
    %289 = vmatpush.bf16.msra.mxu0 %v235
    %290 = vmatpush.bf16.msra.mxu0 %v231
    %291 = vmatpush.bf16.msra.mxu0 %v227
    %292 = vmatpush.bf16.msra.mxu0 %v223
    %293 = vmatpush.bf16.msra.mxu0 %v219
    %294 = vmatpush.bf16.msra.mxu0 %v215
    %295 = vmatpush.bf16.msra.mxu0 %v211
    %296 = vmatmul.bf16.gmra.mxu0 %v112
    %v297 = vpop.f32.mrf.mxu0
    %v298 = vadd.f32 %v101, %v297
    %v299 = vpop.f32.mrf.mxu0
    %v300 = vadd.f32 %v101, %v299
    %301 = vdwg.mxu0
    %302 = vmatpush.bf16.msra.mxu0 %v240
    %303 = vmatpush.bf16.msra.mxu0 %v236
    %304 = vmatpush.bf16.msra.mxu0 %v232
    %305 = vmatpush.bf16.msra.mxu0 %v228
    %306 = vmatpush.bf16.msra.mxu0 %v224
    %307 = vmatpush.bf16.msra.mxu0 %v220
    %308 = vmatpush.bf16.msra.mxu0 %v216
    %309 = vmatpush.bf16.msra.mxu0 %v212
    %310 = vmatmul.bf16.gmra.mxu0 %v112
    %v311 = vpop.f32.mrf.mxu0
    %v312 = vadd.f32 %v102, %v311
    %v313 = vpop.f32.mrf.mxu0
    %v314 = vadd.f32 %v102, %v313
    %315 = vdwg.mxu0
    %316 = vmatpush.bf16.msra.mxu0 %v241
    %317 = vmatpush.bf16.msra.mxu0 %v237
    %318 = vmatpush.bf16.msra.mxu0 %v233
    %319 = vmatpush.bf16.msra.mxu0 %v229
    %320 = vmatpush.bf16.msra.mxu0 %v225
    %321 = vmatpush.bf16.msra.mxu0 %v221
    %322 = vmatpush.bf16.msra.mxu0 %v217
    %323 = vmatpush.bf16.msra.mxu0 %v213
    %324 = vmatmul.bf16.gmra.mxu0 %v112
    %v325 = vpop.f32.mrf.mxu0
    %v326 = vadd.f32 %v103, %v325
    %v327 = vpop.f32.mrf.mxu0
    %v328 = vadd.f32 %v103, %v327
    %329 = vdwg.mxu0
    %v330 = vmax.f32 %v284, 0.0
    %v331 = vmax.f32 %v298, 0.0
    %v332 = vmax.f32 %v312, 0.0
    %v333 = vmax.f32 %v326, 0.0
    %v334 = vmax.f32 %v286, 0.0
    %v335 = vmax.f32 %v300, 0.0
    %v336 = vmax.f32 %v314, 0.0
    %v337 = vmax.f32 %v328, 0.0
    %v338 = vld [vmem:[#allocation2] sm:$0xff]
    %v339 = vld [vmem:[#allocation2 + $0x8] sm:$0xff]
    %v340 = vpack.c.bf16 %v334, %v330
    %v341 = vpack.c.bf16 %v335, %v331
    %v342 = vpack.c.bf16 %v336, %v332
    %v343 = vpack.c.bf16 %v337, %v333
    %v344 = vld [vmem:[#allocation5] sm:$0xf]
    %v345 = vld [vmem:[#allocation5 + $0x4] sm:$0xf]
    %v346 = vld [vmem:[#allocation5 + $0x8] sm:$0xf]
    %v347 = vld [vmem:[#allocation5 + $0xc] sm:$0xf]
    %v348 = vld [vmem:[#allocation5 + $0x10] sm:$0xf]
    %v349 = vld [vmem:[#allocation5 + $0x14] sm:$0xf]
    %v350 = vld [vmem:[#allocation5 + $0x18] sm:$0xf]
    %v351 = vld [vmem:[#allocation5 + $0x1c] sm:$0xf]
    %v352 = vld [vmem:[#allocation5 + $0x20] sm:$0xf]
    %v353 = vld [vmem:[#allocation5 + $0x24] sm:$0xf]
    %v354 = vld [vmem:[#allocation5 + $0x28] sm:$0xf]
    %v355 = vld [vmem:[#allocation5 + $0x2c] sm:$0xf]
    %v356 = vld [vmem:[#allocation5 + $0x30] sm:$0xf]
    %v357 = vld [vmem:[#allocation5 + $0x34] sm:$0xf]
    %v358 = vld [vmem:[#allocation5 + $0x38] sm:$0xf]
    %v359 = vld [vmem:[#allocation5 + $0x3c] sm:$0xf]
    %v360 = vld [vmem:[#allocation5 + $0x40] sm:$0xf]
    %v361 = vld [vmem:[#allocation5 + $0x44] sm:$0xf]
    %v362 = vld [vmem:[#allocation5 + $0x48] sm:$0xf]
    %v363 = vld [vmem:[#allocation5 + $0x4c] sm:$0xf]
    %v364 = vld [vmem:[#allocation5 + $0x50] sm:$0xf]
    %v365 = vld [vmem:[#allocation5 + $0x54] sm:$0xf]
    %v366 = vld [vmem:[#allocation5 + $0x58] sm:$0xf]
    %v367 = vld [vmem:[#allocation5 + $0x5c] sm:$0xf]
    %v368 = vld [vmem:[#allocation5 + $0x60] sm:$0xf]
    %v369 = vld [vmem:[#allocation5 + $0x64] sm:$0xf]
    %v370 = vld [vmem:[#allocation5 + $0x68] sm:$0xf]
    %v371 = vld [vmem:[#allocation5 + $0x6c] sm:$0xf]
    %v372 = vld [vmem:[#allocation5 + $0x70] sm:$0xf]
    %v373 = vld [vmem:[#allocation5 + $0x74] sm:$0xf]
    %v374 = vld [vmem:[#allocation5 + $0x78] sm:$0xf]
    %v375 = vld [vmem:[#allocation5 + $0x7c] sm:$0xf]
    %v376 = vld [vmem:[#allocation5 + $0x80] sm:$0xf]
    %v377 = vld [vmem:[#allocation5 + $0x84] sm:$0xf]
    %v378 = vld [vmem:[#allocation5 + $0x88] sm:$0xf]
    %v379 = vld [vmem:[#allocation5 + $0x8c] sm:$0xf]
    %v380 = vld [vmem:[#allocation5 + $0x90] sm:$0xf]
    %v381 = vld [vmem:[#allocation5 + $0x94] sm:$0xf]
    %v382 = vld [vmem:[#allocation5 + $0x98] sm:$0xf]
    %v383 = vld [vmem:[#allocation5 + $0x9c] sm:$0xf]
    %v384 = vld [vmem:[#allocation5 + $0xa0] sm:$0xf]
    %v385 = vld [vmem:[#allocation5 + $0xa4] sm:$0xf]
    %v386 = vld [vmem:[#allocation5 + $0xa8] sm:$0xf]
    %v387 = vld [vmem:[#allocation5 + $0xac] sm:$0xf]
    %v388 = vld [vmem:[#allocation5 + $0xb0] sm:$0xf]
    %v389 = vld [vmem:[#allocation5 + $0xb4] sm:$0xf]
    %v390 = vld [vmem:[#allocation5 + $0xb8] sm:$0xf]
    %v391 = vld [vmem:[#allocation5 + $0xbc] sm:$0xf]
    %v392 = vld [vmem:[#allocation5 + $0xc0] sm:$0xf]
    %v393 = vld [vmem:[#allocation5 + $0xc4] sm:$0xf]
    %v394 = vld [vmem:[#allocation5 + $0xc8] sm:$0xf]
    %v395 = vld [vmem:[#allocation5 + $0xcc] sm:$0xf]
    %v396 = vld [vmem:[#allocation5 + $0xd0] sm:$0xf]
    %v397 = vld [vmem:[#allocation5 + $0xd4] sm:$0xf]
    %v398 = vld [vmem:[#allocation5 + $0xd8] sm:$0xf]
    %v399 = vld [vmem:[#allocation5 + $0xdc] sm:$0xf]
    %v400 = vld [vmem:[#allocation5 + $0xe0] sm:$0xf]
    %v401 = vld [vmem:[#allocation5 + $0xe4] sm:$0xf]
    %v402 = vld [vmem:[#allocation5 + $0xe8] sm:$0xf]
    %v403 = vld [vmem:[#allocation5 + $0xec] sm:$0xf]
    %v404 = vld [vmem:[#allocation5 + $0xf0] sm:$0xf]
    %v405 = vld [vmem:[#allocation5 + $0xf4] sm:$0xf]
    %v406 = vld [vmem:[#allocation5 + $0xf8] sm:$0xf]
    %v407 = vld [vmem:[#allocation5 + $0xfc] sm:$0xf]
    %v472 = vunpack.c.l.b16 %v344
    %v473 = vunpack.c.l.b16 %v345
    %v474 = vunpack.c.l.b16 %v346
    %v475 = vunpack.c.l.b16 %v347
    %v476 = vunpack.c.l.b16 %v348
    %v477 = vunpack.c.l.b16 %v349
    %v478 = vunpack.c.l.b16 %v350
    %v479 = vunpack.c.l.b16 %v351
    %v480 = vunpack.c.l.b16 %v352
    %v481 = vunpack.c.l.b16 %v353
    %v482 = vunpack.c.l.b16 %v354
    %v483 = vunpack.c.l.b16 %v355
    %v484 = vunpack.c.l.b16 %v356
    %v485 = vunpack.c.l.b16 %v357
    %v486 = vunpack.c.l.b16 %v358
    %v487 = vunpack.c.l.b16 %v359
    %v488 = vunpack.c.l.b16 %v360
    %v489 = vunpack.c.l.b16 %v361
    %v490 = vunpack.c.l.b16 %v362
    %v491 = vunpack.c.l.b16 %v363
    %v492 = vunpack.c.l.b16 %v364
    %v493 = vunpack.c.l.b16 %v365
    %v494 = vunpack.c.l.b16 %v366
    %v495 = vunpack.c.l.b16 %v367
    %v496 = vunpack.c.l.b16 %v368
    %v497 = vunpack.c.l.b16 %v369
    %v498 = vunpack.c.l.b16 %v370
    %v499 = vunpack.c.l.b16 %v371
    %v500 = vunpack.c.l.b16 %v372
    %v501 = vunpack.c.l.b16 %v373
    %v502 = vunpack.c.l.b16 %v374
    %v503 = vunpack.c.l.b16 %v375
    %v504 = vunpack.c.l.b16 %v376
    %v505 = vunpack.c.l.b16 %v377
    %v506 = vunpack.c.l.b16 %v378
    %v507 = vunpack.c.l.b16 %v379
    %v508 = vunpack.c.l.b16 %v380
    %v509 = vunpack.c.l.b16 %v381
    %v510 = vunpack.c.l.b16 %v382
    %v511 = vunpack.c.l.b16 %v383
    %v512 = vunpack.c.l.b16 %v384
    %v513 = vunpack.c.l.b16 %v385
    %v514 = vunpack.c.l.b16 %v386
    %v515 = vunpack.c.l.b16 %v387
    %v516 = vunpack.c.l.b16 %v388
    %v517 = vunpack.c.l.b16 %v389
    %v518 = vunpack.c.l.b16 %v390
    %v519 = vunpack.c.l.b16 %v391
    %v520 = vunpack.c.l.b16 %v392
    %v521 = vunpack.c.l.b16 %v393
    %v522 = vunpack.c.l.b16 %v394
    %v523 = vunpack.c.l.b16 %v395
    %v524 = vunpack.c.l.b16 %v396
    %v525 = vunpack.c.l.b16 %v397
    %v526 = vunpack.c.l.b16 %v398
    %v527 = vunpack.c.l.b16 %v399
    %v528 = vunpack.c.l.b16 %v400
    %v529 = vunpack.c.l.b16 %v401
    %v530 = vunpack.c.l.b16 %v402
    %v531 = vunpack.c.l.b16 %v403
    %v532 = vunpack.c.l.b16 %v404
    %v533 = vunpack.c.l.b16 %v405
    %v534 = vunpack.c.l.b16 %v406
    %v535 = vunpack.c.l.b16 %v407
    %v536 = vpack.c.b16 %v473, %v472
    %v537 = vpack.c.b16 %v475, %v474
    %v538 = vpack.c.b16 %v477, %v476
    %v539 = vpack.c.b16 %v479, %v478
    %v540 = vpack.c.b16 %v481, %v480
    %v541 = vpack.c.b16 %v483, %v482
    %v542 = vpack.c.b16 %v485, %v484
    %v543 = vpack.c.b16 %v487, %v486
    %v544 = vpack.c.b16 %v489, %v488
    %v545 = vpack.c.b16 %v491, %v490
    %v546 = vpack.c.b16 %v493, %v492
    %v547 = vpack.c.b16 %v495, %v494
    %v548 = vpack.c.b16 %v497, %v496
    %v549 = vpack.c.b16 %v499, %v498
    %v550 = vpack.c.b16 %v501, %v500
    %v551 = vpack.c.b16 %v503, %v502
    %v552 = vpack.c.b16 %v505, %v504
    %v553 = vpack.c.b16 %v507, %v506
    %v554 = vpack.c.b16 %v509, %v508
    %v555 = vpack.c.b16 %v511, %v510
    %v556 = vpack.c.b16 %v513, %v512
    %v557 = vpack.c.b16 %v515, %v514
    %v558 = vpack.c.b16 %v517, %v516
    %v559 = vpack.c.b16 %v519, %v518
    %v560 = vpack.c.b16 %v521, %v520
    %v561 = vpack.c.b16 %v523, %v522
    %v562 = vpack.c.b16 %v525, %v524
    %v563 = vpack.c.b16 %v527, %v526
    %v564 = vpack.c.b16 %v529, %v528
    %v565 = vpack.c.b16 %v531, %v530
    %v566 = vpack.c.b16 %v533, %v532
    %v567 = vpack.c.b16 %v535, %v534
    %600 = vmatpush.bf16.msra.mxu0 %v543
    %601 = vmatpush.bf16.msra.mxu0 %v542
    %602 = vmatpush.bf16.msra.mxu0 %v541
    %603 = vmatpush.bf16.msra.mxu0 %v540
    %604 = vmatpush.bf16.msra.mxu0 %v539
    %605 = vmatpush.bf16.msra.mxu0 %v538
    %606 = vmatpush.bf16.msra.mxu0 %v537
    %607 = vmatpush.bf16.msra.mxu0 %v536
    %608 = vmatmul.bf16.gmra.mxu0 %v340
    %v609 = vpop.f32.mrf.mxu0
    %v610 = vadd.f32 0.0, %v609
    %v611 = vpop.f32.mrf.mxu0
    %v612 = vadd.f32 0.0, %v611
    %613 = vdwg.mxu0
    %614 = vmatpush.bf16.msra.mxu0 %v551
    %615 = vmatpush.bf16.msra.mxu0 %v550
    %616 = vmatpush.bf16.msra.mxu0 %v549
    %617 = vmatpush.bf16.msra.mxu0 %v548
    %618 = vmatpush.bf16.msra.mxu0 %v547
    %619 = vmatpush.bf16.msra.mxu0 %v546
    %620 = vmatpush.bf16.msra.mxu0 %v545
    %621 = vmatpush.bf16.msra.mxu0 %v544
    %622 = vmatmul.bf16.gmra.mxu0 %v341
    %v623 = vpop.f32.mrf.mxu0
    %v624 = vadd.f32 %v610, %v623
    %v625 = vpop.f32.mrf.mxu0
    %v626 = vadd.f32 %v612, %v625
    %627 = vdwg.mxu0
    %628 = vmatpush.bf16.msra.mxu0 %v559
    %629 = vmatpush.bf16.msra.mxu0 %v558
    %630 = vmatpush.bf16.msra.mxu0 %v557
    %631 = vmatpush.bf16.msra.mxu0 %v556
    %632 = vmatpush.bf16.msra.mxu0 %v555
    %633 = vmatpush.bf16.msra.mxu0 %v554
    %634 = vmatpush.bf16.msra.mxu0 %v553
    %635 = vmatpush.bf16.msra.mxu0 %v552
    %636 = vmatmul.bf16.gmra.mxu0 %v342
    %v637 = vpop.f32.mrf.mxu0
    %v638 = vadd.f32 %v624, %v637
    %v639 = vpop.f32.mrf.mxu0
    %v640 = vadd.f32 %v626, %v639
    %641 = vdwg.mxu0
    %642 = vmatpush.bf16.msra.mxu0 %v567
    %643 = vmatpush.bf16.msra.mxu0 %v566
    %644 = vmatpush.bf16.msra.mxu0 %v565
    %645 = vmatpush.bf16.msra.mxu0 %v564
    %646 = vmatpush.bf16.msra.mxu0 %v563
    %647 = vmatpush.bf16.msra.mxu0 %v562
    %648 = vmatpush.bf16.msra.mxu0 %v561
    %649 = vmatpush.bf16.msra.mxu0 %v560
    %650 = vmatmul.bf16.gmra.mxu0 %v343
    %v651 = vpop.f32.mrf.mxu0
    %v652 = vadd.f32 %v638, %v651
    %v653 = vpop.f32.mrf.mxu0
    %v654 = vadd.f32 %v640, %v653
    %655 = vdwg.mxu0
    %v656 = vadd.f32 %v338, %v652
    %v657 = vadd.f32 %v339, %v654
    %658 = vst [vmem:[#allocation2] sm:$0xff] %v656
    %659 = vst [vmem:[#allocation2 + $0x8] sm:$0xff] %v657
    // Predicated region
    $region42: #{transformer_forward.18} parent=1 // pred_check
      %p660 = pneg %p58
    $region43: #{transformer_forward.18} parent=1 // pred_check_branch
      %662 = sbr.rel (%p660) target = $region45
    $region44: #{transformer_forward.18} parent=1 // pred_region
      %v663 = vld [vmem:[#allocation2] sm:$0xff]
      %v664 = vld [vmem:[#allocation2 + $0x8] sm:$0xff]
      %v665 = vld [vmem:[%s4] sm:$0x1]
      %v667 = vperm.slane %v665, 0
      %v669 = vadd.f32 %v663, %v667
      %v670 = vadd.f32 %v664, %v667
      %v671 = vld [vmem:[%s0] sm:$0xf]
      %v672 = vld [vmem:[%s0 + $0x4] sm:$0xf]
      %v673 = vunpack.c.l.bf16 %v671
      %v674 = vunpack.c.l.bf16 %v672
      %v675 = vadd.f32 %v669, %v673
      %v676 = vadd.f32 %v670, %v674
      %677 = vadd.xlane.f32.xlu0 %v675
      %v678 = vpop.xlane.xlu0 %677
      %679 = vadd.xlane.f32.xlu0 %v676
      %v680 = vpop.xlane.xlu0 %679
      %v681 = vrcp.pop 128.0
      %v682 = vmul.f32 128.0, %v681
      %v683 = vsub.f32 1.0, %v682
      %v684 = vmul.f32 %v681, %v683
      %v685 = vadd.f32 %v681, %v684
      %vm686 = vweird.f32 %v681
      %v687 = vsel %vm686, %v681, %v685
      %v688 = vmul.f32 %v678, %v687
      %v689 = vmul.f32 %v680, %v687
      %v690 = vsub.f32 %v675, %v688
      %v691 = vsub.f32 %v676, %v689
      %v692 = vmul.f32 %v690, %v690
      %v693 = vmul.f32 %v691, %v691
      %694 = vadd.xlane.f32.xlu0 %v692
      %v695 = vpop.xlane.xlu0 %694
      %696 = vadd.xlane.f32.xlu0 %v693
      %v697 = vpop.xlane.xlu0 %696
      %v698 = vmul.f32 %v695, %v687
      %v699 = vmul.f32 %v697, %v687
      %v700 = vadd.f32 %v698, 1e-05
      %v701 = vadd.f32 %v699, 1e-05
      %v702 = vrsqrt.pop %v700
      %v703 = vmul.f32 %v702, %v700
      %v704 = vmul.f32 %v703, %v702
      %v705 = vmul.f32 0.5, %v704
      %v706 = vsub.f32 1.5, %v705
      %v707 = vmul.f32 %v702, %v706
      %vm708 = vweird.f32 %v700
      %vm709 = vweird.f32 %v702
      %vm710 = vmor %vm708, %vm709
      %v711 = vsel %vm710, %v702, %v707
      %v712 = vrsqrt.pop %v701
      %v713 = vmul.f32 %v712, %v701
      %v714 = vmul.f32 %v713, %v712
      %v715 = vmul.f32 0.5, %v714
      %v716 = vsub.f32 1.5, %v715
      %v717 = vmul.f32 %v712, %v716
      %vm718 = vweird.f32 %v701
      %vm719 = vweird.f32 %v712
      %vm720 = vmor %vm718, %vm719
      %v721 = vsel %vm720, %v712, %v717
      %v722 = vmul.f32 %v690, %v711
      %v723 = vmul.f32 %v691, %v721
      %v724 = vld [vmem:[%s5] sm:$0x1]
      %v726 = vperm.slane %v724, 0
      %v728 = vmul.f32 %v722, %v726
      %v729 = vmul.f32 %v723, %v726
      %v730 = vld [vmem:[%s6] sm:$0x1]
      %v732 = vperm.slane %v730, 0
      %v734 = vadd.f32 %v728, %v732
      %v735 = vadd.f32 %v729, %v732
      %v736 = vpack.c.bf16 %v734, %v734
      %v737 = vpack.c.bf16 %v735, %v735
      %738 = vst [vmem:[%s7] sm:$0xf] %v736
      %739 = vst [vmem:[%s7 + $0x4] sm:$0xf] %v737
    $region45: #{transformer_forward.18} parent=1 // pred_fallthru
      _
    // Predicated region
    $region46: #{transformer_forward.18} parent=1 // pred_check
      _
    $region47: #{transformer_forward.18} parent=1 // pred_check_branch
      %741 = sbr.rel (0) target = $region49
    $region48: #{transformer_forward.18} parent=1 // pred_region
      _
    $region49: #{transformer_forward.18} parent=1 // pred_fallthru
      _
    // Predicated region
    $region50: #{transformer_forward.18} parent=1 // pred_check
      _
    $region51: #{transformer_forward.18} parent=1 // pred_check_branch
      %743 = sbr.rel (0) target = $region53
    $region52: #{transformer_forward.18} parent=1 // pred_region
      _
    $region53: #{transformer_forward.18} parent=1 // pred_fallthru
      _
    %744 = vsyncpa [#allocation4], 1
    %745 = vsyncpa [#allocation6], 1

// kernel: transformer_forward.24
$region0: #{transformer_forward.24}
  #allocation0 [shape = 'u32[]', space=smem, size = 0x4, offset = 0x4, fixed_abs, tag = 'smem constant byte address 0x4 - core index']
  #allocation1 [shape = 'u32[72,128]{1,0:T(1,128)}', space=vmem, size = 0x9000, scoped, tag = 'internal scratch']
  #allocation2 [shape = 'f32[4,8,1]{2,1,0:T(8,128)}', space=vmem, size = 0x4000, scoped, tag = 'scratch operand']
  #allocation3 [shape = 'f32[4,8,1]{2,1,0:T(8,128)}', space=vmem, size = 0x4000, scoped, tag = 'scratch operand']
  #allocation4 [shape = 'f32[4,8,32]{2,1,0:T(8,128)}', space=vmem, size = 0x4000, scoped, tag = 'scratch operand']
  %s0 = inlined_call_operand.vmem [shape: bf16[4,8,32], index: 0, kind: input, shape index: {}]
  %s1 = inlined_call_operand.vmem [shape: bf16[4,16,32], index: 1, kind: input, shape index: {}]
  %s2 = inlined_call_operand.vmem [shape: bf16[4,16,32], index: 2, kind: input, shape index: {}]
  %s3 = inlined_call_operand.vmem [shape: bf16[8,128], index: 3, kind: output, shape index: {}]
  %s4 = sld [smem:[#allocation0]]
  $region30: #{transformer_forward.24} parent=0
    _
  %s6 = ssub.s32 1, %s4
  %s7 = scalar_select 0, %s6, %s4
  // Predicated region
  $region2: #{transformer_forward.24} parent=0 // pred_check
    _
  $region3: #{transformer_forward.24} parent=0 // pred_check_branch
    %9 = sbr.rel (0) target = $region5
  $region4: #{transformer_forward.24} parent=0 // pred_region
    _
  $region5: #{transformer_forward.24} parent=0 // pred_fallthru
    _
  // Predicated region
  $region6: #{transformer_forward.24} parent=0 // pred_check
    _
  $region7: #{transformer_forward.24} parent=0 // pred_check_branch
    %11 = sbr.rel (0) target = $region9
  $region8: #{transformer_forward.24} parent=0 // pred_region
    _
  $region9: #{transformer_forward.24} parent=0 // pred_fallthru
    _
  // Predicated region
  $region10: #{transformer_forward.24} parent=0 // pred_check
    _
  $region11: #{transformer_forward.24} parent=0 // pred_check_branch
    %13 = sbr.rel (0) target = $region13
  $region12: #{transformer_forward.24} parent=0 // pred_region
    _
  $region13: #{transformer_forward.24} parent=0 // pred_fallthru
    _
  %p15 = scmp.eq.s32.totalorder 0, 0
  // Predicated region
  $region14: #{transformer_forward.24} parent=0 // pred_check
    %p16 = pneg %p15
  $region15: #{transformer_forward.24} parent=0 // pred_check_branch
    %18 = sbr.rel (%p16) target = $region17
  $region16: #{transformer_forward.24} parent=0 // pred_region
    %vm19 = vcmask 7168
    %20 = vst.msk [vmem:[#allocation2] sm:$0xff] %vm19, -inf
    %21 = vst.msk [vmem:[#allocation2 + $0x8] sm:$0xff] %vm19, -inf
    %22 = vst.msk [vmem:[#allocation2 + $0x10] sm:$0xff] %vm19, -inf
    %23 = vst.msk [vmem:[#allocation2 + $0x18] sm:$0xff] %vm19, -inf
    %24 = vst.msk [vmem:[#allocation3] sm:$0xff] %vm19, 0.0
    %25 = vst.msk [vmem:[#allocation3 + $0x8] sm:$0xff] %vm19, 0.0
    %26 = vst.msk [vmem:[#allocation3 + $0x10] sm:$0xff] %vm19, 0.0
    %27 = vst.msk [vmem:[#allocation3 + $0x18] sm:$0xff] %vm19, 0.0
    %vm28 = vcmask 261120
    %29 = vst.msk [vmem:[#allocation4] sm:$0xff] %vm28, 0.0
    %30 = vst.msk [vmem:[#allocation4 + $0x8] sm:$0xff] %vm28, 0.0
    %31 = vst.msk [vmem:[#allocation4 + $0x10] sm:$0xff] %vm28, 0.0
    %32 = vst.msk [vmem:[#allocation4 + $0x18] sm:$0xff] %vm28, 0.0
  $region17: #{transformer_forward.24} parent=0 // pred_fallthru
    _
  %v33 = vld [vmem:[%s0] sm:$0xf]
  %v34 = vld [vmem:[%s0 + $0x4] sm:$0xf]
  %v35 = vld [vmem:[%s0 + $0x8] sm:$0xf]
  %v36 = vld [vmem:[%s0 + $0xc] sm:$0xf]
  %v37 = vld [vmem:[%s1] sm:$0xf]
  %v38 = vld [vmem:[%s1 + $0x4] sm:$0xf]
  %v39 = vld [vmem:[%s1 + $0x8] sm:$0xf]
  %v40 = vld [vmem:[%s1 + $0xc] sm:$0xf]
  %v41 = vld [vmem:[%s1 + $0x10] sm:$0xf]
  %v42 = vld [vmem:[%s1 + $0x14] sm:$0xf]
  %v43 = vld [vmem:[%s1 + $0x18] sm:$0xf]
  %v44 = vld [vmem:[%s1 + $0x1c] sm:$0xf]
  %v47 = vunpack.c.l.b16 %v37
  %v48 = vunpack.c.l.b16 %v38
  %v49 = vpack.c.b16 %v48, %v47
  %vm50 = vcmask 261120
  %v52 = vsel %vm50, %v33, 0
  %v55 = vsel %vm50, %v49, 0
  %57 = vmatpush.bf16.xpose.msra.mxu0 0
  %58 = vmatpush.bf16.xpose.msra.mxu0 0
  %59 = vmatpush.bf16.xpose.msra.mxu0 0
  %60 = vmatpush.bf16.xpose.msra.mxu0 0
  %61 = vmatpush.bf16.xpose.msra.mxu0 0
  %62 = vmatpush.bf16.xpose.msra.mxu0 0
  %63 = vmatpush.bf16.xpose.msra.mxu0 0
  %64 = vmatpush.bf16.xpose.msra.mxu0 %v55
  %65 = vmatmul.bf16.gmra.mxu0 %v52
  %v66 = vpop.f32.mrf.mxu0
  %v67 = vadd.f32 0.0, %v66
  %v68 = vpop.f32.mrf.mxu0
  %69 = vdwg.mxu0
  %v72 = vunpack.c.l.b16 %v39
  %v73 = vunpack.c.l.b16 %v40
  %v74 = vpack.c.b16 %v73, %v72
  %v76 = vsel %vm50, %v34, 0
  %v79 = vsel %vm50, %v74, 0
  %81 = vmatpush.bf16.xpose.msra.mxu0 0
  %82 = vmatpush.bf16.xpose.msra.mxu0 0
  %83 = vmatpush.bf16.xpose.msra.mxu0 0
  %84 = vmatpush.bf16.xpose.msra.mxu0 0
  %85 = vmatpush.bf16.xpose.msra.mxu0 0
  %86 = vmatpush.bf16.xpose.msra.mxu0 0
  %87 = vmatpush.bf16.xpose.msra.mxu0 0
  %88 = vmatpush.bf16.xpose.msra.mxu0 %v79
  %89 = vmatmul.bf16.gmra.mxu0 %v76
  %v90 = vpop.f32.mrf.mxu0
  %v91 = vadd.f32 0.0, %v90
  %v92 = vpop.f32.mrf.mxu0
  %93 = vdwg.mxu0
  %v96 = vunpack.c.l.b16 %v41
  %v97 = vunpack.c.l.b16 %v42
  %v98 = vpack.c.b16 %v97, %v96
  %v100 = vsel %vm50, %v35, 0
  %v103 = vsel %vm50, %v98, 0
  %105 = vmatpush.bf16.xpose.msra.mxu0 0
  %106 = vmatpush.bf16.xpose.msra.mxu0 0
  %107 = vmatpush.bf16.xpose.msra.mxu0 0
  %108 = vmatpush.bf16.xpose.msra.mxu0 0
  %109 = vmatpush.bf16.xpose.msra.mxu0 0
  %110 = vmatpush.bf16.xpose.msra.mxu0 0
  %111 = vmatpush.bf16.xpose.msra.mxu0 0
  %112 = vmatpush.bf16.xpose.msra.mxu0 %v103
  %113 = vmatmul.bf16.gmra.mxu0 %v100
  %v114 = vpop.f32.mrf.mxu0
  %v115 = vadd.f32 0.0, %v114
  %v116 = vpop.f32.mrf.mxu0
  %117 = vdwg.mxu0
  %v120 = vunpack.c.l.b16 %v43
  %v121 = vunpack.c.l.b16 %v44
  %v122 = vpack.c.b16 %v121, %v120
  %v124 = vsel %vm50, %v36, 0
  %v127 = vsel %vm50, %v122, 0
  %129 = vmatpush.bf16.xpose.msra.mxu0 0
  %130 = vmatpush.bf16.xpose.msra.mxu0 0
  %131 = vmatpush.bf16.xpose.msra.mxu0 0
  %132 = vmatpush.bf16.xpose.msra.mxu0 0
  %133 = vmatpush.bf16.xpose.msra.mxu0 0
  %134 = vmatpush.bf16.xpose.msra.mxu0 0
  %135 = vmatpush.bf16.xpose.msra.mxu0 0
  %136 = vmatpush.bf16.xpose.msra.mxu0 %v127
  %137 = vmatmul.bf16.gmra.mxu0 %v124
  %v138 = vpop.f32.mrf.mxu0
  %v139 = vadd.f32 0.0, %v138
  %v140 = vpop.f32.mrf.mxu0
  %141 = vdwg.mxu0
  %v142 = vld [vmem:[#allocation2] sm:$0xff]
  %v143 = vld [vmem:[#allocation2 + $0x8] sm:$0xff]
  %v144 = vld [vmem:[#allocation2 + $0x10] sm:$0xff]
  %v145 = vld [vmem:[#allocation2 + $0x18] sm:$0xff]
  %vm146 = vcmask 130048
  %v147 = vsel %vm146, %v67, -inf
  %148 = vmax.xlane.f32.xlu0 %v147
  %v149 = vpop.xlane.xlu0 %148
  %v150 = vsel %vm146, %v91, -inf
  %151 = vmax.xlane.f32.xlu0 %v150
  %v152 = vpop.xlane.xlu0 %151
  %v153 = vsel %vm146, %v115, -inf
  %154 = vmax.xlane.f32.xlu0 %v153
  %v155 = vpop.xlane.xlu0 %154
  %v156 = vsel %vm146, %v139, -inf
  %157 = vmax.xlane.f32.xlu0 %v156
  %v158 = vpop.xlane.xlu0 %157
  %v159 = vmax.f32 %v142, %v149
  %v160 = vmax.f32 %v143, %v152
  %v161 = vmax.f32 %v144, %v155
  %v162 = vmax.f32 %v145, %v158
  %v163 = vsub.f32 %v142, %v159
  %v164 = vsub.f32 %v143, %v160
  %v165 = vsub.f32 %v144, %v161
  %v166 = vsub.f32 %v145, %v162
  %v167 = vmul.f32 %v163, 1.442695
  %v168 = vpow.pop %v167
  %v169 = vmul.f32 %v164, 1.442695
  %v170 = vpow.pop %v169
  %v171 = vmul.f32 %v165, 1.442695
  %v172 = vpow.pop %v171
  %v173 = vmul.f32 %v166, 1.442695
  %v174 = vpow.pop %v173
  %176 = vset.pattern.permute.xlu0 0
  %177 = vperm.xlu0 %176, %v159
  %v178 = vpop.permute.xlu0 %177
  %181 = vset.pattern.permute.xlu0 0
  %182 = vperm.xlu0 %181, %v160
  %v183 = vpop.permute.xlu0 %182
  %186 = vset.pattern.permute.xlu0 0
  %187 = vperm.xlu0 %186, %v161
  %v188 = vpop.permute.xlu0 %187
  %191 = vset.pattern.permute.xlu0 0
  %192 = vperm.xlu0 %191, %v162
  %v193 = vpop.permute.xlu0 %192
  %v195 = vsub.f32 %v67, %v178
  %v196 = vsub.f32 %v91, %v183
  %v197 = vsub.f32 %v115, %v188
  %v198 = vsub.f32 %v139, %v193
  %v199 = vmul.f32 %v195, 1.442695
  %v200 = vpow.pop %v199
  %v201 = vmul.f32 %v196, 1.442695
  %v202 = vpow.pop %v201
  %v203 = vmul.f32 %v197, 1.442695
  %v204 = vpow.pop %v203
  %v205 = vmul.f32 %v198, 1.442695
  %v206 = vpow.pop %v205
  %v207 = vld [vmem:[#allocation3] sm:$0xff]
  %v208 = vld [vmem:[#allocation3 + $0x8] sm:$0xff]
  %v209 = vld [vmem:[#allocation3 + $0x10] sm:$0xff]
  %v210 = vld [vmem:[#allocation3 + $0x18] sm:$0xff]
  %v211 = vmul.f32 %v168, %v207
  %v212 = vmul.f32 %v170, %v208
  %v213 = vmul.f32 %v172, %v209
  %v214 = vmul.f32 %v174, %v210
  %v215 = vsel %vm146, %v200, 0.0
  %216 = vadd.xlane.f32.xlu0 %v215
  %v217 = vpop.xlane.xlu0 %216
  %v218 = vsel %vm146, %v202, 0.0
  %219 = vadd.xlane.f32.xlu0 %v218
  %v220 = vpop.xlane.xlu0 %219
  %v221 = vsel %vm146, %v204, 0.0
  %222 = vadd.xlane.f32.xlu0 %v221
  %v223 = vpop.xlane.xlu0 %222
  %v224 = vsel %vm146, %v206, 0.0
  %225 = vadd.xlane.f32.xlu0 %v224
  %v226 = vpop.xlane.xlu0 %225
  %v227 = vadd.f32 %v211, %v217
  %v228 = vadd.f32 %v212, %v220
  %v229 = vadd.f32 %v213, %v223
  %v230 = vadd.f32 %v214, %v226
  %vm231 = vcmask 7168
  %232 = vst.msk [vmem:[#allocation3] sm:$0xff] %vm231, %v227
  %233 = vst.msk [vmem:[#allocation3 + $0x8] sm:$0xff] %vm231, %v228
  %234 = vst.msk [vmem:[#allocation3 + $0x10] sm:$0xff] %vm231, %v229
  %235 = vst.msk [vmem:[#allocation3 + $0x18] sm:$0xff] %vm231, %v230
  %v236 = vld [vmem:[#allocation4] sm:$0xff]
  %v237 = vld [vmem:[#allocation4 + $0x8] sm:$0xff]
  %v238 = vld [vmem:[#allocation4 + $0x10] sm:$0xff]
  %v239 = vld [vmem:[#allocation4 + $0x18] sm:$0xff]
  %241 = vset.pattern.permute.xlu0 0
  %242 = vperm.xlu0 %241, %v168
  %v243 = vpop.permute.xlu0 %242
  %246 = vset.pattern.permute.xlu0 0
  %247 = vperm.xlu0 %246, %v170
  %v248 = vpop.permute.xlu0 %247
  %251 = vset.pattern.permute.xlu0 0
  %252 = vperm.xlu0 %251, %v172
  %v253 = vpop.permute.xlu0 %252
  %256 = vset.pattern.permute.xlu0 0
  %257 = vperm.xlu0 %256, %v174
  %v258 = vpop.permute.xlu0 %257
  %v260 = vmul.f32 %v243, %v236
  %v261 = vmul.f32 %v248, %v237
  %v262 = vmul.f32 %v253, %v238
  %v263 = vmul.f32 %v258, %v239
  %v264 = vpack.c.bf16 %v200, %v200
  %v265 = vpack.c.bf16 %v202, %v202
  %v266 = vpack.c.bf16 %v204, %v204
  %v267 = vpack.c.bf16 %v206, %v206
  %v268 = vld [vmem:[%s2] sm:$0xf]
  %v269 = vld [vmem:[%s2 + $0x4] sm:$0xf]
  %v270 = vld [vmem:[%s2 + $0x8] sm:$0xf]
  %v271 = vld [vmem:[%s2 + $0xc] sm:$0xf]
  %v272 = vld [vmem:[%s2 + $0x10] sm:$0xf]
  %v273 = vld [vmem:[%s2 + $0x14] sm:$0xf]
  %v274 = vld [vmem:[%s2 + $0x18] sm:$0xf]
  %v275 = vld [vmem:[%s2 + $0x1c] sm:$0xf]
  %v278 = vunpack.c.l.b16 %v268
  %v279 = vunpack.c.l.b16 %v269
  %v280 = vpack.c.b16 %v279, %v278
  %v283 = vsel %vm146, %v264, 0
  %285 = vmatpush.bf16.msra.mxu0 0
  %286 = vmatpush.bf16.msra.mxu0 0
  %287 = vmatpush.bf16.msra.mxu0 0
  %288 = vmatpush.bf16.msra.mxu0 0
  %289 = vmatpush.bf16.msra.mxu0 0
  %290 = vmatpush.bf16.msra.mxu0 0
  %291 = vmatpush.bf16.msra.mxu0 0
  %292 = vmatpush.bf16.msra.mxu0 %v280
  %293 = vmatmul.bf16.gmra.mxu0 %v283
  %v294 = vpop.f32.mrf.mxu0
  %v295 = vadd.f32 0.0, %v294
  %v296 = vpop.f32.mrf.mxu0
  %297 = vdwg.mxu0
  %v300 = vunpack.c.l.b16 %v270
  %v301 = vunpack.c.l.b16 %v271
  %v302 = vpack.c.b16 %v301, %v300
  %v305 = vsel %vm146, %v265, 0
  %307 = vmatpush.bf16.msra.mxu0 0
  %308 = vmatpush.bf16.msra.mxu0 0
  %309 = vmatpush.bf16.msra.mxu0 0
  %310 = vmatpush.bf16.msra.mxu0 0
  %311 = vmatpush.bf16.msra.mxu0 0
  %312 = vmatpush.bf16.msra.mxu0 0
  %313 = vmatpush.bf16.msra.mxu0 0
  %314 = vmatpush.bf16.msra.mxu0 %v302
  %315 = vmatmul.bf16.gmra.mxu0 %v305
  %v316 = vpop.f32.mrf.mxu0
  %v317 = vadd.f32 0.0, %v316
  %v318 = vpop.f32.mrf.mxu0
  %319 = vdwg.mxu0
  %v322 = vunpack.c.l.b16 %v272
  %v323 = vunpack.c.l.b16 %v273
  %v324 = vpack.c.b16 %v323, %v322
  %v327 = vsel %vm146, %v266, 0
  %329 = vmatpush.bf16.msra.mxu0 0
  %330 = vmatpush.bf16.msra.mxu0 0
  %331 = vmatpush.bf16.msra.mxu0 0
  %332 = vmatpush.bf16.msra.mxu0 0
  %333 = vmatpush.bf16.msra.mxu0 0
  %334 = vmatpush.bf16.msra.mxu0 0
  %335 = vmatpush.bf16.msra.mxu0 0
  %336 = vmatpush.bf16.msra.mxu0 %v324
  %337 = vmatmul.bf16.gmra.mxu0 %v327
  %v338 = vpop.f32.mrf.mxu0
  %v339 = vadd.f32 0.0, %v338
  %v340 = vpop.f32.mrf.mxu0
  %341 = vdwg.mxu0
  %v344 = vunpack.c.l.b16 %v274
  %v345 = vunpack.c.l.b16 %v275
  %v346 = vpack.c.b16 %v345, %v344
  %v349 = vsel %vm146, %v267, 0
  %351 = vmatpush.bf16.msra.mxu0 0
  %352 = vmatpush.bf16.msra.mxu0 0
  %353 = vmatpush.bf16.msra.mxu0 0
  %354 = vmatpush.bf16.msra.mxu0 0
  %355 = vmatpush.bf16.msra.mxu0 0
  %356 = vmatpush.bf16.msra.mxu0 0
  %357 = vmatpush.bf16.msra.mxu0 0
  %358 = vmatpush.bf16.msra.mxu0 %v346
  %359 = vmatmul.bf16.gmra.mxu0 %v349
  %v360 = vpop.f32.mrf.mxu0
  %v361 = vadd.f32 0.0, %v360
  %v362 = vpop.f32.mrf.mxu0
  %363 = vdwg.mxu0
  %v364 = vadd.f32 %v260, %v295
  %v365 = vadd.f32 %v261, %v317
  %v366 = vadd.f32 %v262, %v339
  %v367 = vadd.f32 %v263, %v361
  %368 = vst.msk [vmem:[#allocation4] sm:$0xff] %vm50, %v364
  %369 = vst.msk [vmem:[#allocation4 + $0x8] sm:$0xff] %vm50, %v365
  %370 = vst.msk [vmem:[#allocation4 + $0x10] sm:$0xff] %vm50, %v366
  %371 = vst.msk [vmem:[#allocation4 + $0x18] sm:$0xff] %vm50, %v367
  %372 = vst.msk [vmem:[#allocation2] sm:$0xff] %vm231, %v159
  %373 = vst.msk [vmem:[#allocation2 + $0x8] sm:$0xff] %vm231, %v160
  %374 = vst.msk [vmem:[#allocation2 + $0x10] sm:$0xff] %vm231, %v161
  %375 = vst.msk [vmem:[#allocation2 + $0x18] sm:$0xff] %vm231, %v162
  // Predicated region
  $region18: #{transformer_forward.24} parent=0 // pred_check
    %p376 = pneg %p15
  $region19: #{transformer_forward.24} parent=0 // pred_check_branch
    %378 = sbr.rel (%p376) target = $region21
  $region20: #{transformer_forward.24} parent=0 // pred_region
    %v379 = vld [vmem:[#allocation3] sm:$0xff]
    %v380 = vld [vmem:[#allocation3 + $0x8] sm:$0xff]
    %v381 = vld [vmem:[#allocation3 + $0x10] sm:$0xff]
    %v382 = vld [vmem:[#allocation3 + $0x18] sm:$0xff]
    %v383 = vrcp.pop %v379
    %v384 = vrcp.pop %v380
    %v385 = vrcp.pop %v381
    %v386 = vrcp.pop %v382
    %v387 = vld [vmem:[#allocation4] sm:$0xff]
    %v388 = vld [vmem:[#allocation4 + $0x8] sm:$0xff]
    %v389 = vld [vmem:[#allocation4 + $0x10] sm:$0xff]
    %v390 = vld [vmem:[#allocation4 + $0x18] sm:$0xff]
    %392 = vset.pattern.permute.xlu0 0
    %393 = vperm.xlu0 %392, %v383
    %v394 = vpop.permute.xlu0 %393
    %397 = vset.pattern.permute.xlu0 0
    %398 = vperm.xlu0 %397, %v384
    %v399 = vpop.permute.xlu0 %398
    %402 = vset.pattern.permute.xlu0 0
    %403 = vperm.xlu0 %402, %v385
    %v404 = vpop.permute.xlu0 %403
    %407 = vset.pattern.permute.xlu0 0
    %408 = vperm.xlu0 %407, %v386
    %v409 = vpop.permute.xlu0 %408
    %v411 = vmul.f32 %v387, %v394
    %v412 = vmul.f32 %v388, %v399
    %v413 = vmul.f32 %v389, %v404
    %v414 = vmul.f32 %v390, %v409
    %416 = vrot.lane.b32.xlu0 %v412, 32
    %v417 = vpop.permute.xlu0 %416
    %420 = vrot.lane.b32.xlu0 %v413, 64
    %v421 = vpop.permute.xlu0 %420
    %424 = vrot.lane.b32.xlu0 %v414, 96
    %v425 = vpop.permute.xlu0 %424
    %v427 = vsel %vm50, %v411, %v417
    %vm428 = vcmask 523264
    %v429 = vsel %vm428, %v427, %v421
    %vm430 = vcmask 785408
    %v431 = vsel %vm430, %v429, %v425
    %v432 = vpack.c.bf16 %v431, %v431
    %433 = vst [vmem:[%s3] sm:$0xf] %v432
  $region21: #{transformer_forward.24} parent=0 // pred_fallthru
    _
  // Predicated region
  $region22: #{transformer_forward.24} parent=0 // pred_check
    _
  $region23: #{transformer_forward.24} parent=0 // pred_check_branch
    %435 = sbr.rel (0) target = $region25
  $region24: #{transformer_forward.24} parent=0 // pred_region
    _
  $region25: #{transformer_forward.24} parent=0 // pred_fallthru
    _
  // Predicated region
  $region26: #{transformer_forward.24} parent=0 // pred_check
    _
  $region27: #{transformer_forward.24} parent=0 // pred_check_branch
    %437 = sbr.rel (0) target = $region29
  $region28: #{transformer_forward.24} parent=0 // pred_region
    _
  $region29: #{transformer_forward.24} parent=0 // pred_fallthru
    _

// kernel: transformer_forward.31
$region0: #{transformer_forward.31}
  #allocation0 [shape = 'u32[]', space=smem, size = 0x4, offset = 0x4, fixed_abs, tag = 'smem constant byte address 0x4 - core index']
  #allocation1 [shape = 'u32[72,128]{1,0:T(1,128)}', space=vmem, size = 0x9000, scoped, tag = 'internal scratch']
  #allocation2 [shape = 'f32[8,128]{1,0:T(8,128)}', space=vmem, size = 0x1000, scoped, tag = 'scratch operand']
  %s0 = inlined_call_operand.vmem [shape: bf16[8,128], index: 0, kind: input, shape index: {}]
  %s1 = inlined_call_operand.hbm [shape: bf16[128,512], index: 1, kind: input, shape index: {}]
  %s2 = inlined_call_operand.vmem [shape: f32[1,512], index: 2, kind: input, shape index: {}]
  %s3 = inlined_call_operand.hbm [shape: bf16[512,128], index: 3, kind: input, shape index: {}]
  %s4 = inlined_call_operand.vmem [shape: f32[1,128], index: 4, kind: input, shape index: {}]
  %s5 = inlined_call_operand.vmem [shape: f32[1,128], index: 5, kind: input, shape index: {}]
  %s6 = inlined_call_operand.vmem [shape: f32[1,128], index: 6, kind: input, shape index: {}]
  %s7 = inlined_call_operand.hbm [shape: bf16[8,128], index: 7, kind: output, shape index: {}]
  %s8 = sld [smem:[#allocation0]]
  $region54: #{transformer_forward.31} parent=0
    _
  %s10 = ssub.s32 1, %s8
  %s11 = scalar_select 0, %s10, %s8
  $region1: #{transformer_forward.31} parent=0
    #allocation3 [shape = 'u8[131072]{0}', space=vmem, size = 0x20000, scoped, tag = 'input window, operand 1, single buffered']
    #allocation4 [shape = 's32[1]{0}', space=sflag, size = 0x4, scoped, tag = 'scoped memory for transformer_forward.31']
    #allocation5 [shape = 's32[1]{0}', space=sflag, size = 0x4, scoped, tag = 'scoped memory for transformer_forward.31']
    #allocation6 [shape = 'u8[131072]{0}', space=vmem, size = 0x20000, scoped, tag = 'input window, operand 3, single buffered']
    #allocation7 [shape = 's32[1]{0}', space=sflag, size = 0x4, scoped, tag = 'scoped memory for transformer_forward.31']
    #allocation8 [shape = 'u8[2048]{0}', space=vmem, size = 0x800, scoped, tag = 'output window, operand 0, single buffered']
    %12 = vsyncpa [#allocation4], 0
    %13 = vsyncpa [#allocation7], 0
    %14 = vsyncpa [#allocation5], 0
    // Predicated region
    $region2: #{transformer_forward.31} parent=1 // pred_check
      _
    $region3: #{transformer_forward.31} parent=1 // pred_check_branch
      %16 = sbr.rel (0) target = $region5
    $region4: #{transformer_forward.31} parent=1 // pred_region
      _
    $region5: #{transformer_forward.31} parent=1 // pred_fallthru
      _
    // Predicated region
    $region6: #{transformer_forward.31} parent=1 // pred_check
      _
    $region7: #{transformer_forward.31} parent=1 // pred_check_branch
      %18 = sbr.rel (0) target = $region9
    $region8: #{transformer_forward.31} parent=1 // pred_region
      %20 = vsyncadd [#allocation4], 0
      %s21 = sshll.u32 %s1, 4
      %s22 = int_to_ptr.hbm [resolvable:$true] %s21
      %s23 = sshll.u32 [#allocation3], 4
      %s24 = int_to_ptr.vmem [resolvable:$true] %s23
      %29 = dma.hbm_to_vmem [thread:$0]  %s22, 4096, %s24, [#allocation4], 256, 256, 16
    $region9: #{transformer_forward.31} parent=1 // pred_fallthru
      _
    // Predicated region
    $region10: #{transformer_forward.31} parent=1 // pred_check
      _
    $region11: #{transformer_forward.31} parent=1 // pred_check_branch
      %31 = sbr.rel (0) target = $region13
    $region12: #{transformer_forward.31} parent=1 // pred_region
      _
    $region13: #{transformer_forward.31} parent=1 // pred_fallthru
      _
    // Predicated region
    $region14: #{transformer_forward.31} parent=1 // pred_check
      _
    $region15: #{transformer_forward.31} parent=1 // pred_check_branch
      %33 = sbr.rel (0) target = $region17
    $region16: #{transformer_forward.31} parent=1 // pred_region
      %35 = vsyncadd [#allocation7], 0
      %s36 = sshll.u32 %s3, 4
      %s37 = int_to_ptr.hbm [resolvable:$true] %s36
      %s38 = sshll.u32 [#allocation6], 4
      %s39 = int_to_ptr.vmem [resolvable:$true] %s38
      %44 = dma.hbm_to_vmem [thread:$0]  %s37, 4096, %s39, [#allocation7], 64, 64, 4
    $region17: #{transformer_forward.31} parent=1 // pred_fallthru
      _
    // Predicated region
    $region18: #{transformer_forward.31} parent=1 // pred_check
      _
    $region19: #{transformer_forward.31} parent=1 // pred_check_branch
      %46 = sbr.rel (0) target = $region21
    $region20: #{transformer_forward.31} parent=1 // pred_region
      _
    $region21: #{transformer_forward.31} parent=1 // pred_fallthru
      _
    // Predicated region
    $region22: #{transformer_forward.31} parent=1 // pred_check
      _
    $region23: #{transformer_forward.31} parent=1 // pred_check_branch
      %48 = sbr.rel (0) target = $region25
    $region24: #{transformer_forward.31} parent=1 // pred_region
      _
    $region25: #{transformer_forward.31} parent=1 // pred_fallthru
      _
    // Predicated region
    $region26: #{transformer_forward.31} parent=1 // pred_check
      _
    $region27: #{transformer_forward.31} parent=1 // pred_check_branch
      %50 = sbr.rel (0) target = $region29
    $region28: #{transformer_forward.31} parent=1 // pred_region
      _
    $region29: #{transformer_forward.31} parent=1 // pred_fallthru
      _
    // Predicated region
    $region30: #{transformer_forward.31} parent=1 // pred_check
      _
    $region31: #{transformer_forward.31} parent=1 // pred_check_branch
      %52 = sbr.rel (0) target = $region33
    $region32: #{transformer_forward.31} parent=1 // pred_region
      %54 = dma.done [#allocation4], 4096
    $region33: #{transformer_forward.31} parent=1 // pred_fallthru
      _
    // Predicated region
    $region34: #{transformer_forward.31} parent=1 // pred_check
      _
    $region35: #{transformer_forward.31} parent=1 // pred_check_branch
      %56 = sbr.rel (0) target = $region37
    $region36: #{transformer_forward.31} parent=1 // pred_region
      %58 = dma.done [#allocation7], 4096
    $region37: #{transformer_forward.31} parent=1 // pred_fallthru
      _
    %p59 = scmp.eq.s32.totalorder 0, 0
    // Predicated region
    $region38: #{transformer_forward.31} parent=1 // pred_check
      %p60 = pneg %p59
    $region39: #{transformer_forward.31} parent=1 // pred_check_branch
      %62 = sbr.rel (%p60) target = $region41
    $region40: #{transformer_forward.31} parent=1 // pred_region
      %63 = vst [vmem:[#allocation2] sm:$0xff] 0.0
    $region41: #{transformer_forward.31} parent=1 // pred_fallthru
      _
    %v64 = vld [vmem:[%s0] sm:$0xf]
    %v65 = vld [vmem:[#allocation3] sm:$0xff]
    %v66 = vld [vmem:[#allocation3 + $0x8] sm:$0xff]
    %v67 = vld [vmem:[#allocation3 + $0x10] sm:$0xff]
    %v68 = vld [vmem:[#allocation3 + $0x18] sm:$0xff]
    %v69 = vld [vmem:[#allocation3 + $0x20] sm:$0xff]
    %v70 = vld [vmem:[#allocation3 + $0x28] sm:$0xff]
    %v71 = vld [vmem:[#allocation3 + $0x30] sm:$0xff]
    %v72 = vld [vmem:[#allocation3 + $0x38] sm:$0xff]
    %v73 = vld [vmem:[#allocation3 + $0x40] sm:$0xff]
    %v74 = vld [vmem:[#allocation3 + $0x48] sm:$0xff]
    %v75 = vld [vmem:[#allocation3 + $0x50] sm:$0xff]
    %v76 = vld [vmem:[#allocation3 + $0x58] sm:$0xff]
    %v77 = vld [vmem:[#allocation3 + $0x60] sm:$0xff]
    %v78 = vld [vmem:[#allocation3 + $0x68] sm:$0xff]
    %v79 = vld [vmem:[#allocation3 + $0x70] sm:$0xff]
    %v80 = vld [vmem:[#allocation3 + $0x78] sm:$0xff]
    %v81 = vld [vmem:[#allocation3 + $0x80] sm:$0xff]
    %v82 = vld [vmem:[#allocation3 + $0x88] sm:$0xff]
    %v83 = vld [vmem:[#allocation3 + $0x90] sm:$0xff]
    %v84 = vld [vmem:[#allocation3 + $0x98] sm:$0xff]
    %v85 = vld [vmem:[#allocation3 + $0xa0] sm:$0xff]
    %v86 = vld [vmem:[#allocation3 + $0xa8] sm:$0xff]
    %v87 = vld [vmem:[#allocation3 + $0xb0] sm:$0xff]
    %v88 = vld [vmem:[#allocation3 + $0xb8] sm:$0xff]
    %v89 = vld [vmem:[#allocation3 + $0xc0] sm:$0xff]
    %v90 = vld [vmem:[#allocation3 + $0xc8] sm:$0xff]
    %v91 = vld [vmem:[#allocation3 + $0xd0] sm:$0xff]
    %v92 = vld [vmem:[#allocation3 + $0xd8] sm:$0xff]
    %v93 = vld [vmem:[#allocation3 + $0xe0] sm:$0xff]
    %v94 = vld [vmem:[#allocation3 + $0xe8] sm:$0xff]
    %v95 = vld [vmem:[#allocation3 + $0xf0] sm:$0xff]
    %v96 = vld [vmem:[#allocation3 + $0xf8] sm:$0xff]
    %v97 = vld [vmem:[%s2] sm:$0xf]
    %v99 = vperm.slane %v97, 0
    %v100 = vperm.slane %v97, 1
    %v101 = vperm.slane %v97, 2
    %v102 = vperm.slane %v97, 3
    %v139 = vunpack.c.l.b16 %v65
    %v140 = vunpack.c.h.b16 %v65
    %v141 = vunpack.c.l.b16 %v66
    %v142 = vunpack.c.h.b16 %v66
    %v143 = vunpack.c.l.b16 %v67
    %v144 = vunpack.c.h.b16 %v67
    %v145 = vunpack.c.l.b16 %v68
    %v146 = vunpack.c.h.b16 %v68
    %v147 = vunpack.c.l.b16 %v69
    %v148 = vunpack.c.h.b16 %v69
    %v149 = vunpack.c.l.b16 %v70
    %v150 = vunpack.c.h.b16 %v70
    %v151 = vunpack.c.l.b16 %v71
    %v152 = vunpack.c.h.b16 %v71
    %v153 = vunpack.c.l.b16 %v72
    %v154 = vunpack.c.h.b16 %v72
    %v155 = vunpack.c.l.b16 %v73
    %v156 = vunpack.c.h.b16 %v73
    %v157 = vunpack.c.l.b16 %v74
    %v158 = vunpack.c.h.b16 %v74
    %v159 = vunpack.c.l.b16 %v75
    %v160 = vunpack.c.h.b16 %v75
    %v161 = vunpack.c.l.b16 %v76
    %v162 = vunpack.c.h.b16 %v76
    %v163 = vunpack.c.l.b16 %v77
    %v164 = vunpack.c.h.b16 %v77
    %v165 = vunpack.c.l.b16 %v78
    %v166 = vunpack.c.h.b16 %v78
    %v167 = vunpack.c.l.b16 %v79
    %v168 = vunpack.c.h.b16 %v79
    %v169 = vunpack.c.l.b16 %v80
    %v170 = vunpack.c.h.b16 %v80
    %v171 = vunpack.c.l.b16 %v81
    %v172 = vunpack.c.h.b16 %v81
    %v173 = vunpack.c.l.b16 %v82
    %v174 = vunpack.c.h.b16 %v82
    %v175 = vunpack.c.l.b16 %v83
    %v176 = vunpack.c.h.b16 %v83
    %v177 = vunpack.c.l.b16 %v84
    %v178 = vunpack.c.h.b16 %v84
    %v179 = vunpack.c.l.b16 %v85
    %v180 = vunpack.c.h.b16 %v85
    %v181 = vunpack.c.l.b16 %v86
    %v182 = vunpack.c.h.b16 %v86
    %v183 = vunpack.c.l.b16 %v87
    %v184 = vunpack.c.h.b16 %v87
    %v185 = vunpack.c.l.b16 %v88
    %v186 = vunpack.c.h.b16 %v88
    %v187 = vunpack.c.l.b16 %v89
    %v188 = vunpack.c.h.b16 %v89
    %v189 = vunpack.c.l.b16 %v90
    %v190 = vunpack.c.h.b16 %v90
    %v191 = vunpack.c.l.b16 %v91
    %v192 = vunpack.c.h.b16 %v91
    %v193 = vunpack.c.l.b16 %v92
    %v194 = vunpack.c.h.b16 %v92
    %v195 = vunpack.c.l.b16 %v93
    %v196 = vunpack.c.h.b16 %v93
    %v197 = vunpack.c.l.b16 %v94
    %v198 = vunpack.c.h.b16 %v94
    %v199 = vunpack.c.l.b16 %v95
    %v200 = vunpack.c.h.b16 %v95
    %v201 = vunpack.c.l.b16 %v96
    %v202 = vunpack.c.h.b16 %v96
    %v203 = vpack.c.b16 %v143, %v139
    %v204 = vpack.c.b16 %v144, %v140
    %v205 = vpack.c.b16 %v145, %v141
    %v206 = vpack.c.b16 %v146, %v142
    %v207 = vpack.c.b16 %v151, %v147
    %v208 = vpack.c.b16 %v152, %v148
    %v209 = vpack.c.b16 %v153, %v149
    %v210 = vpack.c.b16 %v154, %v150
    %v211 = vpack.c.b16 %v159, %v155
    %v212 = vpack.c.b16 %v160, %v156
    %v213 = vpack.c.b16 %v161, %v157
    %v214 = vpack.c.b16 %v162, %v158
    %v215 = vpack.c.b16 %v167, %v163
    %v216 = vpack.c.b16 %v168, %v164
    %v217 = vpack.c.b16 %v169, %v165
    %v218 = vpack.c.b16 %v170, %v166
    %v219 = vpack.c.b16 %v175, %v171
    %v220 = vpack.c.b16 %v176, %v172
    %v221 = vpack.c.b16 %v177, %v173
    %v222 = vpack.c.b16 %v178, %v174
    %v223 = vpack.c.b16 %v183, %v179
    %v224 = vpack.c.b16 %v184, %v180
    %v225 = vpack.c.b16 %v185, %v181
    %v226 = vpack.c.b16 %v186, %v182
    %v227 = vpack.c.b16 %v191, %v187
    %v228 = vpack.c.b16 %v192, %v188
    %v229 = vpack.c.b16 %v193, %v189
    %v230 = vpack.c.b16 %v194, %v190
    %v231 = vpack.c.b16 %v199, %v195
    %v232 = vpack.c.b16 %v200, %v196
    %v233 = vpack.c.b16 %v201, %v197
    %v234 = vpack.c.b16 %v202, %v198
    %267 = vmatpush.bf16.msra.mxu0 %v231
    %268 = vmatpush.bf16.msra.mxu0 %v227
    %269 = vmatpush.bf16.msra.mxu0 %v223
    %270 = vmatpush.bf16.msra.mxu0 %v219
    %271 = vmatpush.bf16.msra.mxu0 %v215
    %272 = vmatpush.bf16.msra.mxu0 %v211
    %273 = vmatpush.bf16.msra.mxu0 %v207
    %274 = vmatpush.bf16.msra.mxu0 %v203
    %275 = vmatmul.bf16.gmra.mxu0 %v64
    %v276 = vpop.f32.mrf.mxu0
    %v277 = vadd.f32 %v99, %v276
    %v278 = vpop.f32.mrf.mxu0
    %279 = vdwg.mxu0
    %280 = vmatpush.bf16.msra.mxu0 %v232
    %281 = vmatpush.bf16.msra.mxu0 %v228
    %282 = vmatpush.bf16.msra.mxu0 %v224
    %283 = vmatpush.bf16.msra.mxu0 %v220
    %284 = vmatpush.bf16.msra.mxu0 %v216
    %285 = vmatpush.bf16.msra.mxu0 %v212
    %286 = vmatpush.bf16.msra.mxu0 %v208
    %287 = vmatpush.bf16.msra.mxu0 %v204
    %288 = vmatmul.bf16.gmra.mxu0 %v64
    %v289 = vpop.f32.mrf.mxu0
    %v290 = vadd.f32 %v100, %v289
    %v291 = vpop.f32.mrf.mxu0
    %292 = vdwg.mxu0
    %293 = vmatpush.bf16.msra.mxu0 %v233
    %294 = vmatpush.bf16.msra.mxu0 %v229
    %295 = vmatpush.bf16.msra.mxu0 %v225
    %296 = vmatpush.bf16.msra.mxu0 %v221
    %297 = vmatpush.bf16.msra.mxu0 %v217
    %298 = vmatpush.bf16.msra.mxu0 %v213
    %299 = vmatpush.bf16.msra.mxu0 %v209
    %300 = vmatpush.bf16.msra.mxu0 %v205
    %301 = vmatmul.bf16.gmra.mxu0 %v64
    %v302 = vpop.f32.mrf.mxu0
    %v303 = vadd.f32 %v101, %v302
    %v304 = vpop.f32.mrf.mxu0
    %305 = vdwg.mxu0
    %306 = vmatpush.bf16.msra.mxu0 %v234
    %307 = vmatpush.bf16.msra.mxu0 %v230
    %308 = vmatpush.bf16.msra.mxu0 %v226
    %309 = vmatpush.bf16.msra.mxu0 %v222
    %310 = vmatpush.bf16.msra.mxu0 %v218
    %311 = vmatpush.bf16.msra.mxu0 %v214
    %312 = vmatpush.bf16.msra.mxu0 %v210
    %313 = vmatpush.bf16.msra.mxu0 %v206
    %314 = vmatmul.bf16.gmra.mxu0 %v64
    %v315 = vpop.f32.mrf.mxu0
    %v316 = vadd.f32 %v102, %v315
    %v317 = vpop.f32.mrf.mxu0
    %318 = vdwg.mxu0
    %v319 = vmax.f32 %v277, 0.0
    %v320 = vmax.f32 %v290, 0.0
    %v321 = vmax.f32 %v303, 0.0
    %v322 = vmax.f32 %v316, 0.0
    %v323 = vld [vmem:[#allocation2] sm:$0xff]
    %v324 = vpack.c.bf16 %v319, %v319
    %v325 = vpack.c.bf16 %v320, %v320
    %v326 = vpack.c.bf16 %v321, %v321
    %v327 = vpack.c.bf16 %v322, %v322
    %v328 = vld [vmem:[#allocation6] sm:$0xf]
    %v329 = vld [vmem:[#allocation6 + $0x4] sm:$0xf]
    %v330 = vld [vmem:[#allocation6 + $0x8] sm:$0xf]
    %v331 = vld [vmem:[#allocation6 + $0xc] sm:$0xf]
    %v332 = vld [vmem:[#allocation6 + $0x10] sm:$0xf]
    %v333 = vld [vmem:[#allocation6 + $0x14] sm:$0xf]
    %v334 = vld [vmem:[#allocation6 + $0x18] sm:$0xf]
    %v335 = vld [vmem:[#allocation6 + $0x1c] sm:$0xf]
    %v336 = vld [vmem:[#allocation6 + $0x20] sm:$0xf]
    %v337 = vld [vmem:[#allocation6 + $0x24] sm:$0xf]
    %v338 = vld [vmem:[#allocation6 + $0x28] sm:$0xf]
    %v339 = vld [vmem:[#allocation6 + $0x2c] sm:$0xf]
    %v340 = vld [vmem:[#allocation6 + $0x30] sm:$0xf]
    %v341 = vld [vmem:[#allocation6 + $0x34] sm:$0xf]
    %v342 = vld [vmem:[#allocation6 + $0x38] sm:$0xf]
    %v343 = vld [vmem:[#allocation6 + $0x3c] sm:$0xf]
    %v344 = vld [vmem:[#allocation6 + $0x40] sm:$0xf]
    %v345 = vld [vmem:[#allocation6 + $0x44] sm:$0xf]
    %v346 = vld [vmem:[#allocation6 + $0x48] sm:$0xf]
    %v347 = vld [vmem:[#allocation6 + $0x4c] sm:$0xf]
    %v348 = vld [vmem:[#allocation6 + $0x50] sm:$0xf]
    %v349 = vld [vmem:[#allocation6 + $0x54] sm:$0xf]
    %v350 = vld [vmem:[#allocation6 + $0x58] sm:$0xf]
    %v351 = vld [vmem:[#allocation6 + $0x5c] sm:$0xf]
    %v352 = vld [vmem:[#allocation6 + $0x60] sm:$0xf]
    %v353 = vld [vmem:[#allocation6 + $0x64] sm:$0xf]
    %v354 = vld [vmem:[#allocation6 + $0x68] sm:$0xf]
    %v355 = vld [vmem:[#allocation6 + $0x6c] sm:$0xf]
    %v356 = vld [vmem:[#allocation6 + $0x70] sm:$0xf]
    %v357 = vld [vmem:[#allocation6 + $0x74] sm:$0xf]
    %v358 = vld [vmem:[#allocation6 + $0x78] sm:$0xf]
    %v359 = vld [vmem:[#allocation6 + $0x7c] sm:$0xf]
    %v360 = vld [vmem:[#allocation6 + $0x80] sm:$0xf]
    %v361 = vld [vmem:[#allocation6 + $0x84] sm:$0xf]
    %v362 = vld [vmem:[#allocation6 + $0x88] sm:$0xf]
    %v363 = vld [vmem:[#allocation6 + $0x8c] sm:$0xf]
    %v364 = vld [vmem:[#allocation6 + $0x90] sm:$0xf]
    %v365 = vld [vmem:[#allocation6 + $0x94] sm:$0xf]
    %v366 = vld [vmem:[#allocation6 + $0x98] sm:$0xf]
    %v367 = vld [vmem:[#allocation6 + $0x9c] sm:$0xf]
    %v368 = vld [vmem:[#allocation6 + $0xa0] sm:$0xf]
    %v369 = vld [vmem:[#allocation6 + $0xa4] sm:$0xf]
    %v370 = vld [vmem:[#allocation6 + $0xa8] sm:$0xf]
    %v371 = vld [vmem:[#allocation6 + $0xac] sm:$0xf]
    %v372 = vld [vmem:[#allocation6 + $0xb0] sm:$0xf]
    %v373 = vld [vmem:[#allocation6 + $0xb4] sm:$0xf]
    %v374 = vld [vmem:[#allocation6 + $0xb8] sm:$0xf]
    %v375 = vld [vmem:[#allocation6 + $0xbc] sm:$0xf]
    %v376 = vld [vmem:[#allocation6 + $0xc0] sm:$0xf]
    %v377 = vld [vmem:[#allocation6 + $0xc4] sm:$0xf]
    %v378 = vld [vmem:[#allocation6 + $0xc8] sm:$0xf]
    %v379 = vld [vmem:[#allocation6 + $0xcc] sm:$0xf]
    %v380 = vld [vmem:[#allocation6 + $0xd0] sm:$0xf]
    %v381 = vld [vmem:[#allocation6 + $0xd4] sm:$0xf]
    %v382 = vld [vmem:[#allocation6 + $0xd8] sm:$0xf]
    %v383 = vld [vmem:[#allocation6 + $0xdc] sm:$0xf]
    %v384 = vld [vmem:[#allocation6 + $0xe0] sm:$0xf]
    %v385 = vld [vmem:[#allocation6 + $0xe4] sm:$0xf]
    %v386 = vld [vmem:[#allocation6 + $0xe8] sm:$0xf]
    %v387 = vld [vmem:[#allocation6 + $0xec] sm:$0xf]
    %v388 = vld [vmem:[#allocation6 + $0xf0] sm:$0xf]
    %v389 = vld [vmem:[#allocation6 + $0xf4] sm:$0xf]
    %v390 = vld [vmem:[#allocation6 + $0xf8] sm:$0xf]
    %v391 = vld [vmem:[#allocation6 + $0xfc] sm:$0xf]
    %v456 = vunpack.c.l.b16 %v328
    %v457 = vunpack.c.l.b16 %v329
    %v458 = vunpack.c.l.b16 %v330
    %v459 = vunpack.c.l.b16 %v331
    %v460 = vunpack.c.l.b16 %v332
    %v461 = vunpack.c.l.b16 %v333
    %v462 = vunpack.c.l.b16 %v334
    %v463 = vunpack.c.l.b16 %v335
    %v464 = vunpack.c.l.b16 %v336
    %v465 = vunpack.c.l.b16 %v337
    %v466 = vunpack.c.l.b16 %v338
    %v467 = vunpack.c.l.b16 %v339
    %v468 = vunpack.c.l.b16 %v340
    %v469 = vunpack.c.l.b16 %v341
    %v470 = vunpack.c.l.b16 %v342
    %v471 = vunpack.c.l.b16 %v343
    %v472 = vunpack.c.l.b16 %v344
    %v473 = vunpack.c.l.b16 %v345
    %v474 = vunpack.c.l.b16 %v346
    %v475 = vunpack.c.l.b16 %v347
    %v476 = vunpack.c.l.b16 %v348
    %v477 = vunpack.c.l.b16 %v349
    %v478 = vunpack.c.l.b16 %v350
    %v479 = vunpack.c.l.b16 %v351
    %v480 = vunpack.c.l.b16 %v352
    %v481 = vunpack.c.l.b16 %v353
    %v482 = vunpack.c.l.b16 %v354
    %v483 = vunpack.c.l.b16 %v355
    %v484 = vunpack.c.l.b16 %v356
    %v485 = vunpack.c.l.b16 %v357
    %v486 = vunpack.c.l.b16 %v358
    %v487 = vunpack.c.l.b16 %v359
    %v488 = vunpack.c.l.b16 %v360
    %v489 = vunpack.c.l.b16 %v361
    %v490 = vunpack.c.l.b16 %v362
    %v491 = vunpack.c.l.b16 %v363
    %v492 = vunpack.c.l.b16 %v364
    %v493 = vunpack.c.l.b16 %v365
    %v494 = vunpack.c.l.b16 %v366
    %v495 = vunpack.c.l.b16 %v367
    %v496 = vunpack.c.l.b16 %v368
    %v497 = vunpack.c.l.b16 %v369
    %v498 = vunpack.c.l.b16 %v370
    %v499 = vunpack.c.l.b16 %v371
    %v500 = vunpack.c.l.b16 %v372
    %v501 = vunpack.c.l.b16 %v373
    %v502 = vunpack.c.l.b16 %v374
    %v503 = vunpack.c.l.b16 %v375
    %v504 = vunpack.c.l.b16 %v376
    %v505 = vunpack.c.l.b16 %v377
    %v506 = vunpack.c.l.b16 %v378
    %v507 = vunpack.c.l.b16 %v379
    %v508 = vunpack.c.l.b16 %v380
    %v509 = vunpack.c.l.b16 %v381
    %v510 = vunpack.c.l.b16 %v382
    %v511 = vunpack.c.l.b16 %v383
    %v512 = vunpack.c.l.b16 %v384
    %v513 = vunpack.c.l.b16 %v385
    %v514 = vunpack.c.l.b16 %v386
    %v515 = vunpack.c.l.b16 %v387
    %v516 = vunpack.c.l.b16 %v388
    %v517 = vunpack.c.l.b16 %v389
    %v518 = vunpack.c.l.b16 %v390
    %v519 = vunpack.c.l.b16 %v391
    %v520 = vpack.c.b16 %v457, %v456
    %v521 = vpack.c.b16 %v459, %v458
    %v522 = vpack.c.b16 %v461, %v460
    %v523 = vpack.c.b16 %v463, %v462
    %v524 = vpack.c.b16 %v465, %v464
    %v525 = vpack.c.b16 %v467, %v466
    %v526 = vpack.c.b16 %v469, %v468
    %v527 = vpack.c.b16 %v471, %v470
    %v528 = vpack.c.b16 %v473, %v472
    %v529 = vpack.c.b16 %v475, %v474
    %v530 = vpack.c.b16 %v477, %v476
    %v531 = vpack.c.b16 %v479, %v478
    %v532 = vpack.c.b16 %v481, %v480
    %v533 = vpack.c.b16 %v483, %v482
    %v534 = vpack.c.b16 %v485, %v484
    %v535 = vpack.c.b16 %v487, %v486
    %v536 = vpack.c.b16 %v489, %v488
    %v537 = vpack.c.b16 %v491, %v490
    %v538 = vpack.c.b16 %v493, %v492
    %v539 = vpack.c.b16 %v495, %v494
    %v540 = vpack.c.b16 %v497, %v496
    %v541 = vpack.c.b16 %v499, %v498
    %v542 = vpack.c.b16 %v501, %v500
    %v543 = vpack.c.b16 %v503, %v502
    %v544 = vpack.c.b16 %v505, %v504
    %v545 = vpack.c.b16 %v507, %v506
    %v546 = vpack.c.b16 %v509, %v508
    %v547 = vpack.c.b16 %v511, %v510
    %v548 = vpack.c.b16 %v513, %v512
    %v549 = vpack.c.b16 %v515, %v514
    %v550 = vpack.c.b16 %v517, %v516
    %v551 = vpack.c.b16 %v519, %v518
    %584 = vmatpush.bf16.msra.mxu0 %v527
    %585 = vmatpush.bf16.msra.mxu0 %v526
    %586 = vmatpush.bf16.msra.mxu0 %v525
    %587 = vmatpush.bf16.msra.mxu0 %v524
    %588 = vmatpush.bf16.msra.mxu0 %v523
    %589 = vmatpush.bf16.msra.mxu0 %v522
    %590 = vmatpush.bf16.msra.mxu0 %v521
    %591 = vmatpush.bf16.msra.mxu0 %v520
    %592 = vmatmul.bf16.gmra.mxu0 %v324
    %v593 = vpop.f32.mrf.mxu0
    %v594 = vadd.f32 0.0, %v593
    %v595 = vpop.f32.mrf.mxu0
    %596 = vdwg.mxu0
    %597 = vmatpush.bf16.msra.mxu0 %v535
    %598 = vmatpush.bf16.msra.mxu0 %v534
    %599 = vmatpush.bf16.msra.mxu0 %v533
    %600 = vmatpush.bf16.msra.mxu0 %v532
    %601 = vmatpush.bf16.msra.mxu0 %v531
    %602 = vmatpush.bf16.msra.mxu0 %v530
    %603 = vmatpush.bf16.msra.mxu0 %v529
    %604 = vmatpush.bf16.msra.mxu0 %v528
    %605 = vmatmul.bf16.gmra.mxu0 %v325
    %v606 = vpop.f32.mrf.mxu0
    %v607 = vadd.f32 %v594, %v606
    %v608 = vpop.f32.mrf.mxu0
    %609 = vdwg.mxu0
    %610 = vmatpush.bf16.msra.mxu0 %v543
    %611 = vmatpush.bf16.msra.mxu0 %v542
    %612 = vmatpush.bf16.msra.mxu0 %v541
    %613 = vmatpush.bf16.msra.mxu0 %v540
    %614 = vmatpush.bf16.msra.mxu0 %v539
    %615 = vmatpush.bf16.msra.mxu0 %v538
    %616 = vmatpush.bf16.msra.mxu0 %v537
    %617 = vmatpush.bf16.msra.mxu0 %v536
    %618 = vmatmul.bf16.gmra.mxu0 %v326
    %v619 = vpop.f32.mrf.mxu0
    %v620 = vadd.f32 %v607, %v619
    %v621 = vpop.f32.mrf.mxu0
    %622 = vdwg.mxu0
    %623 = vmatpush.bf16.msra.mxu0 %v551
    %624 = vmatpush.bf16.msra.mxu0 %v550
    %625 = vmatpush.bf16.msra.mxu0 %v549
    %626 = vmatpush.bf16.msra.mxu0 %v548
    %627 = vmatpush.bf16.msra.mxu0 %v547
    %628 = vmatpush.bf16.msra.mxu0 %v546
    %629 = vmatpush.bf16.msra.mxu0 %v545
    %630 = vmatpush.bf16.msra.mxu0 %v544
    %631 = vmatmul.bf16.gmra.mxu0 %v327
    %v632 = vpop.f32.mrf.mxu0
    %v633 = vadd.f32 %v620, %v632
    %v634 = vpop.f32.mrf.mxu0
    %635 = vdwg.mxu0
    %v636 = vadd.f32 %v323, %v633
    %637 = vst [vmem:[#allocation2] sm:$0xff] %v636
    // Predicated region
    $region42: #{transformer_forward.31} parent=1 // pred_check
      %p638 = pneg %p59
    $region43: #{transformer_forward.31} parent=1 // pred_check_branch
      %640 = sbr.rel (%p638) target = $region45
    $region44: #{transformer_forward.31} parent=1 // pred_region
      %v641 = vld [vmem:[#allocation2] sm:$0xff]
      %v642 = vld [vmem:[%s4] sm:$0x1]
      %v644 = vperm.slane %v642, 0
      %v646 = vadd.f32 %v641, %v644
      %v647 = vld [vmem:[%s0] sm:$0xf]
      %v648 = vunpack.c.l.bf16 %v647
      %v649 = vadd.f32 %v646, %v648
      %650 = vadd.xlane.f32.xlu0 %v649
      %v651 = vpop.xlane.xlu0 %650
      %v652 = vrcp.pop 128.0
      %v653 = vmul.f32 128.0, %v652
      %v654 = vsub.f32 1.0, %v653
      %v655 = vmul.f32 %v652, %v654
      %v656 = vadd.f32 %v652, %v655
      %vm657 = vweird.f32 %v652
      %v658 = vsel %vm657, %v652, %v656
      %v659 = vmul.f32 %v651, %v658
      %v660 = vsub.f32 %v649, %v659
      %v661 = vmul.f32 %v660, %v660
      %662 = vadd.xlane.f32.xlu0 %v661
      %v663 = vpop.xlane.xlu0 %662
      %v664 = vmul.f32 %v663, %v658
      %v665 = vadd.f32 %v664, 1e-05
      %v666 = vrsqrt.pop %v665
      %v667 = vmul.f32 %v666, %v665
      %v668 = vmul.f32 %v667, %v666
      %v669 = vmul.f32 0.5, %v668
      %v670 = vsub.f32 1.5, %v669
      %v671 = vmul.f32 %v666, %v670
      %vm672 = vweird.f32 %v665
      %vm673 = vweird.f32 %v666
      %vm674 = vmor %vm672, %vm673
      %v675 = vsel %vm674, %v666, %v671
      %v676 = vmul.f32 %v660, %v675
      %v677 = vld [vmem:[%s5] sm:$0x1]
      %v679 = vperm.slane %v677, 0
      %v681 = vmul.f32 %v676, %v679
      %v682 = vld [vmem:[%s6] sm:$0x1]
      %v684 = vperm.slane %v682, 0
      %v686 = vadd.f32 %v681, %v684
      %v687 = vpack.c.bf16 %v686, %v686
      %688 = vst [vmem:[#allocation8] sm:$0xf] %v687
    $region45: #{transformer_forward.31} parent=1 // pred_fallthru
      _
    // Predicated region
    $region46: #{transformer_forward.31} parent=1 // pred_check
      _
    $region47: #{transformer_forward.31} parent=1 // pred_check_branch
      %690 = sbr.rel (0) target = $region49
    $region48: #{transformer_forward.31} parent=1 // pred_region
      %692 = vsyncadd [#allocation5], 0
      %s694 = sshll.u32 [#allocation8], 4
      %s695 = int_to_ptr.vmem [resolvable:$true] %s694
      %s696 = sshll.u32 %s7, 4
      %s697 = int_to_ptr.hbm [resolvable:$true] %s696
      %699 = dma.vmem_to_hbm [thread:$0]  %s695, 64, %s697, [#allocation5]
    $region49: #{transformer_forward.31} parent=1 // pred_fallthru
      _
    // Predicated region
    $region50: #{transformer_forward.31} parent=1 // pred_check
      _
    $region51: #{transformer_forward.31} parent=1 // pred_check_branch
      %701 = sbr.rel (0) target = $region53
    $region52: #{transformer_forward.31} parent=1 // pred_region
      %703 = dma.done [#allocation5], 64
    $region53: #{transformer_forward.31} parent=1 // pred_fallthru
      _
    %704 = vsyncpa [#allocation4], 1
    %705 = vsyncpa [#allocation7], 1
    %706 = vsyncpa [#allocation5], 1

// kernel: transformer_forward.26
$region0: #{transformer_forward.26}
  #allocation0 [shape = 'u32[]', space=smem, size = 0x4, offset = 0x4, fixed_abs, tag = 'smem constant byte address 0x4 - core index']
  #allocation1 [shape = 'u32[72,128]{1,0:T(1,128)}', space=vmem, size = 0x9000, scoped, tag = 'internal scratch']
  #allocation2 [shape = 'f32[8,128]{1,0:T(8,128)}', space=vmem, size = 0x1000, scoped, tag = 'scratch operand']
  %s0 = inlined_call_operand.vmem [shape: bf16[8,128], index: 0, kind: input, shape index: {}]
  %s1 = inlined_call_operand.hbm [shape: bf16[128,512], index: 1, kind: input, shape index: {}]
  %s2 = inlined_call_operand.vmem [shape: f32[1,512], index: 2, kind: input, shape index: {}]
  %s3 = inlined_call_operand.hbm [shape: bf16[512,128], index: 3, kind: input, shape index: {}]
  %s4 = inlined_call_operand.vmem [shape: f32[1,128], index: 4, kind: input, shape index: {}]
  %s5 = inlined_call_operand.vmem [shape: f32[1,128], index: 5, kind: input, shape index: {}]
  %s6 = inlined_call_operand.vmem [shape: f32[1,128], index: 6, kind: input, shape index: {}]
  %s7 = inlined_call_operand.vmem [shape: bf16[8,128], index: 7, kind: output, shape index: {}]
  %s8 = sld [smem:[#allocation0]]
  $region54: #{transformer_forward.26} parent=0
    _
  %s10 = ssub.s32 1, %s8
  %s11 = scalar_select 0, %s10, %s8
  $region1: #{transformer_forward.26} parent=0
    #allocation3 [shape = 'u8[131072]{0}', space=vmem, size = 0x20000, scoped, tag = 'input window, operand 1, single buffered']
    #allocation4 [shape = 's32[1]{0}', space=sflag, size = 0x4, scoped, tag = 'scoped memory for transformer_forward.26']
    #allocation5 [shape = 'u8[131072]{0}', space=vmem, size = 0x20000, scoped, tag = 'input window, operand 3, single buffered']
    #allocation6 [shape = 's32[1]{0}', space=sflag, size = 0x4, scoped, tag = 'scoped memory for transformer_forward.26']
    %12 = vsyncpa [#allocation4], 0
    %13 = vsyncpa [#allocation6], 0
    // Predicated region
    $region2: #{transformer_forward.26} parent=1 // pred_check
      _
    $region3: #{transformer_forward.26} parent=1 // pred_check_branch
      %15 = sbr.rel (0) target = $region5
    $region4: #{transformer_forward.26} parent=1 // pred_region
      _
    $region5: #{transformer_forward.26} parent=1 // pred_fallthru
      _
    // Predicated region
    $region6: #{transformer_forward.26} parent=1 // pred_check
      _
    $region7: #{transformer_forward.26} parent=1 // pred_check_branch
      %17 = sbr.rel (0) target = $region9
    $region8: #{transformer_forward.26} parent=1 // pred_region
      %19 = vsyncadd [#allocation4], 0
      %s20 = sshll.u32 %s1, 4
      %s21 = int_to_ptr.hbm [resolvable:$true] %s20
      %s22 = sshll.u32 [#allocation3], 4
      %s23 = int_to_ptr.vmem [resolvable:$true] %s22
      %28 = dma.hbm_to_vmem [thread:$0]  %s21, 4096, %s23, [#allocation4], 256, 256, 16
    $region9: #{transformer_forward.26} parent=1 // pred_fallthru
      _
    // Predicated region
    $region10: #{transformer_forward.26} parent=1 // pred_check
      _
    $region11: #{transformer_forward.26} parent=1 // pred_check_branch
      %30 = sbr.rel (0) target = $region13
    $region12: #{transformer_forward.26} parent=1 // pred_region
      _
    $region13: #{transformer_forward.26} parent=1 // pred_fallthru
      _
    // Predicated region
    $region14: #{transformer_forward.26} parent=1 // pred_check
      _
    $region15: #{transformer_forward.26} parent=1 // pred_check_branch
      %32 = sbr.rel (0) target = $region17
    $region16: #{transformer_forward.26} parent=1 // pred_region
      %34 = vsyncadd [#allocation6], 0
      %s35 = sshll.u32 %s3, 4
      %s36 = int_to_ptr.hbm [resolvable:$true] %s35
      %s37 = sshll.u32 [#allocation5], 4
      %s38 = int_to_ptr.vmem [resolvable:$true] %s37
      %43 = dma.hbm_to_vmem [thread:$0]  %s36, 4096, %s38, [#allocation6], 64, 64, 4
    $region17: #{transformer_forward.26} parent=1 // pred_fallthru
      _
    // Predicated region
    $region18: #{transformer_forward.26} parent=1 // pred_check
      _
    $region19: #{transformer_forward.26} parent=1 // pred_check_branch
      %45 = sbr.rel (0) target = $region21
    $region20: #{transformer_forward.26} parent=1 // pred_region
      _
    $region21: #{transformer_forward.26} parent=1 // pred_fallthru
      _
    // Predicated region
    $region22: #{transformer_forward.26} parent=1 // pred_check
      _
    $region23: #{transformer_forward.26} parent=1 // pred_check_branch
      %47 = sbr.rel (0) target = $region25
    $region24: #{transformer_forward.26} parent=1 // pred_region
      _
    $region25: #{transformer_forward.26} parent=1 // pred_fallthru
      _
    // Predicated region
    $region26: #{transformer_forward.26} parent=1 // pred_check
      _
    $region27: #{transformer_forward.26} parent=1 // pred_check_branch
      %49 = sbr.rel (0) target = $region29
    $region28: #{transformer_forward.26} parent=1 // pred_region
      _
    $region29: #{transformer_forward.26} parent=1 // pred_fallthru
      _
    // Predicated region
    $region30: #{transformer_forward.26} parent=1 // pred_check
      _
    $region31: #{transformer_forward.26} parent=1 // pred_check_branch
      %51 = sbr.rel (0) target = $region33
    $region32: #{transformer_forward.26} parent=1 // pred_region
      %53 = dma.done [#allocation4], 4096
    $region33: #{transformer_forward.26} parent=1 // pred_fallthru
      _
    // Predicated region
    $region34: #{transformer_forward.26} parent=1 // pred_check
      _
    $region35: #{transformer_forward.26} parent=1 // pred_check_branch
      %55 = sbr.rel (0) target = $region37
    $region36: #{transformer_forward.26} parent=1 // pred_region
      %57 = dma.done [#allocation6], 4096
    $region37: #{transformer_forward.26} parent=1 // pred_fallthru
      _
    %p58 = scmp.eq.s32.totalorder 0, 0
    // Predicated region
    $region38: #{transformer_forward.26} parent=1 // pred_check
      %p59 = pneg %p58
    $region39: #{transformer_forward.26} parent=1 // pred_check_branch
      %61 = sbr.rel (%p59) target = $region41
    $region40: #{transformer_forward.26} parent=1 // pred_region
      %62 = vst [vmem:[#allocation2] sm:$0xff] 0.0
    $region41: #{transformer_forward.26} parent=1 // pred_fallthru
      _
    %v63 = vld [vmem:[%s0] sm:$0xf]
    %v64 = vld [vmem:[#allocation3] sm:$0xff]
    %v65 = vld [vmem:[#allocation3 + $0x8] sm:$0xff]
    %v66 = vld [vmem:[#allocation3 + $0x10] sm:$0xff]
    %v67 = vld [vmem:[#allocation3 + $0x18] sm:$0xff]
    %v68 = vld [vmem:[#allocation3 + $0x20] sm:$0xff]
    %v69 = vld [vmem:[#allocation3 + $0x28] sm:$0xff]
    %v70 = vld [vmem:[#allocation3 + $0x30] sm:$0xff]
    %v71 = vld [vmem:[#allocation3 + $0x38] sm:$0xff]
    %v72 = vld [vmem:[#allocation3 + $0x40] sm:$0xff]
    %v73 = vld [vmem:[#allocation3 + $0x48] sm:$0xff]
    %v74 = vld [vmem:[#allocation3 + $0x50] sm:$0xff]
    %v75 = vld [vmem:[#allocation3 + $0x58] sm:$0xff]
    %v76 = vld [vmem:[#allocation3 + $0x60] sm:$0xff]
    %v77 = vld [vmem:[#allocation3 + $0x68] sm:$0xff]
    %v78 = vld [vmem:[#allocation3 + $0x70] sm:$0xff]
    %v79 = vld [vmem:[#allocation3 + $0x78] sm:$0xff]
    %v80 = vld [vmem:[#allocation3 + $0x80] sm:$0xff]
    %v81 = vld [vmem:[#allocation3 + $0x88] sm:$0xff]
    %v82 = vld [vmem:[#allocation3 + $0x90] sm:$0xff]
    %v83 = vld [vmem:[#allocation3 + $0x98] sm:$0xff]
    %v84 = vld [vmem:[#allocation3 + $0xa0] sm:$0xff]
    %v85 = vld [vmem:[#allocation3 + $0xa8] sm:$0xff]
    %v86 = vld [vmem:[#allocation3 + $0xb0] sm:$0xff]
    %v87 = vld [vmem:[#allocation3 + $0xb8] sm:$0xff]
    %v88 = vld [vmem:[#allocation3 + $0xc0] sm:$0xff]
    %v89 = vld [vmem:[#allocation3 + $0xc8] sm:$0xff]
    %v90 = vld [vmem:[#allocation3 + $0xd0] sm:$0xff]
    %v91 = vld [vmem:[#allocation3 + $0xd8] sm:$0xff]
    %v92 = vld [vmem:[#allocation3 + $0xe0] sm:$0xff]
    %v93 = vld [vmem:[#allocation3 + $0xe8] sm:$0xff]
    %v94 = vld [vmem:[#allocation3 + $0xf0] sm:$0xff]
    %v95 = vld [vmem:[#allocation3 + $0xf8] sm:$0xff]
    %v96 = vld [vmem:[%s2] sm:$0xf]
    %v98 = vperm.slane %v96, 0
    %v99 = vperm.slane %v96, 1
    %v100 = vperm.slane %v96, 2
    %v101 = vperm.slane %v96, 3
    %v138 = vunpack.c.l.b16 %v64
    %v139 = vunpack.c.h.b16 %v64
    %v140 = vunpack.c.l.b16 %v65
    %v141 = vunpack.c.h.b16 %v65
    %v142 = vunpack.c.l.b16 %v66
    %v143 = vunpack.c.h.b16 %v66
    %v144 = vunpack.c.l.b16 %v67
    %v145 = vunpack.c.h.b16 %v67
    %v146 = vunpack.c.l.b16 %v68
    %v147 = vunpack.c.h.b16 %v68
    %v148 = vunpack.c.l.b16 %v69
    %v149 = vunpack.c.h.b16 %v69
    %v150 = vunpack.c.l.b16 %v70
    %v151 = vunpack.c.h.b16 %v70
    %v152 = vunpack.c.l.b16 %v71
    %v153 = vunpack.c.h.b16 %v71
    %v154 = vunpack.c.l.b16 %v72
    %v155 = vunpack.c.h.b16 %v72
    %v156 = vunpack.c.l.b16 %v73
    %v157 = vunpack.c.h.b16 %v73
    %v158 = vunpack.c.l.b16 %v74
    %v159 = vunpack.c.h.b16 %v74
    %v160 = vunpack.c.l.b16 %v75
    %v161 = vunpack.c.h.b16 %v75
    %v162 = vunpack.c.l.b16 %v76
    %v163 = vunpack.c.h.b16 %v76
    %v164 = vunpack.c.l.b16 %v77
    %v165 = vunpack.c.h.b16 %v77
    %v166 = vunpack.c.l.b16 %v78
    %v167 = vunpack.c.h.b16 %v78
    %v168 = vunpack.c.l.b16 %v79
    %v169 = vunpack.c.h.b16 %v79
    %v170 = vunpack.c.l.b16 %v80
    %v171 = vunpack.c.h.b16 %v80
    %v172 = vunpack.c.l.b16 %v81
    %v173 = vunpack.c.h.b16 %v81
    %v174 = vunpack.c.l.b16 %v82
    %v175 = vunpack.c.h.b16 %v82
    %v176 = vunpack.c.l.b16 %v83
    %v177 = vunpack.c.h.b16 %v83
    %v178 = vunpack.c.l.b16 %v84
    %v179 = vunpack.c.h.b16 %v84
    %v180 = vunpack.c.l.b16 %v85
    %v181 = vunpack.c.h.b16 %v85
    %v182 = vunpack.c.l.b16 %v86
    %v183 = vunpack.c.h.b16 %v86
    %v184 = vunpack.c.l.b16 %v87
    %v185 = vunpack.c.h.b16 %v87
    %v186 = vunpack.c.l.b16 %v88
    %v187 = vunpack.c.h.b16 %v88
    %v188 = vunpack.c.l.b16 %v89
    %v189 = vunpack.c.h.b16 %v89
    %v190 = vunpack.c.l.b16 %v90
    %v191 = vunpack.c.h.b16 %v90
    %v192 = vunpack.c.l.b16 %v91
    %v193 = vunpack.c.h.b16 %v91
    %v194 = vunpack.c.l.b16 %v92
    %v195 = vunpack.c.h.b16 %v92
    %v196 = vunpack.c.l.b16 %v93
    %v197 = vunpack.c.h.b16 %v93
    %v198 = vunpack.c.l.b16 %v94
    %v199 = vunpack.c.h.b16 %v94
    %v200 = vunpack.c.l.b16 %v95
    %v201 = vunpack.c.h.b16 %v95
    %v202 = vpack.c.b16 %v142, %v138
    %v203 = vpack.c.b16 %v143, %v139
    %v204 = vpack.c.b16 %v144, %v140
    %v205 = vpack.c.b16 %v145, %v141
    %v206 = vpack.c.b16 %v150, %v146
    %v207 = vpack.c.b16 %v151, %v147
    %v208 = vpack.c.b16 %v152, %v148
    %v209 = vpack.c.b16 %v153, %v149
    %v210 = vpack.c.b16 %v158, %v154
    %v211 = vpack.c.b16 %v159, %v155
    %v212 = vpack.c.b16 %v160, %v156
    %v213 = vpack.c.b16 %v161, %v157
    %v214 = vpack.c.b16 %v166, %v162
    %v215 = vpack.c.b16 %v167, %v163
    %v216 = vpack.c.b16 %v168, %v164
    %v217 = vpack.c.b16 %v169, %v165
    %v218 = vpack.c.b16 %v174, %v170
    %v219 = vpack.c.b16 %v175, %v171
    %v220 = vpack.c.b16 %v176, %v172
    %v221 = vpack.c.b16 %v177, %v173
    %v222 = vpack.c.b16 %v182, %v178
    %v223 = vpack.c.b16 %v183, %v179
    %v224 = vpack.c.b16 %v184, %v180
    %v225 = vpack.c.b16 %v185, %v181
    %v226 = vpack.c.b16 %v190, %v186
    %v227 = vpack.c.b16 %v191, %v187
    %v228 = vpack.c.b16 %v192, %v188
    %v229 = vpack.c.b16 %v193, %v189
    %v230 = vpack.c.b16 %v198, %v194
    %v231 = vpack.c.b16 %v199, %v195
    %v232 = vpack.c.b16 %v200, %v196
    %v233 = vpack.c.b16 %v201, %v197
    %266 = vmatpush.bf16.msra.mxu0 %v230
    %267 = vmatpush.bf16.msra.mxu0 %v226
    %268 = vmatpush.bf16.msra.mxu0 %v222
    %269 = vmatpush.bf16.msra.mxu0 %v218
    %270 = vmatpush.bf16.msra.mxu0 %v214
    %271 = vmatpush.bf16.msra.mxu0 %v210
    %272 = vmatpush.bf16.msra.mxu0 %v206
    %273 = vmatpush.bf16.msra.mxu0 %v202
    %274 = vmatmul.bf16.gmra.mxu0 %v63
    %v275 = vpop.f32.mrf.mxu0
    %v276 = vadd.f32 %v98, %v275
    %v277 = vpop.f32.mrf.mxu0
    %278 = vdwg.mxu0
    %279 = vmatpush.bf16.msra.mxu0 %v231
    %280 = vmatpush.bf16.msra.mxu0 %v227
    %281 = vmatpush.bf16.msra.mxu0 %v223
    %282 = vmatpush.bf16.msra.mxu0 %v219
    %283 = vmatpush.bf16.msra.mxu0 %v215
    %284 = vmatpush.bf16.msra.mxu0 %v211
    %285 = vmatpush.bf16.msra.mxu0 %v207
    %286 = vmatpush.bf16.msra.mxu0 %v203
    %287 = vmatmul.bf16.gmra.mxu0 %v63
    %v288 = vpop.f32.mrf.mxu0
    %v289 = vadd.f32 %v99, %v288
    %v290 = vpop.f32.mrf.mxu0
    %291 = vdwg.mxu0
    %292 = vmatpush.bf16.msra.mxu0 %v232
    %293 = vmatpush.bf16.msra.mxu0 %v228
    %294 = vmatpush.bf16.msra.mxu0 %v224
    %295 = vmatpush.bf16.msra.mxu0 %v220
    %296 = vmatpush.bf16.msra.mxu0 %v216
    %297 = vmatpush.bf16.msra.mxu0 %v212
    %298 = vmatpush.bf16.msra.mxu0 %v208
    %299 = vmatpush.bf16.msra.mxu0 %v204
    %300 = vmatmul.bf16.gmra.mxu0 %v63
    %v301 = vpop.f32.mrf.mxu0
    %v302 = vadd.f32 %v100, %v301
    %v303 = vpop.f32.mrf.mxu0
    %304 = vdwg.mxu0
    %305 = vmatpush.bf16.msra.mxu0 %v233
    %306 = vmatpush.bf16.msra.mxu0 %v229
    %307 = vmatpush.bf16.msra.mxu0 %v225
    %308 = vmatpush.bf16.msra.mxu0 %v221
    %309 = vmatpush.bf16.msra.mxu0 %v217
    %310 = vmatpush.bf16.msra.mxu0 %v213
    %311 = vmatpush.bf16.msra.mxu0 %v209
    %312 = vmatpush.bf16.msra.mxu0 %v205
    %313 = vmatmul.bf16.gmra.mxu0 %v63
    %v314 = vpop.f32.mrf.mxu0
    %v315 = vadd.f32 %v101, %v314
    %v316 = vpop.f32.mrf.mxu0
    %317 = vdwg.mxu0
    %v318 = vmax.f32 %v276, 0.0
    %v319 = vmax.f32 %v289, 0.0
    %v320 = vmax.f32 %v302, 0.0
    %v321 = vmax.f32 %v315, 0.0
    %v322 = vld [vmem:[#allocation2] sm:$0xff]
    %v323 = vpack.c.bf16 %v318, %v318
    %v324 = vpack.c.bf16 %v319, %v319
    %v325 = vpack.c.bf16 %v320, %v320
    %v326 = vpack.c.bf16 %v321, %v321
    %v327 = vld [vmem:[#allocation5] sm:$0xf]
    %v328 = vld [vmem:[#allocation5 + $0x4] sm:$0xf]
    %v329 = vld [vmem:[#allocation5 + $0x8] sm:$0xf]
    %v330 = vld [vmem:[#allocation5 + $0xc] sm:$0xf]
    %v331 = vld [vmem:[#allocation5 + $0x10] sm:$0xf]
    %v332 = vld [vmem:[#allocation5 + $0x14] sm:$0xf]
    %v333 = vld [vmem:[#allocation5 + $0x18] sm:$0xf]
    %v334 = vld [vmem:[#allocation5 + $0x1c] sm:$0xf]
    %v335 = vld [vmem:[#allocation5 + $0x20] sm:$0xf]
    %v336 = vld [vmem:[#allocation5 + $0x24] sm:$0xf]
    %v337 = vld [vmem:[#allocation5 + $0x28] sm:$0xf]
    %v338 = vld [vmem:[#allocation5 + $0x2c] sm:$0xf]
    %v339 = vld [vmem:[#allocation5 + $0x30] sm:$0xf]
    %v340 = vld [vmem:[#allocation5 + $0x34] sm:$0xf]
    %v341 = vld [vmem:[#allocation5 + $0x38] sm:$0xf]
    %v342 = vld [vmem:[#allocation5 + $0x3c] sm:$0xf]
    %v343 = vld [vmem:[#allocation5 + $0x40] sm:$0xf]
    %v344 = vld [vmem:[#allocation5 + $0x44] sm:$0xf]
    %v345 = vld [vmem:[#allocation5 + $0x48] sm:$0xf]
    %v346 = vld [vmem:[#allocation5 + $0x4c] sm:$0xf]
    %v347 = vld [vmem:[#allocation5 + $0x50] sm:$0xf]
    %v348 = vld [vmem:[#allocation5 + $0x54] sm:$0xf]
    %v349 = vld [vmem:[#allocation5 + $0x58] sm:$0xf]
    %v350 = vld [vmem:[#allocation5 + $0x5c] sm:$0xf]
    %v351 = vld [vmem:[#allocation5 + $0x60] sm:$0xf]
    %v352 = vld [vmem:[#allocation5 + $0x64] sm:$0xf]
    %v353 = vld [vmem:[#allocation5 + $0x68] sm:$0xf]
    %v354 = vld [vmem:[#allocation5 + $0x6c] sm:$0xf]
    %v355 = vld [vmem:[#allocation5 + $0x70] sm:$0xf]
    %v356 = vld [vmem:[#allocation5 + $0x74] sm:$0xf]
    %v357 = vld [vmem:[#allocation5 + $0x78] sm:$0xf]
    %v358 = vld [vmem:[#allocation5 + $0x7c] sm:$0xf]
    %v359 = vld [vmem:[#allocation5 + $0x80] sm:$0xf]
    %v360 = vld [vmem:[#allocation5 + $0x84] sm:$0xf]
    %v361 = vld [vmem:[#allocation5 + $0x88] sm:$0xf]
    %v362 = vld [vmem:[#allocation5 + $0x8c] sm:$0xf]
    %v363 = vld [vmem:[#allocation5 + $0x90] sm:$0xf]
    %v364 = vld [vmem:[#allocation5 + $0x94] sm:$0xf]
    %v365 = vld [vmem:[#allocation5 + $0x98] sm:$0xf]
    %v366 = vld [vmem:[#allocation5 + $0x9c] sm:$0xf]
    %v367 = vld [vmem:[#allocation5 + $0xa0] sm:$0xf]
    %v368 = vld [vmem:[#allocation5 + $0xa4] sm:$0xf]
    %v369 = vld [vmem:[#allocation5 + $0xa8] sm:$0xf]
    %v370 = vld [vmem:[#allocation5 + $0xac] sm:$0xf]
    %v371 = vld [vmem:[#allocation5 + $0xb0] sm:$0xf]
    %v372 = vld [vmem:[#allocation5 + $0xb4] sm:$0xf]
    %v373 = vld [vmem:[#allocation5 + $0xb8] sm:$0xf]
    %v374 = vld [vmem:[#allocation5 + $0xbc] sm:$0xf]
    %v375 = vld [vmem:[#allocation5 + $0xc0] sm:$0xf]
    %v376 = vld [vmem:[#allocation5 + $0xc4] sm:$0xf]
    %v377 = vld [vmem:[#allocation5 + $0xc8] sm:$0xf]
    %v378 = vld [vmem:[#allocation5 + $0xcc] sm:$0xf]
    %v379 = vld [vmem:[#allocation5 + $0xd0] sm:$0xf]
    %v380 = vld [vmem:[#allocation5 + $0xd4] sm:$0xf]
    %v381 = vld [vmem:[#allocation5 + $0xd8] sm:$0xf]
    %v382 = vld [vmem:[#allocation5 + $0xdc] sm:$0xf]
    %v383 = vld [vmem:[#allocation5 + $0xe0] sm:$0xf]
    %v384 = vld [vmem:[#allocation5 + $0xe4] sm:$0xf]
    %v385 = vld [vmem:[#allocation5 + $0xe8] sm:$0xf]
    %v386 = vld [vmem:[#allocation5 + $0xec] sm:$0xf]
    %v387 = vld [vmem:[#allocation5 + $0xf0] sm:$0xf]
    %v388 = vld [vmem:[#allocation5 + $0xf4] sm:$0xf]
    %v389 = vld [vmem:[#allocation5 + $0xf8] sm:$0xf]
    %v390 = vld [vmem:[#allocation5 + $0xfc] sm:$0xf]
    %v455 = vunpack.c.l.b16 %v327
    %v456 = vunpack.c.l.b16 %v328
    %v457 = vunpack.c.l.b16 %v329
    %v458 = vunpack.c.l.b16 %v330
    %v459 = vunpack.c.l.b16 %v331
    %v460 = vunpack.c.l.b16 %v332
    %v461 = vunpack.c.l.b16 %v333
    %v462 = vunpack.c.l.b16 %v334
    %v463 = vunpack.c.l.b16 %v335
    %v464 = vunpack.c.l.b16 %v336
    %v465 = vunpack.c.l.b16 %v337
    %v466 = vunpack.c.l.b16 %v338
    %v467 = vunpack.c.l.b16 %v339
    %v468 = vunpack.c.l.b16 %v340
    %v469 = vunpack.c.l.b16 %v341
    %v470 = vunpack.c.l.b16 %v342
    %v471 = vunpack.c.l.b16 %v343
    %v472 = vunpack.c.l.b16 %v344
    %v473 = vunpack.c.l.b16 %v345
    %v474 = vunpack.c.l.b16 %v346
    %v475 = vunpack.c.l.b16 %v347
    %v476 = vunpack.c.l.b16 %v348
    %v477 = vunpack.c.l.b16 %v349
    %v478 = vunpack.c.l.b16 %v350
    %v479 = vunpack.c.l.b16 %v351
    %v480 = vunpack.c.l.b16 %v352
    %v481 = vunpack.c.l.b16 %v353
    %v482 = vunpack.c.l.b16 %v354
    %v483 = vunpack.c.l.b16 %v355
    %v484 = vunpack.c.l.b16 %v356
    %v485 = vunpack.c.l.b16 %v357
    %v486 = vunpack.c.l.b16 %v358
    %v487 = vunpack.c.l.b16 %v359
    %v488 = vunpack.c.l.b16 %v360
    %v489 = vunpack.c.l.b16 %v361
    %v490 = vunpack.c.l.b16 %v362
    %v491 = vunpack.c.l.b16 %v363
    %v492 = vunpack.c.l.b16 %v364
    %v493 = vunpack.c.l.b16 %v365
    %v494 = vunpack.c.l.b16 %v366
    %v495 = vunpack.c.l.b16 %v367
    %v496 = vunpack.c.l.b16 %v368
    %v497 = vunpack.c.l.b16 %v369
    %v498 = vunpack.c.l.b16 %v370
    %v499 = vunpack.c.l.b16 %v371
    %v500 = vunpack.c.l.b16 %v372
    %v501 = vunpack.c.l.b16 %v373
    %v502 = vunpack.c.l.b16 %v374
    %v503 = vunpack.c.l.b16 %v375
    %v504 = vunpack.c.l.b16 %v376
    %v505 = vunpack.c.l.b16 %v377
    %v506 = vunpack.c.l.b16 %v378
    %v507 = vunpack.c.l.b16 %v379
    %v508 = vunpack.c.l.b16 %v380
    %v509 = vunpack.c.l.b16 %v381
    %v510 = vunpack.c.l.b16 %v382
    %v511 = vunpack.c.l.b16 %v383
    %v512 = vunpack.c.l.b16 %v384
    %v513 = vunpack.c.l.b16 %v385
    %v514 = vunpack.c.l.b16 %v386
    %v515 = vunpack.c.l.b16 %v387
    %v516 = vunpack.c.l.b16 %v388
    %v517 = vunpack.c.l.b16 %v389
    %v518 = vunpack.c.l.b16 %v390
    %v519 = vpack.c.b16 %v456, %v455
    %v520 = vpack.c.b16 %v458, %v457
    %v521 = vpack.c.b16 %v460, %v459
    %v522 = vpack.c.b16 %v462, %v461
    %v523 = vpack.c.b16 %v464, %v463
    %v524 = vpack.c.b16 %v466, %v465
    %v525 = vpack.c.b16 %v468, %v467
    %v526 = vpack.c.b16 %v470, %v469
    %v527 = vpack.c.b16 %v472, %v471
    %v528 = vpack.c.b16 %v474, %v473
    %v529 = vpack.c.b16 %v476, %v475
    %v530 = vpack.c.b16 %v478, %v477
    %v531 = vpack.c.b16 %v480, %v479
    %v532 = vpack.c.b16 %v482, %v481
    %v533 = vpack.c.b16 %v484, %v483
    %v534 = vpack.c.b16 %v486, %v485
    %v535 = vpack.c.b16 %v488, %v487
    %v536 = vpack.c.b16 %v490, %v489
    %v537 = vpack.c.b16 %v492, %v491
    %v538 = vpack.c.b16 %v494, %v493
    %v539 = vpack.c.b16 %v496, %v495
    %v540 = vpack.c.b16 %v498, %v497
    %v541 = vpack.c.b16 %v500, %v499
    %v542 = vpack.c.b16 %v502, %v501
    %v543 = vpack.c.b16 %v504, %v503
    %v544 = vpack.c.b16 %v506, %v505
    %v545 = vpack.c.b16 %v508, %v507
    %v546 = vpack.c.b16 %v510, %v509
    %v547 = vpack.c.b16 %v512, %v511
    %v548 = vpack.c.b16 %v514, %v513
    %v549 = vpack.c.b16 %v516, %v515
    %v550 = vpack.c.b16 %v518, %v517
    %583 = vmatpush.bf16.msra.mxu0 %v526
    %584 = vmatpush.bf16.msra.mxu0 %v525
    %585 = vmatpush.bf16.msra.mxu0 %v524
    %586 = vmatpush.bf16.msra.mxu0 %v523
    %587 = vmatpush.bf16.msra.mxu0 %v522
    %588 = vmatpush.bf16.msra.mxu0 %v521
    %589 = vmatpush.bf16.msra.mxu0 %v520
    %590 = vmatpush.bf16.msra.mxu0 %v519
    %591 = vmatmul.bf16.gmra.mxu0 %v323
    %v592 = vpop.f32.mrf.mxu0
    %v593 = vadd.f32 0.0, %v592
    %v594 = vpop.f32.mrf.mxu0
    %595 = vdwg.mxu0
    %596 = vmatpush.bf16.msra.mxu0 %v534
    %597 = vmatpush.bf16.msra.mxu0 %v533
    %598 = vmatpush.bf16.msra.mxu0 %v532
    %599 = vmatpush.bf16.msra.mxu0 %v531
    %600 = vmatpush.bf16.msra.mxu0 %v530
    %601 = vmatpush.bf16.msra.mxu0 %v529
    %602 = vmatpush.bf16.msra.mxu0 %v528
    %603 = vmatpush.bf16.msra.mxu0 %v527
    %604 = vmatmul.bf16.gmra.mxu0 %v324
    %v605 = vpop.f32.mrf.mxu0
    %v606 = vadd.f32 %v593, %v605
    %v607 = vpop.f32.mrf.mxu0
    %608 = vdwg.mxu0
    %609 = vmatpush.bf16.msra.mxu0 %v542
    %610 = vmatpush.bf16.msra.mxu0 %v541
    %611 = vmatpush.bf16.msra.mxu0 %v540
    %612 = vmatpush.bf16.msra.mxu0 %v539
    %613 = vmatpush.bf16.msra.mxu0 %v538
    %614 = vmatpush.bf16.msra.mxu0 %v537
    %615 = vmatpush.bf16.msra.mxu0 %v536
    %616 = vmatpush.bf16.msra.mxu0 %v535
    %617 = vmatmul.bf16.gmra.mxu0 %v325
    %v618 = vpop.f32.mrf.mxu0
    %v619 = vadd.f32 %v606, %v618
    %v620 = vpop.f32.mrf.mxu0
    %621 = vdwg.mxu0
    %622 = vmatpush.bf16.msra.mxu0 %v550
    %623 = vmatpush.bf16.msra.mxu0 %v549
    %624 = vmatpush.bf16.msra.mxu0 %v548
    %625 = vmatpush.bf16.msra.mxu0 %v547
    %626 = vmatpush.bf16.msra.mxu0 %v546
    %627 = vmatpush.bf16.msra.mxu0 %v545
    %628 = vmatpush.bf16.msra.mxu0 %v544
    %629 = vmatpush.bf16.msra.mxu0 %v543
    %630 = vmatmul.bf16.gmra.mxu0 %v326
    %v631 = vpop.f32.mrf.mxu0
    %v632 = vadd.f32 %v619, %v631
    %v633 = vpop.f32.mrf.mxu0
    %634 = vdwg.mxu0
    %v635 = vadd.f32 %v322, %v632
    %636 = vst [vmem:[#allocation2] sm:$0xff] %v635
    // Predicated region
    $region42: #{transformer_forward.26} parent=1 // pred_check
      %p637 = pneg %p58
    $region43: #{transformer_forward.26} parent=1 // pred_check_branch
      %639 = sbr.rel (%p637) target = $region45
    $region44: #{transformer_forward.26} parent=1 // pred_region
      %v640 = vld [vmem:[#allocation2] sm:$0xff]
      %v641 = vld [vmem:[%s4] sm:$0x1]
      %v643 = vperm.slane %v641, 0
      %v645 = vadd.f32 %v640, %v643
      %v646 = vld [vmem:[%s0] sm:$0xf]
      %v647 = vunpack.c.l.bf16 %v646
      %v648 = vadd.f32 %v645, %v647
      %649 = vadd.xlane.f32.xlu0 %v648
      %v650 = vpop.xlane.xlu0 %649
      %v651 = vrcp.pop 128.0
      %v652 = vmul.f32 128.0, %v651
      %v653 = vsub.f32 1.0, %v652
      %v654 = vmul.f32 %v651, %v653
      %v655 = vadd.f32 %v651, %v654
      %vm656 = vweird.f32 %v651
      %v657 = vsel %vm656, %v651, %v655
      %v658 = vmul.f32 %v650, %v657
      %v659 = vsub.f32 %v648, %v658
      %v660 = vmul.f32 %v659, %v659
      %661 = vadd.xlane.f32.xlu0 %v660
      %v662 = vpop.xlane.xlu0 %661
      %v663 = vmul.f32 %v662, %v657
      %v664 = vadd.f32 %v663, 1e-05
      %v665 = vrsqrt.pop %v664
      %v666 = vmul.f32 %v665, %v664
      %v667 = vmul.f32 %v666, %v665
      %v668 = vmul.f32 0.5, %v667
      %v669 = vsub.f32 1.5, %v668
      %v670 = vmul.f32 %v665, %v669
      %vm671 = vweird.f32 %v664
      %vm672 = vweird.f32 %v665
      %vm673 = vmor %vm671, %vm672
      %v674 = vsel %vm673, %v665, %v670
      %v675 = vmul.f32 %v659, %v674
      %v676 = vld [vmem:[%s5] sm:$0x1]
      %v678 = vperm.slane %v676, 0
      %v680 = vmul.f32 %v675, %v678
      %v681 = vld [vmem:[%s6] sm:$0x1]
      %v683 = vperm.slane %v681, 0
      %v685 = vadd.f32 %v680, %v683
      %v686 = vpack.c.bf16 %v685, %v685
      %687 = vst [vmem:[%s7] sm:$0xf] %v686
    $region45: #{transformer_forward.26} parent=1 // pred_fallthru
      _
    // Predicated region
    $region46: #{transformer_forward.26} parent=1 // pred_check
      _
    $region47: #{transformer_forward.26} parent=1 // pred_check_branch
      %689 = sbr.rel (0) target = $region49
    $region48: #{transformer_forward.26} parent=1 // pred_region
      _
    $region49: #{transformer_forward.26} parent=1 // pred_fallthru
      _
    // Predicated region
    $region50: #{transformer_forward.26} parent=1 // pred_check
      _
    $region51: #{transformer_forward.26} parent=1 // pred_check_branch
      %691 = sbr.rel (0) target = $region53
    $region52: #{transformer_forward.26} parent=1 // pred_region
      _
    $region53: #{transformer_forward.26} parent=1 // pred_fallthru
      _
    %692 = vsyncpa [#allocation4], 1
    %693 = vsyncpa [#allocation6], 1

</llo_original>
